<compile_context>
chip_gen: v7x
topology: tpu7x:2x2x1
jax: 0.10.0
libtpu: 0.0.40
codegen_flags: <defaults>
</compile_context>

<pallas_src>
import functools
import math

import jax
import jax.numpy as jnp
from jax.experimental import pallas as pl
from jax.experimental.pallas import tpu as pltpu

# ----------------------------- small config ---------------------------------
VOCAB = 120
HIDDEN = 32
N_HEADS = 4
HEAD_DIM = HIDDEN // N_HEADS
N_LAYERS = 2
INTERMEDIATE = 64
MAX_POS = 40
PAD_ID = 1            # XLM-RoBERTa padding_idx
LN_EPS = 1e-5
MASK_NEG = -1e9       # large-but-finite additive mask (avoids -inf NaN hazards)

SMALL_W = max(3 * HIDDEN, INTERMEDIATE)      # lane width of the packed small-param table
# global rows of the packed small-param table
R_EMB_LN_G, R_EMB_LN_B, R_TYPE_EMB, R_POOL_B = 0, 1, 2, 3
GLOBAL_ROWS = 4
# per-layer row offsets
L_QKV_B, L_O_B, L_LN1_G, L_LN1_B, L_I_B, L_F_B, L_LN2_G, L_LN2_B = range(8)
LAYER_ROWS = 8

_VMEM = pl.BlockSpec(memory_space=pltpu.MemorySpace.VMEM)


# ----------------------------- fused Pallas kernel ---------------------------
def _xlmr_forward_kernel(ids_ref, amask_ref, wemb_ref, pemb_ref,
                         wa_ref, wf_ref, sp_ref, out_ref,
                         *, n_layers, n_heads, eps, pad_id, mask_neg):
    """Whole XLM-R forward with all weights / activations VMEM-resident.

    ids:   (B*S, 1) int32 token ids (column layout -> lane-broadcast friendly)
    amask: (B, 1, S) float32 attention mask (1 = keep, 0 = pad)
    wemb:  (VOCAB, H) f32, pemb: (MAX_POS, H) f32
    wa:    (L, H, 3H+H+I) bf16   [qkv | attn-out | intermediate] weights
    wf:    (L+1, I, H) bf16      FFN-out weights; last slab holds pooler weight
    sp:    (GLOBAL_ROWS + LAYER_ROWS*L, SMALL_W) f32 packed biases / LN / type emb
    out:   (B, H) f32 pooler_output
    """
    bs = ids_ref.shape[0]
    b, _, s = amask_ref.shape
    vocab, h = wemb_ref.shape
    max_pos = pemb_ref.shape[0]
    inter = wf_ref.shape[1]
    head_dim = h // n_heads
    scale = 1.0 / math.sqrt(head_dim)
    f32 = jnp.float32

    def prow(r, w):                               # (1, w) slice of the small-param table
        return sp_ref[r:r + 1, 0:w]

    def mm(x, w):                                 # bf16 MXU inputs, f32 accumulation
        return jnp.dot(x.astype(w.dtype), w, preferred_element_type=f32)

    def layernorm(x, g, beta):
        mu = jnp.mean(x, axis=-1, keepdims=True)
        var = jnp.mean(jnp.square(x - mu), axis=-1, keepdims=True)
        return (x - mu) * jax.lax.rsqrt(var + eps) * g + beta

    # ---------------- embedding prologue (gathers as exact one-hot matmuls) --
    ids = ids_ref[...]                                                  # (B*S, 1) int32
    word_oh = (ids == jax.lax.broadcasted_iota(jnp.int32, (bs, vocab), 1)).astype(f32)
    emb = jnp.dot(word_oh, wemb_ref[...], preferred_element_type=f32)   # (B*S, H)

    # HF create_position_ids_from_input_ids: cumsum(mask)*mask + pad_id,
    # per-example cumsum done as a tiny lower-triangular matmul per batch row.
    tok = (ids != pad_id).astype(f32)                                   # (B*S, 1)
    tril = (jax.lax.broadcasted_iota(jnp.int32, (s, s), 1)
            <= jax.lax.broadcasted_iota(jnp.int32, (s, s), 0)).astype(f32)
    csum = jnp.concatenate(
        [jnp.dot(tril, tok[e * s:(e + 1) * s, :], preferred_element_type=f32)
         for e in range(b)], axis=0)                                    # (B*S, 1)
    pos_ids = (csum * tok + pad_id).astype(jnp.int32)
    pos_oh = (pos_ids == jax.lax.broadcasted_iota(jnp.int32, (bs, max_pos), 1)).astype(f32)
    emb = emb + jnp.dot(pos_oh, pemb_ref[...], preferred_element_type=f32)
    emb = emb + prow(R_TYPE_EMB, h)                                     # token_type_id == 0

    x = layernorm(emb, prow(R_EMB_LN_G, h), prow(R_EMB_LN_B, h))        # (B*S, H)

    # additive attention mask, built and broadcast once (hoisted out of all loops)
    mask_b = jnp.broadcast_to((1.0 - amask_ref[...]) * mask_neg, (b, s, s))

    # ---------------- encoder layers (static unroll; N_LAYERS is small) ------
    # TODO(synk): switch to lax.fori_loop over a stacked-weight dynamic index
    # once n_layers grows beyond ~4 (vreg live-range control).
    for l in range(n_layers):
        base = GLOBAL_ROWS + LAYER_ROWS * l

        # fused Q/K/V projection: (B*S, H) @ (H, 3H)
        qkv = mm(x, wa_ref[l, :, 0:3 * h]) + prow(base + L_QKV_B, 3 * h)
        q = qkv[:, 0 * h:1 * h].astype(jnp.bfloat16).reshape(b, s, h)
        k = qkv[:, 1 * h:2 * h].astype(jnp.bfloat16).reshape(b, s, h)
        v = qkv[:, 2 * h:3 * h].astype(jnp.bfloat16).reshape(b, s, h)

        # per-head attention; heads stay packed on the lane axis (a head-batched
        # 'bqnd,bknd->bnqk' einsum would need a middle-dim transpose Mosaic
        # does not lower, so the head loop is kept statically unrolled).
        ctx_heads = []
        for hd in range(n_heads):
            sl = slice(hd * head_dim, (hd + 1) * head_dim)
            sc = jnp.einsum("bqd,bkd->bqk", q[:, :, sl], k[:, :, sl],
                            preferred_element_type=f32) * scale
            sc = sc + mask_b
            sc = sc - jnp.max(sc, axis=-1, keepdims=True)
            p = jnp.exp(sc)
            p = p * pl.reciprocal(jnp.sum(p, axis=-1, keepdims=True), approx=True)
            ctx_heads.append(jnp.einsum("bqk,bkd->bqd", p.astype(jnp.bfloat16),
                                        v[:, :, sl], preferred_element_type=f32))
        ctx = jnp.concatenate(ctx_heads, axis=-1).reshape(bs, h)

        # attention output projection + residual + LayerNorm
        attn = mm(ctx, wa_ref[l, :, 3 * h:4 * h]) + prow(base + L_O_B, h)
        x = layernorm(x + attn, prow(base + L_LN1_G, h), prow(base + L_LN1_B, h))

        # feed-forward
        ff = mm(x, wa_ref[l, :, 4 * h:4 * h + inter]) + prow(base + L_I_B, inter)
        # TODO(synk): HF XLM-R uses exact erf-GELU; tanh approximation kept because
        # lax.erf has no guaranteed Mosaic lowering (~1e-3 per-activation deviation).
        c = math.sqrt(2.0 / math.pi)
        ff = 0.5 * ff * (1.0 + jnp.tanh(c * (ff + 0.044715 * ff * ff * ff)))
        ff = mm(ff, wf_ref[l]) + prow(base + L_F_B, h)
        x = layernorm(x + ff, prow(base + L_LN2_G, h), prow(base + L_LN2_B, h))

    # ---------------- pooler: tanh(dense(hidden_state[:, 0])) ----------------
    cls = jnp.concatenate([x[e * s:e * s + 1, :] for e in range(b)], axis=0)   # (B, H)
    pooled = jnp.tanh(mm(cls, wf_ref[n_layers, 0:h, :]) + prow(R_POOL_B, h))
    out_ref[...] = pooled.astype(out_ref.dtype)


# ----------------------------- parameter init --------------------------------
def init_params(key):
    def nrm(k, shape):
        return jax.random.normal(k, shape, jnp.float32) * 0.02

    ks = iter(jax.random.split(key, 12))
    wdt = jnp.bfloat16                      # MXU weight dtype (accumulation stays f32)

    # HF zeroes the padding_idx rows of the word & position embedding tables.
    word_emb = nrm(next(ks), (VOCAB, HIDDEN)).at[PAD_ID].set(0.0)
    pos_emb = nrm(next(ks), (MAX_POS, HIDDEN)).at[PAD_ID].set(0.0)
    type_emb = nrm(next(ks), (HIDDEN,))

    qkv_w = nrm(next(ks), (N_LAYERS, HIDDEN, 3 * HIDDEN))
    o_w = nrm(next(ks), (N_LAYERS, HIDDEN, HIDDEN))
    i_w = nrm(next(ks), (N_LAYERS, HIDDEN, INTERMEDIATE))
    f_w = nrm(next(ks), (N_LAYERS, INTERMEDIATE, HIDDEN))
    pool_w = nrm(next(ks), (HIDDEN, HIDDEN))

    # packed bf16 matmul-weight stacks
    w_attn_ffn = jnp.concatenate([qkv_w, o_w, i_w], axis=-1).astype(wdt)   # (L, H, 192)
    pool_slab = jnp.zeros((1, INTERMEDIATE, HIDDEN), jnp.float32).at[0, :HIDDEN, :].set(pool_w)
    w_fout_pool = jnp.concatenate([f_w, pool_slab], axis=0).astype(wdt)    # (L+1, I, H)

    # packed small f32 params: one row per bias / LN vector / type emb, width SMALL_W
    def row(v):
        return jnp.zeros((SMALL_W,), jnp.float32).at[:v.shape[0]].set(v)

    rows = [
        row(jnp.ones((HIDDEN,), jnp.float32)),    # R_EMB_LN_G
        row(jnp.zeros((HIDDEN,), jnp.float32)),   # R_EMB_LN_B
        row(type_emb),                            # R_TYPE_EMB (token_type_id == 0)
        row(jnp.zeros((HIDDEN,), jnp.float32)),   # R_POOL_B
    ]
    for _ in range(N_LAYERS):
        rows += [
            row(jnp.zeros((3 * HIDDEN,), jnp.float32)),    # qkv bias
            row(jnp.zeros((HIDDEN,), jnp.float32)),        # attn-out bias
            row(jnp.ones((HIDDEN,), jnp.float32)),         # ln1 gamma
            row(jnp.zeros((HIDDEN,), jnp.float32)),        # ln1 beta
            row(jnp.zeros((INTERMEDIATE,), jnp.float32)),  # intermediate bias
            row(jnp.zeros((HIDDEN,), jnp.float32)),        # ffn-out bias
            row(jnp.ones((HIDDEN,), jnp.float32)),         # ln2 gamma
            row(jnp.zeros((HIDDEN,), jnp.float32)),        # ln2 beta
        ]
    small = jnp.stack(rows, axis=0)                        # (4 + 8L, 96)

    return {"word_emb": word_emb, "pos_emb": pos_emb,
            "w_attn_ffn": w_attn_ffn, "w_fout_pool": w_fout_pool, "small": small}


# ----------------------------- model wrapper ---------------------------------
@jax.jit
def xlm_roberta_pooler_output(params, input_ids, attention_mask):
    """Equivalent of XLMRobertaTextEncoder.forward -> pooler_output."""
    b, s = input_ids.shape
    # Free layout plumbing only (no XLA compute launches): column token ids for
    # in-kernel one-hot gathers, mask pre-shaped to (B, 1, S) for broadcasting.
    ids_col = input_ids.astype(jnp.int32).reshape(b * s, 1)
    amask3 = attention_mask.astype(jnp.float32).reshape(b, 1, s)

    kernel = functools.partial(_xlmr_forward_kernel, n_layers=N_LAYERS,
                               n_heads=N_HEADS, eps=LN_EPS, pad_id=PAD_ID,
                               mask_neg=MASK_NEG)
    return pl.pallas_call(
        kernel,
        out_shape=jax.ShapeDtypeStruct((b, HIDDEN), jnp.float32),
        in_specs=[_VMEM] * 7,
        out_specs=_VMEM,
    )(ids_col, amask3,
      params["word_emb"], params["pos_emb"],
      params["w_attn_ffn"], params["w_fout_pool"], params["small"])


# ----------------------------- main ------------------------------------------
if __name__ == "__main__":
    # TODO(synk): HF SentencePiece tokenizer (string -> ids) has no Pallas/JAX
    # equivalent; synthetic token ids stand in for tokenized text.
    key = jax.random.PRNGKey(0)
    pkey, ikey = jax.random.split(key)
    params = init_params(pkey)

    B, S = 2, 8
    input_ids = jax.random.randint(ikey, (B, S), 2, VOCAB, dtype=jnp.int32)
    # second sequence has 3 padding tokens at the end
    attention_mask = jnp.array([[1] * S, [1] * (S - 3) + [0] * 3], jnp.int32)
    input_ids = jnp.where(attention_mask == 1, input_ids, PAD_ID)

    pooled = xlm_roberta_pooler_output(params, input_ids, attention_mask)
    pooled = jax.block_until_ready(pooled)
    assert pooled.shape == (B, HIDDEN)
    assert bool(jnp.all(jnp.isfinite(pooled)))
    print("KERNEL_OK")
</pallas_src>

<mosaic_0001>
module attributes {stable_mosaic.version = 11 : i64} {
  func.func @_xlmr_forward_kernel(%arg0: memref<16x1xi32, #tpu.memory_space<vmem>>, %arg1: memref<2x1x8xf32, #tpu.memory_space<vmem>>, %arg2: memref<120x32xf32, #tpu.memory_space<vmem>>, %arg3: memref<40x32xf32, #tpu.memory_space<vmem>>, %arg4: memref<2x32x192xbf16, #tpu.memory_space<vmem>>, %arg5: memref<3x64x32xbf16, #tpu.memory_space<vmem>>, %arg6: memref<20x96xf32, #tpu.memory_space<vmem>>, %arg7: memref<2x32xf32, #tpu.memory_space<vmem>>) attributes {dimension_semantics = [], scalar_prefetch = 0 : i64, scratch_operands = 0 : i64, tpu.core_type = #tpu.core_type<tc>} {
    %c0 = arith.constant 0 : index
    %c0_0 = arith.constant 0 : index
    %0 = vector.load %arg0[%c0, %c0_0] : memref<16x1xi32, #tpu.memory_space<vmem>>, vector<16x1xi32>
    %1 = tpu.iota {dimensions = array<i32: 1>} : vector<16x120xi32>
    %2 = vector.broadcast %0 : vector<16x1xi32> to vector<16x120xi32>
    %3 = arith.cmpi eq, %2, %1 : vector<16x120xi32>
    %4 = arith.extui %3 : vector<16x120xi1> to vector<16x120xi32>
    %5 = arith.sitofp %4 : vector<16x120xi32> to vector<16x120xf32>
    %c0_1 = arith.constant 0 : index
    %c0_2 = arith.constant 0 : index
    %6 = vector.load %arg2[%c0_1, %c0_2] : memref<120x32xf32, #tpu.memory_space<vmem>>, vector<120x32xf32>
    %cst = arith.constant dense<0.000000e+00> : vector<16x32xf32>
    %7 = tpu.matmul %5, %6, %cst {dimension_numbers = #tpu.dot_dimension_numbers<[1], [0], [0], [1], [0, 0, 1, 1], [], []>} : vector<16x120xf32>, vector<120x32xf32>, vector<16x32xf32> -> vector<16x32xf32>
    %c1_i32 = arith.constant 1 : i32
    %8 = vector.broadcast %c1_i32 : i32 to vector<16x1xi32>
    %9 = arith.cmpi ne, %0, %8 : vector<16x1xi32>
    %10 = arith.extui %9 : vector<16x1xi1> to vector<16x1xi32>
    %11 = arith.sitofp %10 : vector<16x1xi32> to vector<16x1xf32>
    %12 = tpu.iota {dimensions = array<i32: 1>} : vector<8x8xi32>
    %13 = tpu.iota {dimensions = array<i32: 0>} : vector<8x8xi32>
    %14 = arith.cmpi sle, %12, %13 : vector<8x8xi32>
    %15 = arith.extui %14 : vector<8x8xi1> to vector<8x8xi32>
    %16 = arith.sitofp %15 : vector<8x8xi32> to vector<8x8xf32>
    %17 = vector.extract_strided_slice %11 {offsets = [0, 0], sizes = [8, 1], strides = [1, 1]} : vector<16x1xf32> to vector<8x1xf32>
    %cst_3 = arith.constant dense<0.000000e+00> : vector<8x1xf32>
    %18 = tpu.matmul %16, %17, %cst_3 {dimension_numbers = #tpu.dot_dimension_numbers<[1], [0], [0], [1], [0, 0, 1, 1], [], []>} : vector<8x8xf32>, vector<8x1xf32>, vector<8x1xf32> -> vector<8x1xf32>
    %19 = vector.extract_strided_slice %11 {offsets = [8, 0], sizes = [8, 1], strides = [1, 1]} : vector<16x1xf32> to vector<8x1xf32>
    %cst_4 = arith.constant dense<0.000000e+00> : vector<8x1xf32>
    %20 = tpu.matmul %16, %19, %cst_4 {dimension_numbers = #tpu.dot_dimension_numbers<[1], [0], [0], [1], [0, 0, 1, 1], [], []>} : vector<8x8xf32>, vector<8x1xf32>, vector<8x1xf32> -> vector<8x1xf32>
    %21 = tpu.concatenate %18, %20 in 0 : vector<8x1xf32>, vector<8x1xf32> -> vector<16x1xf32>
    %22 = arith.mulf %21, %11 : vector<16x1xf32>
    %cst_5 = arith.constant 1.000000e+00 : f32
    %23 = vector.broadcast %cst_5 : f32 to vector<16x1xf32>
    %24 = arith.addf %22, %23 : vector<16x1xf32>
    %25 = arith.fptosi %24 : vector<16x1xf32> to vector<16x1xi32>
    %26 = tpu.iota {dimensions = array<i32: 1>} : vector<16x40xi32>
    %27 = vector.broadcast %25 : vector<16x1xi32> to vector<16x40xi32>
    %28 = arith.cmpi eq, %27, %26 : vector<16x40xi32>
    %29 = arith.extui %28 : vector<16x40xi1> to vector<16x40xi32>
    %30 = arith.sitofp %29 : vector<16x40xi32> to vector<16x40xf32>
    %c0_6 = arith.constant 0 : index
    %c0_7 = arith.constant 0 : index
    %31 = vector.load %arg3[%c0_6, %c0_7] : memref<40x32xf32, #tpu.memory_space<vmem>>, vector<40x32xf32>
    %cst_8 = arith.constant dense<0.000000e+00> : vector<16x32xf32>
    %32 = tpu.matmul %30, %31, %cst_8 {dimension_numbers = #tpu.dot_dimension_numbers<[1], [0], [0], [1], [0, 0, 1, 1], [], []>} : vector<16x40xf32>, vector<40x32xf32>, vector<16x32xf32> -> vector<16x32xf32>
    %33 = arith.addf %7, %32 : vector<16x32xf32>
    %c2 = arith.constant 2 : index
    %c0_9 = arith.constant 0 : index
    %34 = vector.load %arg6[%c2, %c0_9] : memref<20x96xf32, #tpu.memory_space<vmem>>, vector<1x32xf32>
    %35 = vector.broadcast %34 : vector<1x32xf32> to vector<16x32xf32>
    %36 = arith.addf %33, %35 : vector<16x32xf32>
    %c0_10 = arith.constant 0 : index
    %c0_11 = arith.constant 0 : index
    %37 = vector.load %arg6[%c0_10, %c0_11] : memref<20x96xf32, #tpu.memory_space<vmem>>, vector<1x32xf32>
    %c1 = arith.constant 1 : index
    %c0_12 = arith.constant 0 : index
    %38 = vector.load %arg6[%c1, %c0_12] : memref<20x96xf32, #tpu.memory_space<vmem>>, vector<1x32xf32>
    %cst_13 = arith.constant dense<0.000000e+00> : vector<16xf32>
    %39 = vector.multi_reduction <add>, %36, %cst_13 [1] : vector<16x32xf32> to vector<16xf32>
    %40 = vector.shape_cast %39 : vector<16xf32> to vector<16x1xf32>
    %cst_14 = arith.constant 3.200000e+01 : f32
    %41 = vector.broadcast %cst_14 : f32 to vector<16x1xf32>
    %42 = arith.divf %40, %41 : vector<16x1xf32>
    %43 = vector.broadcast %42 : vector<16x1xf32> to vector<16x32xf32>
    %44 = arith.subf %36, %43 : vector<16x32xf32>
    %45 = arith.mulf %44, %44 : vector<16x32xf32>
    %cst_15 = arith.constant dense<0.000000e+00> : vector<16xf32>
    %46 = vector.multi_reduction <add>, %45, %cst_15 [1] : vector<16x32xf32> to vector<16xf32>
    %47 = vector.shape_cast %46 : vector<16xf32> to vector<16x1xf32>
    %cst_16 = arith.constant 3.200000e+01 : f32
    %48 = vector.broadcast %cst_16 : f32 to vector<16x1xf32>
    %49 = arith.divf %47, %48 : vector<16x1xf32>
    %50 = vector.broadcast %42 : vector<16x1xf32> to vector<16x32xf32>
    %51 = arith.subf %36, %50 : vector<16x32xf32>
    %cst_17 = arith.constant 9.99999974E-6 : f32
    %52 = vector.broadcast %cst_17 : f32 to vector<16x1xf32>
    %53 = arith.addf %49, %52 : vector<16x1xf32>
    %54 = math.rsqrt %53 : vector<16x1xf32>
    %55 = vector.broadcast %54 : vector<16x1xf32> to vector<16x32xf32>
    %56 = arith.mulf %51, %55 : vector<16x32xf32>
    %57 = vector.broadcast %37 : vector<1x32xf32> to vector<16x32xf32>
    %58 = arith.mulf %56, %57 : vector<16x32xf32>
    %59 = vector.broadcast %38 : vector<1x32xf32> to vector<16x32xf32>
    %60 = arith.addf %58, %59 : vector<16x32xf32>
    %c0_18 = arith.constant 0 : index
    %c0_19 = arith.constant 0 : index
    %c0_20 = arith.constant 0 : index
    %61 = vector.load %arg1[%c0_18, %c0_19, %c0_20] : memref<2x1x8xf32, #tpu.memory_space<vmem>>, vector<2x1x8xf32>
    %cst_21 = arith.constant 1.000000e+00 : f32
    %62 = vector.broadcast %cst_21 : f32 to vector<2x1x8xf32>
    %63 = arith.subf %62, %61 : vector<2x1x8xf32>
    %cst_22 = arith.constant -1.000000e+09 : f32
    %64 = vector.broadcast %cst_22 : f32 to vector<2x1x8xf32>
    %65 = arith.mulf %63, %64 : vector<2x1x8xf32>
    %66 = vector.shape_cast %65 : vector<2x1x8xf32> to vector<2x1x8xf32>
    %67 = vector.broadcast %66 : vector<2x1x8xf32> to vector<2x8x8xf32>
    %c0_23 = arith.constant 0 : index
    %c0_24 = arith.constant 0 : index
    %c0_25 = arith.constant 0 : index
    %68 = vector.load %arg4[%c0_23, %c0_24, %c0_25] : memref<2x32x192xbf16, #tpu.memory_space<vmem>>, vector<1x32x96xbf16>
    %69 = vector.shape_cast %68 : vector<1x32x96xbf16> to vector<32x96xbf16>
    %70 = arith.truncf %60 : vector<16x32xf32> to vector<16x32xbf16>
    %cst_26 = arith.constant dense<0.000000e+00> : vector<16x96xf32>
    %71 = tpu.matmul %70, %69, %cst_26 {dimension_numbers = #tpu.dot_dimension_numbers<[1], [0], [0], [1], [0, 0, 1, 1], [], []>} : vector<16x32xbf16>, vector<32x96xbf16>, vector<16x96xf32> -> vector<16x96xf32>
    %c4 = arith.constant 4 : index
    %c0_27 = arith.constant 0 : index
    %72 = vector.load %arg6[%c4, %c0_27] : memref<20x96xf32, #tpu.memory_space<vmem>>, vector<1x96xf32>
    %73 = vector.broadcast %72 : vector<1x96xf32> to vector<16x96xf32>
    %74 = arith.addf %71, %73 : vector<16x96xf32>
    %75 = vector.extract_strided_slice %74 {offsets = [0, 0], sizes = [16, 32], strides = [1, 1]} : vector<16x96xf32> to vector<16x32xf32>
    %76 = arith.truncf %75 : vector<16x32xf32> to vector<16x32xbf16>
    %77 = vector.shape_cast %76 : vector<16x32xbf16> to vector<2x8x32xbf16>
    %78 = vector.extract_strided_slice %74 {offsets = [0, 32], sizes = [16, 32], strides = [1, 1]} : vector<16x96xf32> to vector<16x32xf32>
    %79 = arith.truncf %78 : vector<16x32xf32> to vector<16x32xbf16>
    %80 = vector.shape_cast %79 : vector<16x32xbf16> to vector<2x8x32xbf16>
    %81 = vector.extract_strided_slice %74 {offsets = [0, 64], sizes = [16, 32], strides = [1, 1]} : vector<16x96xf32> to vector<16x32xf32>
    %82 = arith.truncf %81 : vector<16x32xf32> to vector<16x32xbf16>
    %83 = vector.shape_cast %82 : vector<16x32xbf16> to vector<2x8x32xbf16>
    %84 = vector.extract_strided_slice %77 {offsets = [0, 0, 0], sizes = [2, 8, 8], strides = [1, 1, 1]} : vector<2x8x32xbf16> to vector<2x8x8xbf16>
    %85 = vector.extract_strided_slice %80 {offsets = [0, 0, 0], sizes = [2, 8, 8], strides = [1, 1, 1]} : vector<2x8x32xbf16> to vector<2x8x8xbf16>
    "tpu.trace_start"() <{level = 10 : i32, message = "bqd,bkd->bqk"}> : () -> ()
    %cst_28 = arith.constant dense<0.000000e+00> : vector<2x8x8xf32>
    %86 = tpu.matmul %84, %85, %cst_28 {dimension_numbers = #tpu.dot_dimension_numbers<[2], [2], [1], [1], [0, 0, 0, 1, 1, 1], [0], [0]>} : vector<2x8x8xbf16>, vector<2x8x8xbf16>, vector<2x8x8xf32> -> vector<2x8x8xf32>
    "tpu.trace_stop"() : () -> ()
    %cst_29 = arith.constant 0.353553385 : f32
    %87 = vector.broadcast %cst_29 : f32 to vector<2x8x8xf32>
    %88 = arith.mulf %86, %87 : vector<2x8x8xf32>
    %89 = arith.addf %88, %67 : vector<2x8x8xf32>
    %cst_30 = arith.constant dense<0xFF800000> : vector<2x8xf32>
    %90 = vector.multi_reduction <maximumf>, %89, %cst_30 [2] : vector<2x8x8xf32> to vector<2x8xf32>
    %91 = vector.shape_cast %90 : vector<2x8xf32> to vector<2x8x1xf32>
    %92 = vector.broadcast %91 : vector<2x8x1xf32> to vector<2x8x8xf32>
    %93 = arith.subf %89, %92 : vector<2x8x8xf32>
    %94 = math.exp %93 : vector<2x8x8xf32>
    %cst_31 = arith.constant dense<0.000000e+00> : vector<2x8xf32>
    %95 = vector.multi_reduction <add>, %94, %cst_31 [2] : vector<2x8x8xf32> to vector<2x8xf32>
    %96 = vector.shape_cast %95 : vector<2x8xf32> to vector<2x8x1xf32>
    %97 = tpu.reciprocal %96 {approx = true} : vector<2x8x1xf32> -> vector<2x8x1xf32>
    %98 = vector.broadcast %97 : vector<2x8x1xf32> to vector<2x8x8xf32>
    %99 = arith.mulf %94, %98 : vector<2x8x8xf32>
    %100 = arith.truncf %99 : vector<2x8x8xf32> to vector<2x8x8xbf16>
    %101 = vector.extract_strided_slice %83 {offsets = [0, 0, 0], sizes = [2, 8, 8], strides = [1, 1, 1]} : vector<2x8x32xbf16> to vector<2x8x8xbf16>
    "tpu.trace_start"() <{level = 10 : i32, message = "bqk,bkd->bqd"}> : () -> ()
    %cst_32 = arith.constant dense<0.000000e+00> : vector<2x8x8xf32>
    %102 = tpu.matmul %100, %101, %cst_32 {dimension_numbers = #tpu.dot_dimension_numbers<[2], [1], [1], [2], [0, 0, 0, 1, 1, 2], [0], [0]>} : vector<2x8x8xbf16>, vector<2x8x8xbf16>, vector<2x8x8xf32> -> vector<2x8x8xf32>
    "tpu.trace_stop"() : () -> ()
    %103 = vector.extract_strided_slice %77 {offsets = [0, 0, 8], sizes = [2, 8, 8], strides = [1, 1, 1]} : vector<2x8x32xbf16> to vector<2x8x8xbf16>
    %104 = vector.extract_strided_slice %80 {offsets = [0, 0, 8], sizes = [2, 8, 8], strides = [1, 1, 1]} : vector<2x8x32xbf16> to vector<2x8x8xbf16>
    "tpu.trace_start"() <{level = 10 : i32, message = "bqd,bkd->bqk"}> : () -> ()
    %cst_33 = arith.constant dense<0.000000e+00> : vector<2x8x8xf32>
    %105 = tpu.matmul %103, %104, %cst_33 {dimension_numbers = #tpu.dot_dimension_numbers<[2], [2], [1], [1], [0, 0, 0, 1, 1, 1], [0], [0]>} : vector<2x8x8xbf16>, vector<2x8x8xbf16>, vector<2x8x8xf32> -> vector<2x8x8xf32>
    "tpu.trace_stop"() : () -> ()
    %cst_34 = arith.constant 0.353553385 : f32
    %106 = vector.broadcast %cst_34 : f32 to vector<2x8x8xf32>
    %107 = arith.mulf %105, %106 : vector<2x8x8xf32>
    %108 = arith.addf %107, %67 : vector<2x8x8xf32>
    %cst_35 = arith.constant dense<0xFF800000> : vector<2x8xf32>
    %109 = vector.multi_reduction <maximumf>, %108, %cst_35 [2] : vector<2x8x8xf32> to vector<2x8xf32>
    %110 = vector.shape_cast %109 : vector<2x8xf32> to vector<2x8x1xf32>
    %111 = vector.broadcast %110 : vector<2x8x1xf32> to vector<2x8x8xf32>
    %112 = arith.subf %108, %111 : vector<2x8x8xf32>
    %113 = math.exp %112 : vector<2x8x8xf32>
    %cst_36 = arith.constant dense<0.000000e+00> : vector<2x8xf32>
    %114 = vector.multi_reduction <add>, %113, %cst_36 [2] : vector<2x8x8xf32> to vector<2x8xf32>
    %115 = vector.shape_cast %114 : vector<2x8xf32> to vector<2x8x1xf32>
    %116 = tpu.reciprocal %115 {approx = true} : vector<2x8x1xf32> -> vector<2x8x1xf32>
    %117 = vector.broadcast %116 : vector<2x8x1xf32> to vector<2x8x8xf32>
    %118 = arith.mulf %113, %117 : vector<2x8x8xf32>
    %119 = arith.truncf %118 : vector<2x8x8xf32> to vector<2x8x8xbf16>
    %120 = vector.extract_strided_slice %83 {offsets = [0, 0, 8], sizes = [2, 8, 8], strides = [1, 1, 1]} : vector<2x8x32xbf16> to vector<2x8x8xbf16>
    "tpu.trace_start"() <{level = 10 : i32, message = "bqk,bkd->bqd"}> : () -> ()
    %cst_37 = arith.constant dense<0.000000e+00> : vector<2x8x8xf32>
    %121 = tpu.matmul %119, %120, %cst_37 {dimension_numbers = #tpu.dot_dimension_numbers<[2], [1], [1], [2], [0, 0, 0, 1, 1, 2], [0], [0]>} : vector<2x8x8xbf16>, vector<2x8x8xbf16>, vector<2x8x8xf32> -> vector<2x8x8xf32>
    "tpu.trace_stop"() : () -> ()
    %122 = vector.extract_strided_slice %77 {offsets = [0, 0, 16], sizes = [2, 8, 8], strides = [1, 1, 1]} : vector<2x8x32xbf16> to vector<2x8x8xbf16>
    %123 = vector.extract_strided_slice %80 {offsets = [0, 0, 16], sizes = [2, 8, 8], strides = [1, 1, 1]} : vector<2x8x32xbf16> to vector<2x8x8xbf16>
    "tpu.trace_start"() <{level = 10 : i32, message = "bqd,bkd->bqk"}> : () -> ()
    %cst_38 = arith.constant dense<0.000000e+00> : vector<2x8x8xf32>
    %124 = tpu.matmul %122, %123, %cst_38 {dimension_numbers = #tpu.dot_dimension_numbers<[2], [2], [1], [1], [0, 0, 0, 1, 1, 1], [0], [0]>} : vector<2x8x8xbf16>, vector<2x8x8xbf16>, vector<2x8x8xf32> -> vector<2x8x8xf32>
    "tpu.trace_stop"() : () -> ()
    %cst_39 = arith.constant 0.353553385 : f32
    %125 = vector.broadcast %cst_39 : f32 to vector<2x8x8xf32>
    %126 = arith.mulf %124, %125 : vector<2x8x8xf32>
    %127 = arith.addf %126, %67 : vector<2x8x8xf32>
    %cst_40 = arith.constant dense<0xFF800000> : vector<2x8xf32>
    %128 = vector.multi_reduction <maximumf>, %127, %cst_40 [2] : vector<2x8x8xf32> to vector<2x8xf32>
    %129 = vector.shape_cast %128 : vector<2x8xf32> to vector<2x8x1xf32>
    %130 = vector.broadcast %129 : vector<2x8x1xf32> to vector<2x8x8xf32>
    %131 = arith.subf %127, %130 : vector<2x8x8xf32>
    %132 = math.exp %131 : vector<2x8x8xf32>
    %cst_41 = arith.constant dense<0.000000e+00> : vector<2x8xf32>
    %133 = vector.multi_reduction <add>, %132, %cst_41 [2] : vector<2x8x8xf32> to vector<2x8xf32>
    %134 = vector.shape_cast %133 : vector<2x8xf32> to vector<2x8x1xf32>
    %135 = tpu.reciprocal %134 {approx = true} : vector<2x8x1xf32> -> vector<2x8x1xf32>
    %136 = vector.broadcast %135 : vector<2x8x1xf32> to vector<2x8x8xf32>
    %137 = arith.mulf %132, %136 : vector<2x8x8xf32>
    %138 = arith.truncf %137 : vector<2x8x8xf32> to vector<2x8x8xbf16>
    %139 = vector.extract_strided_slice %83 {offsets = [0, 0, 16], sizes = [2, 8, 8], strides = [1, 1, 1]} : vector<2x8x32xbf16> to vector<2x8x8xbf16>
    "tpu.trace_start"() <{level = 10 : i32, message = "bqk,bkd->bqd"}> : () -> ()
    %cst_42 = arith.constant dense<0.000000e+00> : vector<2x8x8xf32>
    %140 = tpu.matmul %138, %139, %cst_42 {dimension_numbers = #tpu.dot_dimension_numbers<[2], [1], [1], [2], [0, 0, 0, 1, 1, 2], [0], [0]>} : vector<2x8x8xbf16>, vector<2x8x8xbf16>, vector<2x8x8xf32> -> vector<2x8x8xf32>
    "tpu.trace_stop"() : () -> ()
    %141 = vector.extract_strided_slice %77 {offsets = [0, 0, 24], sizes = [2, 8, 8], strides = [1, 1, 1]} : vector<2x8x32xbf16> to vector<2x8x8xbf16>
    %142 = vector.extract_strided_slice %80 {offsets = [0, 0, 24], sizes = [2, 8, 8], strides = [1, 1, 1]} : vector<2x8x32xbf16> to vector<2x8x8xbf16>
    "tpu.trace_start"() <{level = 10 : i32, message = "bqd,bkd->bqk"}> : () -> ()
    %cst_43 = arith.constant dense<0.000000e+00> : vector<2x8x8xf32>
    %143 = tpu.matmul %141, %142, %cst_43 {dimension_numbers = #tpu.dot_dimension_numbers<[2], [2], [1], [1], [0, 0, 0, 1, 1, 1], [0], [0]>} : vector<2x8x8xbf16>, vector<2x8x8xbf16>, vector<2x8x8xf32> -> vector<2x8x8xf32>
    "tpu.trace_stop"() : () -> ()
    %cst_44 = arith.constant 0.353553385 : f32
    %144 = vector.broadcast %cst_44 : f32 to vector<2x8x8xf32>
    %145 = arith.mulf %143, %144 : vector<2x8x8xf32>
    %146 = arith.addf %145, %67 : vector<2x8x8xf32>
    %cst_45 = arith.constant dense<0xFF800000> : vector<2x8xf32>
    %147 = vector.multi_reduction <maximumf>, %146, %cst_45 [2] : vector<2x8x8xf32> to vector<2x8xf32>
    %148 = vector.shape_cast %147 : vector<2x8xf32> to vector<2x8x1xf32>
    %149 = vector.broadcast %148 : vector<2x8x1xf32> to vector<2x8x8xf32>
    %150 = arith.subf %146, %149 : vector<2x8x8xf32>
    %151 = math.exp %150 : vector<2x8x8xf32>
    %cst_46 = arith.constant dense<0.000000e+00> : vector<2x8xf32>
    %152 = vector.multi_reduction <add>, %151, %cst_46 [2] : vector<2x8x8xf32> to vector<2x8xf32>
    %153 = vector.shape_cast %152 : vector<2x8xf32> to vector<2x8x1xf32>
    %154 = tpu.reciprocal %153 {approx = true} : vector<2x8x1xf32> -> vector<2x8x1xf32>
    %155 = vector.broadcast %154 : vector<2x8x1xf32> to vector<2x8x8xf32>
    %156 = arith.mulf %151, %155 : vector<2x8x8xf32>
    %157 = arith.truncf %156 : vector<2x8x8xf32> to vector<2x8x8xbf16>
    %158 = vector.extract_strided_slice %83 {offsets = [0, 0, 24], sizes = [2, 8, 8], strides = [1, 1, 1]} : vector<2x8x32xbf16> to vector<2x8x8xbf16>
    "tpu.trace_start"() <{level = 10 : i32, message = "bqk,bkd->bqd"}> : () -> ()
    %cst_47 = arith.constant dense<0.000000e+00> : vector<2x8x8xf32>
    %159 = tpu.matmul %157, %158, %cst_47 {dimension_numbers = #tpu.dot_dimension_numbers<[2], [1], [1], [2], [0, 0, 0, 1, 1, 2], [0], [0]>} : vector<2x8x8xbf16>, vector<2x8x8xbf16>, vector<2x8x8xf32> -> vector<2x8x8xf32>
    "tpu.trace_stop"() : () -> ()
    %160 = tpu.concatenate %102, %121, %140, %159 in 2 : vector<2x8x8xf32>, vector<2x8x8xf32>, vector<2x8x8xf32>, vector<2x8x8xf32> -> vector<2x8x32xf32>
    %161 = vector.shape_cast %160 : vector<2x8x32xf32> to vector<16x32xf32>
    %c0_48 = arith.constant 0 : index
    %c0_49 = arith.constant 0 : index
    %c96 = arith.constant 96 : index
    %162 = vector.load %arg4[%c0_48, %c0_49, %c96] : memref<2x32x192xbf16, #tpu.memory_space<vmem>>, vector<1x32x32xbf16>
    %163 = vector.shape_cast %162 : vector<1x32x32xbf16> to vector<32x32xbf16>
    %164 = arith.truncf %161 : vector<16x32xf32> to vector<16x32xbf16>
    %cst_50 = arith.constant dense<0.000000e+00> : vector<16x32xf32>
    %165 = tpu.matmul %164, %163, %cst_50 {dimension_numbers = #tpu.dot_dimension_numbers<[1], [0], [0], [1], [0, 0, 1, 1], [], []>} : vector<16x32xbf16>, vector<32x32xbf16>, vector<16x32xf32> -> vector<16x32xf32>
    %c5 = arith.constant 5 : index
    %c0_51 = arith.constant 0 : index
    %166 = vector.load %arg6[%c5, %c0_51] : memref<20x96xf32, #tpu.memory_space<vmem>>, vector<1x32xf32>
    %167 = vector.broadcast %166 : vector<1x32xf32> to vector<16x32xf32>
    %168 = arith.addf %165, %167 : vector<16x32xf32>
    %169 = arith.addf %60, %168 : vector<16x32xf32>
    %c6 = arith.constant 6 : index
    %c0_52 = arith.constant 0 : index
    %170 = vector.load %arg6[%c6, %c0_52] : memref<20x96xf32, #tpu.memory_space<vmem>>, vector<1x32xf32>
    %c7 = arith.constant 7 : index
    %c0_53 = arith.constant 0 : index
    %171 = vector.load %arg6[%c7, %c0_53] : memref<20x96xf32, #tpu.memory_space<vmem>>, vector<1x32xf32>
    %cst_54 = arith.constant dense<0.000000e+00> : vector<16xf32>
    %172 = vector.multi_reduction <add>, %169, %cst_54 [1] : vector<16x32xf32> to vector<16xf32>
    %173 = vector.shape_cast %172 : vector<16xf32> to vector<16x1xf32>
    %cst_55 = arith.constant 3.200000e+01 : f32
    %174 = vector.broadcast %cst_55 : f32 to vector<16x1xf32>
    %175 = arith.divf %173, %174 : vector<16x1xf32>
    %176 = vector.broadcast %175 : vector<16x1xf32> to vector<16x32xf32>
    %177 = arith.subf %169, %176 : vector<16x32xf32>
    %178 = arith.mulf %177, %177 : vector<16x32xf32>
    %cst_56 = arith.constant dense<0.000000e+00> : vector<16xf32>
    %179 = vector.multi_reduction <add>, %178, %cst_56 [1] : vector<16x32xf32> to vector<16xf32>
    %180 = vector.shape_cast %179 : vector<16xf32> to vector<16x1xf32>
    %cst_57 = arith.constant 3.200000e+01 : f32
    %181 = vector.broadcast %cst_57 : f32 to vector<16x1xf32>
    %182 = arith.divf %180, %181 : vector<16x1xf32>
    %183 = vector.broadcast %175 : vector<16x1xf32> to vector<16x32xf32>
    %184 = arith.subf %169, %183 : vector<16x32xf32>
    %cst_58 = arith.constant 9.99999974E-6 : f32
    %185 = vector.broadcast %cst_58 : f32 to vector<16x1xf32>
    %186 = arith.addf %182, %185 : vector<16x1xf32>
    %187 = math.rsqrt %186 : vector<16x1xf32>
    %188 = vector.broadcast %187 : vector<16x1xf32> to vector<16x32xf32>
    %189 = arith.mulf %184, %188 : vector<16x32xf32>
    %190 = vector.broadcast %170 : vector<1x32xf32> to vector<16x32xf32>
    %191 = arith.mulf %189, %190 : vector<16x32xf32>
    %192 = vector.broadcast %171 : vector<1x32xf32> to vector<16x32xf32>
    %193 = arith.addf %191, %192 : vector<16x32xf32>
    %c0_59 = arith.constant 0 : index
    %c0_60 = arith.constant 0 : index
    %c128 = arith.constant 128 : index
    %194 = vector.load %arg4[%c0_59, %c0_60, %c128] : memref<2x32x192xbf16, #tpu.memory_space<vmem>>, vector<1x32x64xbf16>
    %195 = vector.shape_cast %194 : vector<1x32x64xbf16> to vector<32x64xbf16>
    %196 = arith.truncf %193 : vector<16x32xf32> to vector<16x32xbf16>
    %cst_61 = arith.constant dense<0.000000e+00> : vector<16x64xf32>
    %197 = tpu.matmul %196, %195, %cst_61 {dimension_numbers = #tpu.dot_dimension_numbers<[1], [0], [0], [1], [0, 0, 1, 1], [], []>} : vector<16x32xbf16>, vector<32x64xbf16>, vector<16x64xf32> -> vector<16x64xf32>
    %c8 = arith.constant 8 : index
    %c0_62 = arith.constant 0 : index
    %198 = vector.load %arg6[%c8, %c0_62] : memref<20x96xf32, #tpu.memory_space<vmem>>, vector<1x64xf32>
    %199 = vector.broadcast %198 : vector<1x64xf32> to vector<16x64xf32>
    %200 = arith.addf %197, %199 : vector<16x64xf32>
    %cst_63 = arith.constant 5.000000e-01 : f32
    %201 = vector.broadcast %cst_63 : f32 to vector<16x64xf32>
    %202 = arith.mulf %201, %200 : vector<16x64xf32>
    %cst_64 = arith.constant 4.471500e-02 : f32
    %203 = vector.broadcast %cst_64 : f32 to vector<16x64xf32>
    %204 = arith.mulf %203, %200 : vector<16x64xf32>
    %205 = arith.mulf %204, %200 : vector<16x64xf32>
    %206 = arith.mulf %205, %200 : vector<16x64xf32>
    %207 = arith.addf %200, %206 : vector<16x64xf32>
    %cst_65 = arith.constant 0.797884583 : f32
    %208 = vector.broadcast %cst_65 : f32 to vector<16x64xf32>
    %209 = arith.mulf %208, %207 : vector<16x64xf32>
    %210 = math.tanh %209 : vector<16x64xf32>
    %cst_66 = arith.constant 1.000000e+00 : f32
    %211 = vector.broadcast %cst_66 : f32 to vector<16x64xf32>
    %212 = arith.addf %211, %210 : vector<16x64xf32>
    %213 = arith.mulf %202, %212 : vector<16x64xf32>
    %c0_67 = arith.constant 0 : index
    %c0_68 = arith.constant 0 : index
    %c0_69 = arith.constant 0 : index
    %214 = vector.load %arg5[%c0_67, %c0_68, %c0_69] : memref<3x64x32xbf16, #tpu.memory_space<vmem>>, vector<1x64x32xbf16>
    %215 = vector.shape_cast %214 : vector<1x64x32xbf16> to vector<64x32xbf16>
    %216 = arith.truncf %213 : vector<16x64xf32> to vector<16x64xbf16>
    %cst_70 = arith.constant dense<0.000000e+00> : vector<16x32xf32>
    %217 = tpu.matmul %216, %215, %cst_70 {dimension_numbers = #tpu.dot_dimension_numbers<[1], [0], [0], [1], [0, 0, 1, 1], [], []>} : vector<16x64xbf16>, vector<64x32xbf16>, vector<16x32xf32> -> vector<16x32xf32>
    %c9 = arith.constant 9 : index
    %c0_71 = arith.constant 0 : index
    %218 = vector.load %arg6[%c9, %c0_71] : memref<20x96xf32, #tpu.memory_space<vmem>>, vector<1x32xf32>
    %219 = vector.broadcast %218 : vector<1x32xf32> to vector<16x32xf32>
    %220 = arith.addf %217, %219 : vector<16x32xf32>
    %221 = arith.addf %193, %220 : vector<16x32xf32>
    %c10 = arith.constant 10 : index
    %c0_72 = arith.constant 0 : index
    %222 = vector.load %arg6[%c10, %c0_72] : memref<20x96xf32, #tpu.memory_space<vmem>>, vector<1x32xf32>
    %c11 = arith.constant 11 : index
    %c0_73 = arith.constant 0 : index
    %223 = vector.load %arg6[%c11, %c0_73] : memref<20x96xf32, #tpu.memory_space<vmem>>, vector<1x32xf32>
    %cst_74 = arith.constant dense<0.000000e+00> : vector<16xf32>
    %224 = vector.multi_reduction <add>, %221, %cst_74 [1] : vector<16x32xf32> to vector<16xf32>
    %225 = vector.shape_cast %224 : vector<16xf32> to vector<16x1xf32>
    %cst_75 = arith.constant 3.200000e+01 : f32
    %226 = vector.broadcast %cst_75 : f32 to vector<16x1xf32>
    %227 = arith.divf %225, %226 : vector<16x1xf32>
    %228 = vector.broadcast %227 : vector<16x1xf32> to vector<16x32xf32>
    %229 = arith.subf %221, %228 : vector<16x32xf32>
    %230 = arith.mulf %229, %229 : vector<16x32xf32>
    %cst_76 = arith.constant dense<0.000000e+00> : vector<16xf32>
    %231 = vector.multi_reduction <add>, %230, %cst_76 [1] : vector<16x32xf32> to vector<16xf32>
    %232 = vector.shape_cast %231 : vector<16xf32> to vector<16x1xf32>
    %cst_77 = arith.constant 3.200000e+01 : f32
    %233 = vector.broadcast %cst_77 : f32 to vector<16x1xf32>
    %234 = arith.divf %232, %233 : vector<16x1xf32>
    %235 = vector.broadcast %227 : vector<16x1xf32> to vector<16x32xf32>
    %236 = arith.subf %221, %235 : vector<16x32xf32>
    %cst_78 = arith.constant 9.99999974E-6 : f32
    %237 = vector.broadcast %cst_78 : f32 to vector<16x1xf32>
    %238 = arith.addf %234, %237 : vector<16x1xf32>
    %239 = math.rsqrt %238 : vector<16x1xf32>
    %240 = vector.broadcast %239 : vector<16x1xf32> to vector<16x32xf32>
    %241 = arith.mulf %236, %240 : vector<16x32xf32>
    %242 = vector.broadcast %222 : vector<1x32xf32> to vector<16x32xf32>
    %243 = arith.mulf %241, %242 : vector<16x32xf32>
    %244 = vector.broadcast %223 : vector<1x32xf32> to vector<16x32xf32>
    %245 = arith.addf %243, %244 : vector<16x32xf32>
    %c1_79 = arith.constant 1 : index
    %c0_80 = arith.constant 0 : index
    %c0_81 = arith.constant 0 : index
    %246 = vector.load %arg4[%c1_79, %c0_80, %c0_81] : memref<2x32x192xbf16, #tpu.memory_space<vmem>>, vector<1x32x96xbf16>
    %247 = vector.shape_cast %246 : vector<1x32x96xbf16> to vector<32x96xbf16>
    %248 = arith.truncf %245 : vector<16x32xf32> to vector<16x32xbf16>
    %cst_82 = arith.constant dense<0.000000e+00> : vector<16x96xf32>
    %249 = tpu.matmul %248, %247, %cst_82 {dimension_numbers = #tpu.dot_dimension_numbers<[1], [0], [0], [1], [0, 0, 1, 1], [], []>} : vector<16x32xbf16>, vector<32x96xbf16>, vector<16x96xf32> -> vector<16x96xf32>
    %c12 = arith.constant 12 : index
    %c0_83 = arith.constant 0 : index
    %250 = vector.load %arg6[%c12, %c0_83] : memref<20x96xf32, #tpu.memory_space<vmem>>, vector<1x96xf32>
    %251 = vector.broadcast %250 : vector<1x96xf32> to vector<16x96xf32>
    %252 = arith.addf %249, %251 : vector<16x96xf32>
    %253 = vector.extract_strided_slice %252 {offsets = [0, 0], sizes = [16, 32], strides = [1, 1]} : vector<16x96xf32> to vector<16x32xf32>
    %254 = arith.truncf %253 : vector<16x32xf32> to vector<16x32xbf16>
    %255 = vector.shape_cast %254 : vector<16x32xbf16> to vector<2x8x32xbf16>
    %256 = vector.extract_strided_slice %252 {offsets = [0, 32], sizes = [16, 32], strides = [1, 1]} : vector<16x96xf32> to vector<16x32xf32>
    %257 = arith.truncf %256 : vector<16x32xf32> to vector<16x32xbf16>
    %258 = vector.shape_cast %257 : vector<16x32xbf16> to vector<2x8x32xbf16>
    %259 = vector.extract_strided_slice %252 {offsets = [0, 64], sizes = [16, 32], strides = [1, 1]} : vector<16x96xf32> to vector<16x32xf32>
    %260 = arith.truncf %259 : vector<16x32xf32> to vector<16x32xbf16>
    %261 = vector.shape_cast %260 : vector<16x32xbf16> to vector<2x8x32xbf16>
    %262 = vector.extract_strided_slice %255 {offsets = [0, 0, 0], sizes = [2, 8, 8], strides = [1, 1, 1]} : vector<2x8x32xbf16> to vector<2x8x8xbf16>
    %263 = vector.extract_strided_slice %258 {offsets = [0, 0, 0], sizes = [2, 8, 8], strides = [1, 1, 1]} : vector<2x8x32xbf16> to vector<2x8x8xbf16>
    "tpu.trace_start"() <{level = 10 : i32, message = "bqd,bkd->bqk"}> : () -> ()
    %cst_84 = arith.constant dense<0.000000e+00> : vector<2x8x8xf32>
    %264 = tpu.matmul %262, %263, %cst_84 {dimension_numbers = #tpu.dot_dimension_numbers<[2], [2], [1], [1], [0, 0, 0, 1, 1, 1], [0], [0]>} : vector<2x8x8xbf16>, vector<2x8x8xbf16>, vector<2x8x8xf32> -> vector<2x8x8xf32>
    "tpu.trace_stop"() : () -> ()
    %cst_85 = arith.constant 0.353553385 : f32
    %265 = vector.broadcast %cst_85 : f32 to vector<2x8x8xf32>
    %266 = arith.mulf %264, %265 : vector<2x8x8xf32>
    %267 = arith.addf %266, %67 : vector<2x8x8xf32>
    %cst_86 = arith.constant dense<0xFF800000> : vector<2x8xf32>
    %268 = vector.multi_reduction <maximumf>, %267, %cst_86 [2] : vector<2x8x8xf32> to vector<2x8xf32>
    %269 = vector.shape_cast %268 : vector<2x8xf32> to vector<2x8x1xf32>
    %270 = vector.broadcast %269 : vector<2x8x1xf32> to vector<2x8x8xf32>
    %271 = arith.subf %267, %270 : vector<2x8x8xf32>
    %272 = math.exp %271 : vector<2x8x8xf32>
    %cst_87 = arith.constant dense<0.000000e+00> : vector<2x8xf32>
    %273 = vector.multi_reduction <add>, %272, %cst_87 [2] : vector<2x8x8xf32> to vector<2x8xf32>
    %274 = vector.shape_cast %273 : vector<2x8xf32> to vector<2x8x1xf32>
    %275 = tpu.reciprocal %274 {approx = true} : vector<2x8x1xf32> -> vector<2x8x1xf32>
    %276 = vector.broadcast %275 : vector<2x8x1xf32> to vector<2x8x8xf32>
    %277 = arith.mulf %272, %276 : vector<2x8x8xf32>
    %278 = arith.truncf %277 : vector<2x8x8xf32> to vector<2x8x8xbf16>
    %279 = vector.extract_strided_slice %261 {offsets = [0, 0, 0], sizes = [2, 8, 8], strides = [1, 1, 1]} : vector<2x8x32xbf16> to vector<2x8x8xbf16>
    "tpu.trace_start"() <{level = 10 : i32, message = "bqk,bkd->bqd"}> : () -> ()
    %cst_88 = arith.constant dense<0.000000e+00> : vector<2x8x8xf32>
    %280 = tpu.matmul %278, %279, %cst_88 {dimension_numbers = #tpu.dot_dimension_numbers<[2], [1], [1], [2], [0, 0, 0, 1, 1, 2], [0], [0]>} : vector<2x8x8xbf16>, vector<2x8x8xbf16>, vector<2x8x8xf32> -> vector<2x8x8xf32>
    "tpu.trace_stop"() : () -> ()
    %281 = vector.extract_strided_slice %255 {offsets = [0, 0, 8], sizes = [2, 8, 8], strides = [1, 1, 1]} : vector<2x8x32xbf16> to vector<2x8x8xbf16>
    %282 = vector.extract_strided_slice %258 {offsets = [0, 0, 8], sizes = [2, 8, 8], strides = [1, 1, 1]} : vector<2x8x32xbf16> to vector<2x8x8xbf16>
    "tpu.trace_start"() <{level = 10 : i32, message = "bqd,bkd->bqk"}> : () -> ()
    %cst_89 = arith.constant dense<0.000000e+00> : vector<2x8x8xf32>
    %283 = tpu.matmul %281, %282, %cst_89 {dimension_numbers = #tpu.dot_dimension_numbers<[2], [2], [1], [1], [0, 0, 0, 1, 1, 1], [0], [0]>} : vector<2x8x8xbf16>, vector<2x8x8xbf16>, vector<2x8x8xf32> -> vector<2x8x8xf32>
    "tpu.trace_stop"() : () -> ()
    %cst_90 = arith.constant 0.353553385 : f32
    %284 = vector.broadcast %cst_90 : f32 to vector<2x8x8xf32>
    %285 = arith.mulf %283, %284 : vector<2x8x8xf32>
    %286 = arith.addf %285, %67 : vector<2x8x8xf32>
    %cst_91 = arith.constant dense<0xFF800000> : vector<2x8xf32>
    %287 = vector.multi_reduction <maximumf>, %286, %cst_91 [2] : vector<2x8x8xf32> to vector<2x8xf32>
    %288 = vector.shape_cast %287 : vector<2x8xf32> to vector<2x8x1xf32>
    %289 = vector.broadcast %288 : vector<2x8x1xf32> to vector<2x8x8xf32>
    %290 = arith.subf %286, %289 : vector<2x8x8xf32>
    %291 = math.exp %290 : vector<2x8x8xf32>
    %cst_92 = arith.constant dense<0.000000e+00> : vector<2x8xf32>
    %292 = vector.multi_reduction <add>, %291, %cst_92 [2] : vector<2x8x8xf32> to vector<2x8xf32>
    %293 = vector.shape_cast %292 : vector<2x8xf32> to vector<2x8x1xf32>
    %294 = tpu.reciprocal %293 {approx = true} : vector<2x8x1xf32> -> vector<2x8x1xf32>
    %295 = vector.broadcast %294 : vector<2x8x1xf32> to vector<2x8x8xf32>
    %296 = arith.mulf %291, %295 : vector<2x8x8xf32>
    %297 = arith.truncf %296 : vector<2x8x8xf32> to vector<2x8x8xbf16>
    %298 = vector.extract_strided_slice %261 {offsets = [0, 0, 8], sizes = [2, 8, 8], strides = [1, 1, 1]} : vector<2x8x32xbf16> to vector<2x8x8xbf16>
    "tpu.trace_start"() <{level = 10 : i32, message = "bqk,bkd->bqd"}> : () -> ()
    %cst_93 = arith.constant dense<0.000000e+00> : vector<2x8x8xf32>
    %299 = tpu.matmul %297, %298, %cst_93 {dimension_numbers = #tpu.dot_dimension_numbers<[2], [1], [1], [2], [0, 0, 0, 1, 1, 2], [0], [0]>} : vector<2x8x8xbf16>, vector<2x8x8xbf16>, vector<2x8x8xf32> -> vector<2x8x8xf32>
    "tpu.trace_stop"() : () -> ()
    %300 = vector.extract_strided_slice %255 {offsets = [0, 0, 16], sizes = [2, 8, 8], strides = [1, 1, 1]} : vector<2x8x32xbf16> to vector<2x8x8xbf16>
    %301 = vector.extract_strided_slice %258 {offsets = [0, 0, 16], sizes = [2, 8, 8], strides = [1, 1, 1]} : vector<2x8x32xbf16> to vector<2x8x8xbf16>
    "tpu.trace_start"() <{level = 10 : i32, message = "bqd,bkd->bqk"}> : () -> ()
    %cst_94 = arith.constant dense<0.000000e+00> : vector<2x8x8xf32>
    %302 = tpu.matmul %300, %301, %cst_94 {dimension_numbers = #tpu.dot_dimension_numbers<[2], [2], [1], [1], [0, 0, 0, 1, 1, 1], [0], [0]>} : vector<2x8x8xbf16>, vector<2x8x8xbf16>, vector<2x8x8xf32> -> vector<2x8x8xf32>
    "tpu.trace_stop"() : () -> ()
    %cst_95 = arith.constant 0.353553385 : f32
    %303 = vector.broadcast %cst_95 : f32 to vector<2x8x8xf32>
    %304 = arith.mulf %302, %303 : vector<2x8x8xf32>
    %305 = arith.addf %304, %67 : vector<2x8x8xf32>
    %cst_96 = arith.constant dense<0xFF800000> : vector<2x8xf32>
    %306 = vector.multi_reduction <maximumf>, %305, %cst_96 [2] : vector<2x8x8xf32> to vector<2x8xf32>
    %307 = vector.shape_cast %306 : vector<2x8xf32> to vector<2x8x1xf32>
    %308 = vector.broadcast %307 : vector<2x8x1xf32> to vector<2x8x8xf32>
    %309 = arith.subf %305, %308 : vector<2x8x8xf32>
    %310 = math.exp %309 : vector<2x8x8xf32>
    %cst_97 = arith.constant dense<0.000000e+00> : vector<2x8xf32>
    %311 = vector.multi_reduction <add>, %310, %cst_97 [2] : vector<2x8x8xf32> to vector<2x8xf32>
    %312 = vector.shape_cast %311 : vector<2x8xf32> to vector<2x8x1xf32>
    %313 = tpu.reciprocal %312 {approx = true} : vector<2x8x1xf32> -> vector<2x8x1xf32>
    %314 = vector.broadcast %313 : vector<2x8x1xf32> to vector<2x8x8xf32>
    %315 = arith.mulf %310, %314 : vector<2x8x8xf32>
    %316 = arith.truncf %315 : vector<2x8x8xf32> to vector<2x8x8xbf16>
    %317 = vector.extract_strided_slice %261 {offsets = [0, 0, 16], sizes = [2, 8, 8], strides = [1, 1, 1]} : vector<2x8x32xbf16> to vector<2x8x8xbf16>
    "tpu.trace_start"() <{level = 10 : i32, message = "bqk,bkd->bqd"}> : () -> ()
    %cst_98 = arith.constant dense<0.000000e+00> : vector<2x8x8xf32>
    %318 = tpu.matmul %316, %317, %cst_98 {dimension_numbers = #tpu.dot_dimension_numbers<[2], [1], [1], [2], [0, 0, 0, 1, 1, 2], [0], [0]>} : vector<2x8x8xbf16>, vector<2x8x8xbf16>, vector<2x8x8xf32> -> vector<2x8x8xf32>
    "tpu.trace_stop"() : () -> ()
    %319 = vector.extract_strided_slice %255 {offsets = [0, 0, 24], sizes = [2, 8, 8], strides = [1, 1, 1]} : vector<2x8x32xbf16> to vector<2x8x8xbf16>
    %320 = vector.extract_strided_slice %258 {offsets = [0, 0, 24], sizes = [2, 8, 8], strides = [1, 1, 1]} : vector<2x8x32xbf16> to vector<2x8x8xbf16>
    "tpu.trace_start"() <{level = 10 : i32, message = "bqd,bkd->bqk"}> : () -> ()
    %cst_99 = arith.constant dense<0.000000e+00> : vector<2x8x8xf32>
    %321 = tpu.matmul %319, %320, %cst_99 {dimension_numbers = #tpu.dot_dimension_numbers<[2], [2], [1], [1], [0, 0, 0, 1, 1, 1], [0], [0]>} : vector<2x8x8xbf16>, vector<2x8x8xbf16>, vector<2x8x8xf32> -> vector<2x8x8xf32>
    "tpu.trace_stop"() : () -> ()
    %cst_100 = arith.constant 0.353553385 : f32
    %322 = vector.broadcast %cst_100 : f32 to vector<2x8x8xf32>
    %323 = arith.mulf %321, %322 : vector<2x8x8xf32>
    %324 = arith.addf %323, %67 : vector<2x8x8xf32>
    %cst_101 = arith.constant dense<0xFF800000> : vector<2x8xf32>
    %325 = vector.multi_reduction <maximumf>, %324, %cst_101 [2] : vector<2x8x8xf32> to vector<2x8xf32>
    %326 = vector.shape_cast %325 : vector<2x8xf32> to vector<2x8x1xf32>
    %327 = vector.broadcast %326 : vector<2x8x1xf32> to vector<2x8x8xf32>
    %328 = arith.subf %324, %327 : vector<2x8x8xf32>
    %329 = math.exp %328 : vector<2x8x8xf32>
    %cst_102 = arith.constant dense<0.000000e+00> : vector<2x8xf32>
    %330 = vector.multi_reduction <add>, %329, %cst_102 [2] : vector<2x8x8xf32> to vector<2x8xf32>
    %331 = vector.shape_cast %330 : vector<2x8xf32> to vector<2x8x1xf32>
    %332 = tpu.reciprocal %331 {approx = true} : vector<2x8x1xf32> -> vector<2x8x1xf32>
    %333 = vector.broadcast %332 : vector<2x8x1xf32> to vector<2x8x8xf32>
    %334 = arith.mulf %329, %333 : vector<2x8x8xf32>
    %335 = arith.truncf %334 : vector<2x8x8xf32> to vector<2x8x8xbf16>
    %336 = vector.extract_strided_slice %261 {offsets = [0, 0, 24], sizes = [2, 8, 8], strides = [1, 1, 1]} : vector<2x8x32xbf16> to vector<2x8x8xbf16>
    "tpu.trace_start"() <{level = 10 : i32, message = "bqk,bkd->bqd"}> : () -> ()
    %cst_103 = arith.constant dense<0.000000e+00> : vector<2x8x8xf32>
    %337 = tpu.matmul %335, %336, %cst_103 {dimension_numbers = #tpu.dot_dimension_numbers<[2], [1], [1], [2], [0, 0, 0, 1, 1, 2], [0], [0]>} : vector<2x8x8xbf16>, vector<2x8x8xbf16>, vector<2x8x8xf32> -> vector<2x8x8xf32>
    "tpu.trace_stop"() : () -> ()
    %338 = tpu.concatenate %280, %299, %318, %337 in 2 : vector<2x8x8xf32>, vector<2x8x8xf32>, vector<2x8x8xf32>, vector<2x8x8xf32> -> vector<2x8x32xf32>
    %339 = vector.shape_cast %338 : vector<2x8x32xf32> to vector<16x32xf32>
    %c1_104 = arith.constant 1 : index
    %c0_105 = arith.constant 0 : index
    %c96_106 = arith.constant 96 : index
    %340 = vector.load %arg4[%c1_104, %c0_105, %c96_106] : memref<2x32x192xbf16, #tpu.memory_space<vmem>>, vector<1x32x32xbf16>
    %341 = vector.shape_cast %340 : vector<1x32x32xbf16> to vector<32x32xbf16>
    %342 = arith.truncf %339 : vector<16x32xf32> to vector<16x32xbf16>
    %cst_107 = arith.constant dense<0.000000e+00> : vector<16x32xf32>
    %343 = tpu.matmul %342, %341, %cst_107 {dimension_numbers = #tpu.dot_dimension_numbers<[1], [0], [0], [1], [0, 0, 1, 1], [], []>} : vector<16x32xbf16>, vector<32x32xbf16>, vector<16x32xf32> -> vector<16x32xf32>
    %c13 = arith.constant 13 : index
    %c0_108 = arith.constant 0 : index
    %344 = vector.load %arg6[%c13, %c0_108] : memref<20x96xf32, #tpu.memory_space<vmem>>, vector<1x32xf32>
    %345 = vector.broadcast %344 : vector<1x32xf32> to vector<16x32xf32>
    %346 = arith.addf %343, %345 : vector<16x32xf32>
    %347 = arith.addf %245, %346 : vector<16x32xf32>
    %c14 = arith.constant 14 : index
    %c0_109 = arith.constant 0 : index
    %348 = vector.load %arg6[%c14, %c0_109] : memref<20x96xf32, #tpu.memory_space<vmem>>, vector<1x32xf32>
    %c15 = arith.constant 15 : index
    %c0_110 = arith.constant 0 : index
    %349 = vector.load %arg6[%c15, %c0_110] : memref<20x96xf32, #tpu.memory_space<vmem>>, vector<1x32xf32>
    %cst_111 = arith.constant dense<0.000000e+00> : vector<16xf32>
    %350 = vector.multi_reduction <add>, %347, %cst_111 [1] : vector<16x32xf32> to vector<16xf32>
    %351 = vector.shape_cast %350 : vector<16xf32> to vector<16x1xf32>
    %cst_112 = arith.constant 3.200000e+01 : f32
    %352 = vector.broadcast %cst_112 : f32 to vector<16x1xf32>
    %353 = arith.divf %351, %352 : vector<16x1xf32>
    %354 = vector.broadcast %353 : vector<16x1xf32> to vector<16x32xf32>
    %355 = arith.subf %347, %354 : vector<16x32xf32>
    %356 = arith.mulf %355, %355 : vector<16x32xf32>
    %cst_113 = arith.constant dense<0.000000e+00> : vector<16xf32>
    %357 = vector.multi_reduction <add>, %356, %cst_113 [1] : vector<16x32xf32> to vector<16xf32>
    %358 = vector.shape_cast %357 : vector<16xf32> to vector<16x1xf32>
    %cst_114 = arith.constant 3.200000e+01 : f32
    %359 = vector.broadcast %cst_114 : f32 to vector<16x1xf32>
    %360 = arith.divf %358, %359 : vector<16x1xf32>
    %361 = vector.broadcast %353 : vector<16x1xf32> to vector<16x32xf32>
    %362 = arith.subf %347, %361 : vector<16x32xf32>
    %cst_115 = arith.constant 9.99999974E-6 : f32
    %363 = vector.broadcast %cst_115 : f32 to vector<16x1xf32>
    %364 = arith.addf %360, %363 : vector<16x1xf32>
    %365 = math.rsqrt %364 : vector<16x1xf32>
    %366 = vector.broadcast %365 : vector<16x1xf32> to vector<16x32xf32>
    %367 = arith.mulf %362, %366 : vector<16x32xf32>
    %368 = vector.broadcast %348 : vector<1x32xf32> to vector<16x32xf32>
    %369 = arith.mulf %367, %368 : vector<16x32xf32>
    %370 = vector.broadcast %349 : vector<1x32xf32> to vector<16x32xf32>
    %371 = arith.addf %369, %370 : vector<16x32xf32>
    %c1_116 = arith.constant 1 : index
    %c0_117 = arith.constant 0 : index
    %c128_118 = arith.constant 128 : index
    %372 = vector.load %arg4[%c1_116, %c0_117, %c128_118] : memref<2x32x192xbf16, #tpu.memory_space<vmem>>, vector<1x32x64xbf16>
    %373 = vector.shape_cast %372 : vector<1x32x64xbf16> to vector<32x64xbf16>
    %374 = arith.truncf %371 : vector<16x32xf32> to vector<16x32xbf16>
    %cst_119 = arith.constant dense<0.000000e+00> : vector<16x64xf32>
    %375 = tpu.matmul %374, %373, %cst_119 {dimension_numbers = #tpu.dot_dimension_numbers<[1], [0], [0], [1], [0, 0, 1, 1], [], []>} : vector<16x32xbf16>, vector<32x64xbf16>, vector<16x64xf32> -> vector<16x64xf32>
    %c16 = arith.constant 16 : index
    %c0_120 = arith.constant 0 : index
    %376 = vector.load %arg6[%c16, %c0_120] : memref<20x96xf32, #tpu.memory_space<vmem>>, vector<1x64xf32>
    %377 = vector.broadcast %376 : vector<1x64xf32> to vector<16x64xf32>
    %378 = arith.addf %375, %377 : vector<16x64xf32>
    %cst_121 = arith.constant 5.000000e-01 : f32
    %379 = vector.broadcast %cst_121 : f32 to vector<16x64xf32>
    %380 = arith.mulf %379, %378 : vector<16x64xf32>
    %cst_122 = arith.constant 4.471500e-02 : f32
    %381 = vector.broadcast %cst_122 : f32 to vector<16x64xf32>
    %382 = arith.mulf %381, %378 : vector<16x64xf32>
    %383 = arith.mulf %382, %378 : vector<16x64xf32>
    %384 = arith.mulf %383, %378 : vector<16x64xf32>
    %385 = arith.addf %378, %384 : vector<16x64xf32>
    %cst_123 = arith.constant 0.797884583 : f32
    %386 = vector.broadcast %cst_123 : f32 to vector<16x64xf32>
    %387 = arith.mulf %386, %385 : vector<16x64xf32>
    %388 = math.tanh %387 : vector<16x64xf32>
    %cst_124 = arith.constant 1.000000e+00 : f32
    %389 = vector.broadcast %cst_124 : f32 to vector<16x64xf32>
    %390 = arith.addf %389, %388 : vector<16x64xf32>
    %391 = arith.mulf %380, %390 : vector<16x64xf32>
    %c1_125 = arith.constant 1 : index
    %c0_126 = arith.constant 0 : index
    %c0_127 = arith.constant 0 : index
    %392 = vector.load %arg5[%c1_125, %c0_126, %c0_127] : memref<3x64x32xbf16, #tpu.memory_space<vmem>>, vector<1x64x32xbf16>
    %393 = vector.shape_cast %392 : vector<1x64x32xbf16> to vector<64x32xbf16>
    %394 = arith.truncf %391 : vector<16x64xf32> to vector<16x64xbf16>
    %cst_128 = arith.constant dense<0.000000e+00> : vector<16x32xf32>
    %395 = tpu.matmul %394, %393, %cst_128 {dimension_numbers = #tpu.dot_dimension_numbers<[1], [0], [0], [1], [0, 0, 1, 1], [], []>} : vector<16x64xbf16>, vector<64x32xbf16>, vector<16x32xf32> -> vector<16x32xf32>
    %c17 = arith.constant 17 : index
    %c0_129 = arith.constant 0 : index
    %396 = vector.load %arg6[%c17, %c0_129] : memref<20x96xf32, #tpu.memory_space<vmem>>, vector<1x32xf32>
    %397 = vector.broadcast %396 : vector<1x32xf32> to vector<16x32xf32>
    %398 = arith.addf %395, %397 : vector<16x32xf32>
    %399 = arith.addf %371, %398 : vector<16x32xf32>
    %c18 = arith.constant 18 : index
    %c0_130 = arith.constant 0 : index
    %400 = vector.load %arg6[%c18, %c0_130] : memref<20x96xf32, #tpu.memory_space<vmem>>, vector<1x32xf32>
    %c19 = arith.constant 19 : index
    %c0_131 = arith.constant 0 : index
    %401 = vector.load %arg6[%c19, %c0_131] : memref<20x96xf32, #tpu.memory_space<vmem>>, vector<1x32xf32>
    %cst_132 = arith.constant dense<0.000000e+00> : vector<16xf32>
    %402 = vector.multi_reduction <add>, %399, %cst_132 [1] : vector<16x32xf32> to vector<16xf32>
    %403 = vector.shape_cast %402 : vector<16xf32> to vector<16x1xf32>
    %cst_133 = arith.constant 3.200000e+01 : f32
    %404 = vector.broadcast %cst_133 : f32 to vector<16x1xf32>
    %405 = arith.divf %403, %404 : vector<16x1xf32>
    %406 = vector.broadcast %405 : vector<16x1xf32> to vector<16x32xf32>
    %407 = arith.subf %399, %406 : vector<16x32xf32>
    %408 = arith.mulf %407, %407 : vector<16x32xf32>
    %cst_134 = arith.constant dense<0.000000e+00> : vector<16xf32>
    %409 = vector.multi_reduction <add>, %408, %cst_134 [1] : vector<16x32xf32> to vector<16xf32>
    %410 = vector.shape_cast %409 : vector<16xf32> to vector<16x1xf32>
    %cst_135 = arith.constant 3.200000e+01 : f32
    %411 = vector.broadcast %cst_135 : f32 to vector<16x1xf32>
    %412 = arith.divf %410, %411 : vector<16x1xf32>
    %413 = vector.broadcast %405 : vector<16x1xf32> to vector<16x32xf32>
    %414 = arith.subf %399, %413 : vector<16x32xf32>
    %cst_136 = arith.constant 9.99999974E-6 : f32
    %415 = vector.broadcast %cst_136 : f32 to vector<16x1xf32>
    %416 = arith.addf %412, %415 : vector<16x1xf32>
    %417 = math.rsqrt %416 : vector<16x1xf32>
    %418 = vector.broadcast %417 : vector<16x1xf32> to vector<16x32xf32>
    %419 = arith.mulf %414, %418 : vector<16x32xf32>
    %420 = vector.broadcast %400 : vector<1x32xf32> to vector<16x32xf32>
    %421 = arith.mulf %419, %420 : vector<16x32xf32>
    %422 = vector.broadcast %401 : vector<1x32xf32> to vector<16x32xf32>
    %423 = arith.addf %421, %422 : vector<16x32xf32>
    %424 = vector.extract_strided_slice %423 {offsets = [0, 0], sizes = [1, 32], strides = [1, 1]} : vector<16x32xf32> to vector<1x32xf32>
    %425 = vector.extract_strided_slice %423 {offsets = [8, 0], sizes = [1, 32], strides = [1, 1]} : vector<16x32xf32> to vector<1x32xf32>
    %426 = tpu.concatenate %424, %425 in 0 : vector<1x32xf32>, vector<1x32xf32> -> vector<2x32xf32>
    %c2_137 = arith.constant 2 : index
    %c0_138 = arith.constant 0 : index
    %c0_139 = arith.constant 0 : index
    %427 = vector.load %arg5[%c2_137, %c0_138, %c0_139] : memref<3x64x32xbf16, #tpu.memory_space<vmem>>, vector<1x32x32xbf16>
    %428 = vector.shape_cast %427 : vector<1x32x32xbf16> to vector<32x32xbf16>
    %429 = arith.truncf %426 : vector<2x32xf32> to vector<2x32xbf16>
    %cst_140 = arith.constant dense<0.000000e+00> : vector<2x32xf32>
    %430 = tpu.matmul %429, %428, %cst_140 {dimension_numbers = #tpu.dot_dimension_numbers<[1], [0], [0], [1], [0, 0, 1, 1], [], []>} : vector<2x32xbf16>, vector<32x32xbf16>, vector<2x32xf32> -> vector<2x32xf32>
    %c3 = arith.constant 3 : index
    %c0_141 = arith.constant 0 : index
    %431 = vector.load %arg6[%c3, %c0_141] : memref<20x96xf32, #tpu.memory_space<vmem>>, vector<1x32xf32>
    %432 = vector.broadcast %431 : vector<1x32xf32> to vector<2x32xf32>
    %433 = arith.addf %430, %432 : vector<2x32xf32>
    %434 = math.tanh %433 : vector<2x32xf32>
    %c0_142 = arith.constant 0 : index
    %c0_143 = arith.constant 0 : index
    %435 = vector.load %arg7[%c0_142, %c0_143] : memref<2x32xf32, #tpu.memory_space<vmem>>, vector<2x32xf32>
    tpu.vector_store %arg7[%c0_142, %c0_143], %434 {strides = array<i32>} : memref<2x32xf32, #tpu.memory_space<vmem>>, vector<2x32xf32>,
    return
  }
}

</mosaic_0001>

<llo_original>
// kernel: xlm_roberta_pooler_output.1
$region0: #{xlm_roberta_pooler_output.1}
  #allocation0 [shape = 'u32[]', space=smem, size = 0x4, offset = 0x4, fixed_abs, tag = 'smem constant byte address 0x4 - core index']
  #allocation1 [shape = 'u32[144,128]{1,0:T(1,128)}', space=vmem, size = 0x12000, scoped, tag = 'internal scratch']
  %s0 = inlined_call_operand.vmem [shape: s32[16,1], index: 0, kind: input, shape index: {}]
  %s1 = inlined_call_operand.vmem [shape: f32[2,1,8], index: 1, kind: input, shape index: {}]
  %s2 = inlined_call_operand.vmem [shape: f32[120,32], index: 2, kind: input, shape index: {}]
  %s3 = inlined_call_operand.vmem [shape: f32[40,32], index: 3, kind: input, shape index: {}]
  %s4 = inlined_call_operand.vmem [shape: bf16[2,32,192], index: 4, kind: input, shape index: {}]
  %s5 = inlined_call_operand.vmem [shape: bf16[3,64,32], index: 5, kind: input, shape index: {}]
  %s6 = inlined_call_operand.vmem [shape: f32[20,96], index: 6, kind: input, shape index: {}]
  %s7 = inlined_call_operand.hbm [shape: f32[2,32], index: 7, kind: output, shape index: {}]
  %s8 = sld [smem:[#allocation0]]
  $region38: #{xlm_roberta_pooler_output.1} parent=0
    _
  %s10 = ssub.s32 1, %s8
  %s11 = scalar_select 0, %s10, %s8
  $region1: #{xlm_roberta_pooler_output.1} parent=0
    #allocation2 [shape = 'u8[1024]{0}', space=vmem, size = 0x400, scoped, tag = 'output window, operand 0, single buffered']
    #allocation3 [shape = 's32[1]{0}', space=sflag, size = 0x4, scoped, tag = 'scoped memory for xlm_roberta_pooler_output.1']
    %12 = vsyncpa [#allocation3], 0
    // Predicated region
    $region2: #{xlm_roberta_pooler_output.1} parent=1 // pred_check
      _
    $region3: #{xlm_roberta_pooler_output.1} parent=1 // pred_check_branch
      %14 = sbr.rel (0) target = $region5
    $region4: #{xlm_roberta_pooler_output.1} parent=1 // pred_region
      _
    $region5: #{xlm_roberta_pooler_output.1} parent=1 // pred_fallthru
      _
    // Predicated region
    $region6: #{xlm_roberta_pooler_output.1} parent=1 // pred_check
      _
    $region7: #{xlm_roberta_pooler_output.1} parent=1 // pred_check_branch
      %16 = sbr.rel (0) target = $region9
    $region8: #{xlm_roberta_pooler_output.1} parent=1 // pred_region
      _
    $region9: #{xlm_roberta_pooler_output.1} parent=1 // pred_fallthru
      _
    // Predicated region
    $region10: #{xlm_roberta_pooler_output.1} parent=1 // pred_check
      _
    $region11: #{xlm_roberta_pooler_output.1} parent=1 // pred_check_branch
      %18 = sbr.rel (0) target = $region13
    $region12: #{xlm_roberta_pooler_output.1} parent=1 // pred_region
      _
    $region13: #{xlm_roberta_pooler_output.1} parent=1 // pred_fallthru
      _
    // Predicated region
    $region14: #{xlm_roberta_pooler_output.1} parent=1 // pred_check
      _
    $region15: #{xlm_roberta_pooler_output.1} parent=1 // pred_check_branch
      %20 = sbr.rel (0) target = $region17
    $region16: #{xlm_roberta_pooler_output.1} parent=1 // pred_region
      _
    $region17: #{xlm_roberta_pooler_output.1} parent=1 // pred_fallthru
      _
    // Predicated region
    $region18: #{xlm_roberta_pooler_output.1} parent=1 // pred_check
      _
    $region19: #{xlm_roberta_pooler_output.1} parent=1 // pred_check_branch
      %22 = sbr.rel (0) target = $region21
    $region20: #{xlm_roberta_pooler_output.1} parent=1 // pred_region
      _
    $region21: #{xlm_roberta_pooler_output.1} parent=1 // pred_fallthru
      _
    // Predicated region
    $region22: #{xlm_roberta_pooler_output.1} parent=1 // pred_check
      _
    $region23: #{xlm_roberta_pooler_output.1} parent=1 // pred_check_branch
      %24 = sbr.rel (0) target = $region25
    $region24: #{xlm_roberta_pooler_output.1} parent=1 // pred_region
      _
    $region25: #{xlm_roberta_pooler_output.1} parent=1 // pred_fallthru
      _
    // Predicated region
    $region26: #{xlm_roberta_pooler_output.1} parent=1 // pred_check
      _
    $region27: #{xlm_roberta_pooler_output.1} parent=1 // pred_check_branch
      %26 = sbr.rel (0) target = $region29
    $region28: #{xlm_roberta_pooler_output.1} parent=1 // pred_region
      _
    $region29: #{xlm_roberta_pooler_output.1} parent=1 // pred_fallthru
      _
    %v28 = vld [vmem:[%s0] sm:$0xff]
    %v29 = vld [vmem:[%s0 + $0x8] sm:$0xff]
    %v30 = vlaneseq
    %v31 = vand.u32 %v30, 127
    %32 = vset.pattern.permute.xlu0 0
    %33 = vperm.xlu0 %32, %v28
    %v34 = vpop.permute.xlu0 %33
    %35 = vset.pattern.permute.xlu0 0
    %36 = vperm.xlu0 %35, %v29
    %v37 = vpop.permute.xlu0 %36
    %vm38 = vcmp.eq.s32.totalorder %v34, %v31
    %vm39 = vcmp.eq.s32.totalorder %v37, %v31
    %v40 = vsel %vm38, 1, 0
    %v41 = vsel %vm39, 1, 0
    %v42 = vcvt.s32.f32 %v40
    %v43 = vcvt.s32.f32 %v41
    %v44 = vld [vmem:[%s2] sm:$0xff]
    %v45 = vld [vmem:[%s2 + $0x8] sm:$0xff]
    %v46 = vld [vmem:[%s2 + $0x10] sm:$0xff]
    %v47 = vld [vmem:[%s2 + $0x18] sm:$0xff]
    %v48 = vld [vmem:[%s2 + $0x20] sm:$0xff]
    %v49 = vld [vmem:[%s2 + $0x28] sm:$0xff]
    %v50 = vld [vmem:[%s2 + $0x30] sm:$0xff]
    %v51 = vld [vmem:[%s2 + $0x38] sm:$0xff]
    %v52 = vld [vmem:[%s2 + $0x40] sm:$0xff]
    %v53 = vld [vmem:[%s2 + $0x48] sm:$0xff]
    %v54 = vld [vmem:[%s2 + $0x50] sm:$0xff]
    %v55 = vld [vmem:[%s2 + $0x58] sm:$0xff]
    %v56 = vld [vmem:[%s2 + $0x60] sm:$0xff]
    %v57 = vld [vmem:[%s2 + $0x68] sm:$0xff]
    %v58 = vld [vmem:[%s2 + $0x70] sm:$0xff]
    %vm59 = vcmp.ne.s32.totalorder %v28, 1
    %vm60 = vcmp.ne.s32.totalorder %v29, 1
    %v61 = vsel %vm59, 1, 0
    %v62 = vsel %vm60, 1, 0
    %v63 = vcvt.s32.f32 %v61
    %v64 = vcvt.s32.f32 %v62
    %v65 = vlaneseq
    %v66 = vshrl.u32 %v65, 7
    %vm67 = vcmp.le.s32.totalorder %v31, %v66
    %v68 = vsel %vm67, 1, 0
    %v69 = vcvt.s32.f32 %v68
    %vm70 = vcmask 64512
    %v72 = vsel %vm70, %v69, 0
    %74 = vmatprep.subr.mxu0 0.0
    %75 = vmatpush1.msra.mxu0 %v63
    %76 = vmatprep.subr.mxu0 0.0
    %77 = vmatpush1.msra.mxu0 0.0
    %78 = vmatprep.subr.mxu0 0.0
    %79 = vmatpush1.msra.mxu0 0.0
    %80 = vmatprep.subr.mxu0 0.0
    %81 = vmatpush1.msra.mxu0 0.0
    %82 = vmatprep.subr.mxu0 0.0
    %83 = vmatpush1.msra.mxu0 0.0
    %84 = vmatprep.subr.mxu0 0.0
    %85 = vmatpush1.msra.mxu0 0.0
    %86 = vmatprep.subr.mxu0 0.0
    %87 = vmatpush1.msra.mxu0 0.0
    %88 = vmatprep.subr.mxu0 0.0
    %89 = vmatpush1.msra.mxu0 0.0
    %90 = vmatprep.subr.mxu0 0.0
    %91 = vmatpush1.msra.mxu0 0.0
    %92 = vmatprep.subr.mxu0 0.0
    %93 = vmatpush1.msra.mxu0 0.0
    %94 = vmatprep.subr.mxu0 0.0
    %95 = vmatpush1.msra.mxu0 0.0
    %96 = vmatprep.subr.mxu0 0.0
    %97 = vmatpush1.msra.mxu0 0.0
    %98 = vmatprep.subr.mxu0 0.0
    %99 = vmatpush1.msra.mxu0 0.0
    %100 = vmatprep.subr.mxu0 0.0
    %101 = vmatpush1.msra.mxu0 0.0
    %102 = vmatprep.subr.mxu0 0.0
    %103 = vmatpush1.msra.mxu0 0.0
    %104 = vmatprep.subr.mxu0 0.0
    %105 = vmatpush1.msra.mxu0 0.0
    %106 = vmatprep.subr.mxu0 0.0
    %107 = vmatpush1.msra.mxu0 0.0
    %108 = vmatprep.subr.mxu0 0.0
    %109 = vmatpush1.msra.mxu0 0.0
    %110 = vmatprep.subr.mxu0 0.0
    %111 = vmatpush1.msra.mxu0 0.0
    %112 = vmatprep.subr.mxu0 0.0
    %113 = vmatpush1.msra.mxu0 0.0
    %114 = vmatprep.subr.mxu0 0.0
    %115 = vmatpush1.msra.mxu0 0.0
    %116 = vmatprep.subr.mxu0 0.0
    %117 = vmatpush1.msra.mxu0 0.0
    %118 = vmatprep.subr.mxu0 0.0
    %119 = vmatpush1.msra.mxu0 0.0
    %120 = vmatprep.subr.mxu0 0.0
    %121 = vmatpush1.msra.mxu0 0.0
    %122 = vmatprep.subr.mxu0 0.0
    %123 = vmatpush1.msra.mxu0 0.0
    %124 = vmatprep.subr.mxu0 0.0
    %125 = vmatpush1.msra.mxu0 0.0
    %126 = vmatprep.subr.mxu0 0.0
    %127 = vmatpush1.msra.mxu0 0.0
    %128 = vmatprep.subr.mxu0 0.0
    %129 = vmatpush1.msra.mxu0 0.0
    %130 = vmatprep.subr.mxu0 0.0
    %131 = vmatpush1.msra.mxu0 0.0
    %132 = vmatprep.subr.mxu0 0.0
    %133 = vmatpush1.msra.mxu0 0.0
    %134 = vmatprep.subr.mxu0 0.0
    %135 = vmatpush1.msra.mxu0 0.0
    %136 = vmatprep.subr.mxu0 0.0
    %137 = vmatpush1.msra.mxu0 0.0
    %138 = vmatprep.mubr.f32.mxu0 0.0
    %139 = vmatmul.mubr.f32.gmra.mrb[0].mxu0 %v72
    %v140 = vpop.f32.mrb[0].mxu0
    %v141 = vadd.f32 0.0, %v140
    %v142 = vpop.f32.mrb[0].mxu0
    %143 = vdwg.mxu0
    %144 = vmatprep.subr.mxu0 0.0
    %145 = vmatpush1.msra.mxu0 %v64
    %146 = vmatprep.subr.mxu0 0.0
    %147 = vmatpush1.msra.mxu0 0.0
    %148 = vmatprep.subr.mxu0 0.0
    %149 = vmatpush1.msra.mxu0 0.0
    %150 = vmatprep.subr.mxu0 0.0
    %151 = vmatpush1.msra.mxu0 0.0
    %152 = vmatprep.subr.mxu0 0.0
    %153 = vmatpush1.msra.mxu0 0.0
    %154 = vmatprep.subr.mxu0 0.0
    %155 = vmatpush1.msra.mxu0 0.0
    %156 = vmatprep.subr.mxu0 0.0
    %157 = vmatpush1.msra.mxu0 0.0
    %158 = vmatprep.subr.mxu0 0.0
    %159 = vmatpush1.msra.mxu0 0.0
    %160 = vmatprep.subr.mxu0 0.0
    %161 = vmatpush1.msra.mxu0 0.0
    %162 = vmatprep.subr.mxu0 0.0
    %163 = vmatpush1.msra.mxu0 0.0
    %164 = vmatprep.subr.mxu0 0.0
    %165 = vmatpush1.msra.mxu0 0.0
    %166 = vmatprep.subr.mxu0 0.0
    %167 = vmatpush1.msra.mxu0 0.0
    %168 = vmatprep.subr.mxu0 0.0
    %169 = vmatpush1.msra.mxu0 0.0
    %170 = vmatprep.subr.mxu0 0.0
    %171 = vmatpush1.msra.mxu0 0.0
    %172 = vmatprep.subr.mxu0 0.0
    %173 = vmatpush1.msra.mxu0 0.0
    %174 = vmatprep.subr.mxu0 0.0
    %175 = vmatpush1.msra.mxu0 0.0
    %176 = vmatprep.subr.mxu0 0.0
    %177 = vmatpush1.msra.mxu0 0.0
    %178 = vmatprep.subr.mxu0 0.0
    %179 = vmatpush1.msra.mxu0 0.0
    %180 = vmatprep.subr.mxu0 0.0
    %181 = vmatpush1.msra.mxu0 0.0
    %182 = vmatprep.subr.mxu0 0.0
    %183 = vmatpush1.msra.mxu0 0.0
    %184 = vmatprep.subr.mxu0 0.0
    %185 = vmatpush1.msra.mxu0 0.0
    %186 = vmatprep.subr.mxu0 0.0
    %187 = vmatpush1.msra.mxu0 0.0
    %188 = vmatprep.subr.mxu0 0.0
    %189 = vmatpush1.msra.mxu0 0.0
    %190 = vmatprep.subr.mxu0 0.0
    %191 = vmatpush1.msra.mxu0 0.0
    %192 = vmatprep.subr.mxu0 0.0
    %193 = vmatpush1.msra.mxu0 0.0
    %194 = vmatprep.subr.mxu0 0.0
    %195 = vmatpush1.msra.mxu0 0.0
    %196 = vmatprep.subr.mxu0 0.0
    %197 = vmatpush1.msra.mxu0 0.0
    %198 = vmatprep.subr.mxu0 0.0
    %199 = vmatpush1.msra.mxu0 0.0
    %200 = vmatprep.subr.mxu0 0.0
    %201 = vmatpush1.msra.mxu0 0.0
    %202 = vmatprep.subr.mxu0 0.0
    %203 = vmatpush1.msra.mxu0 0.0
    %204 = vmatprep.subr.mxu0 0.0
    %205 = vmatpush1.msra.mxu0 0.0
    %206 = vmatprep.subr.mxu0 0.0
    %207 = vmatpush1.msra.mxu0 0.0
    %208 = vmatprep.mubr.f32.mxu0 0.0
    %209 = vmatmul.mubr.f32.gmra.mrb[0].mxu0 %v72
    %v210 = vpop.f32.mrb[0].mxu0
    %v211 = vadd.f32 0.0, %v210
    %v212 = vpop.f32.mrb[0].mxu0
    %213 = vdwg.mxu0
    %v214 = vmul.f32 %v141, %v63
    %v215 = vmul.f32 %v211, %v64
    %v216 = vadd.f32 %v214, 1.0
    %v217 = vadd.f32 %v215, 1.0
    %v218 = vcvt.f32.s32.to.zero.pseudo %v216
    %v219 = vcvt.f32.s32.to.zero.pseudo %v217
    %220 = vset.pattern.permute.xlu0 0
    %221 = vperm.xlu0 %220, %v218
    %v222 = vpop.permute.xlu0 %221
    %223 = vset.pattern.permute.xlu0 0
    %224 = vperm.xlu0 %223, %v219
    %v225 = vpop.permute.xlu0 %224
    %vm226 = vcmp.eq.s32.totalorder %v222, %v31
    %vm227 = vcmp.eq.s32.totalorder %v225, %v31
    %v228 = vsel %vm226, 1, 0
    %v229 = vsel %vm227, 1, 0
    %v230 = vcvt.s32.f32 %v228
    %v231 = vcvt.s32.f32 %v229
    %v232 = vld [vmem:[%s3] sm:$0xff]
    %v233 = vld [vmem:[%s3 + $0x8] sm:$0xff]
    %v234 = vld [vmem:[%s3 + $0x10] sm:$0xff]
    %v235 = vld [vmem:[%s3 + $0x18] sm:$0xff]
    %v236 = vld [vmem:[%s3 + $0x20] sm:$0xff]
    %vm237 = vcmask 326656
    %v239 = vsel %vm237, %v230, 0
    %v242 = vsel %vm237, %v231, 0
    %244 = vmatprep.subr.mxu0 0.0
    %245 = vmatpush1.msra.mxu0 %v232
    %246 = vmatprep.subr.mxu0 0.0
    %247 = vmatpush1.msra.mxu0 %v233
    %248 = vmatprep.subr.mxu0 0.0
    %249 = vmatpush1.msra.mxu0 %v234
    %250 = vmatprep.subr.mxu0 0.0
    %251 = vmatpush1.msra.mxu0 %v235
    %252 = vmatprep.subr.mxu0 0.0
    %253 = vmatpush1.msra.mxu0 %v236
    %254 = vmatprep.subr.mxu0 0.0
    %255 = vmatpush1.msra.mxu0 0.0
    %256 = vmatprep.subr.mxu0 0.0
    %257 = vmatpush1.msra.mxu0 0.0
    %258 = vmatprep.subr.mxu0 0.0
    %259 = vmatpush1.msra.mxu0 0.0
    %260 = vmatprep.subr.mxu0 0.0
    %261 = vmatpush1.msra.mxu0 0.0
    %262 = vmatprep.subr.mxu0 0.0
    %263 = vmatpush1.msra.mxu0 0.0
    %264 = vmatprep.subr.mxu0 0.0
    %265 = vmatpush1.msra.mxu0 0.0
    %266 = vmatprep.subr.mxu0 0.0
    %267 = vmatpush1.msra.mxu0 0.0
    %268 = vmatprep.subr.mxu0 0.0
    %269 = vmatpush1.msra.mxu0 0.0
    %270 = vmatprep.subr.mxu0 0.0
    %271 = vmatpush1.msra.mxu0 0.0
    %272 = vmatprep.subr.mxu0 0.0
    %273 = vmatpush1.msra.mxu0 0.0
    %274 = vmatprep.subr.mxu0 0.0
    %275 = vmatpush1.msra.mxu0 0.0
    %276 = vmatprep.subr.mxu0 0.0
    %277 = vmatpush1.msra.mxu0 0.0
    %278 = vmatprep.subr.mxu0 0.0
    %279 = vmatpush1.msra.mxu0 0.0
    %280 = vmatprep.subr.mxu0 0.0
    %281 = vmatpush1.msra.mxu0 0.0
    %282 = vmatprep.subr.mxu0 0.0
    %283 = vmatpush1.msra.mxu0 0.0
    %284 = vmatprep.subr.mxu0 0.0
    %285 = vmatpush1.msra.mxu0 0.0
    %286 = vmatprep.subr.mxu0 0.0
    %287 = vmatpush1.msra.mxu0 0.0
    %288 = vmatprep.subr.mxu0 0.0
    %289 = vmatpush1.msra.mxu0 0.0
    %290 = vmatprep.subr.mxu0 0.0
    %291 = vmatpush1.msra.mxu0 0.0
    %292 = vmatprep.subr.mxu0 0.0
    %293 = vmatpush1.msra.mxu0 0.0
    %294 = vmatprep.subr.mxu0 0.0
    %295 = vmatpush1.msra.mxu0 0.0
    %296 = vmatprep.subr.mxu0 0.0
    %297 = vmatpush1.msra.mxu0 0.0
    %298 = vmatprep.subr.mxu0 0.0
    %299 = vmatpush1.msra.mxu0 0.0
    %300 = vmatprep.subr.mxu0 0.0
    %301 = vmatpush1.msra.mxu0 0.0
    %302 = vmatprep.subr.mxu0 0.0
    %303 = vmatpush1.msra.mxu0 0.0
    %304 = vmatprep.subr.mxu0 0.0
    %305 = vmatpush1.msra.mxu0 0.0
    %306 = vmatprep.subr.mxu0 0.0
    %307 = vmatpush1.msra.mxu0 0.0
    %308 = vmatprep.mubr.f32.mxu0 0.0
    %309 = vmatmul.mubr.f32.gmra.mrb[0].mxu0 %v239
    %v310 = vpop.f32.mrb[0].mxu0
    %v311 = vadd.f32 0.0, %v310
    %v312 = vpop.f32.mrb[0].mxu0
    %313 = vmatprep.mubr.f32.mxu0 0.0
    %314 = vmatmul.mubr.f32.gmra.mrb[0].mxu0 %v242
    %v315 = vpop.f32.mrb[0].mxu0
    %v316 = vadd.f32 0.0, %v315
    %v317 = vpop.f32.mrb[0].mxu0
    %318 = vdwg.mxu0
    %vm319 = vcmask 982016
    %v321 = vsel %vm319, %v42, 0
    %v324 = vsel %vm319, %v43, 0
    %326 = vmatprep.subr.mxu0 0.0
    %327 = vmatpush1.msra.mxu0 %v44
    %328 = vmatprep.subr.mxu0 0.0
    %329 = vmatpush1.msra.mxu0 %v45
    %330 = vmatprep.subr.mxu0 0.0
    %331 = vmatpush1.msra.mxu0 %v46
    %332 = vmatprep.subr.mxu0 0.0
    %333 = vmatpush1.msra.mxu0 %v47
    %334 = vmatprep.subr.mxu0 0.0
    %335 = vmatpush1.msra.mxu0 %v48
    %336 = vmatprep.subr.mxu0 0.0
    %337 = vmatpush1.msra.mxu0 %v49
    %338 = vmatprep.subr.mxu0 0.0
    %339 = vmatpush1.msra.mxu0 %v50
    %340 = vmatprep.subr.mxu0 0.0
    %341 = vmatpush1.msra.mxu0 %v51
    %342 = vmatprep.subr.mxu0 0.0
    %343 = vmatpush1.msra.mxu0 %v52
    %344 = vmatprep.subr.mxu0 0.0
    %345 = vmatpush1.msra.mxu0 %v53
    %346 = vmatprep.subr.mxu0 0.0
    %347 = vmatpush1.msra.mxu0 %v54
    %348 = vmatprep.subr.mxu0 0.0
    %349 = vmatpush1.msra.mxu0 %v55
    %350 = vmatprep.subr.mxu0 0.0
    %351 = vmatpush1.msra.mxu0 %v56
    %352 = vmatprep.subr.mxu0 0.0
    %353 = vmatpush1.msra.mxu0 %v57
    %354 = vmatprep.subr.mxu0 0.0
    %355 = vmatpush1.msra.mxu0 %v58
    %356 = vmatprep.subr.mxu0 0.0
    %357 = vmatpush1.msra.mxu0 0.0
    %358 = vmatprep.subr.mxu0 0.0
    %359 = vmatpush1.msra.mxu0 0.0
    %360 = vmatprep.subr.mxu0 0.0
    %361 = vmatpush1.msra.mxu0 0.0
    %362 = vmatprep.subr.mxu0 0.0
    %363 = vmatpush1.msra.mxu0 0.0
    %364 = vmatprep.subr.mxu0 0.0
    %365 = vmatpush1.msra.mxu0 0.0
    %366 = vmatprep.subr.mxu0 0.0
    %367 = vmatpush1.msra.mxu0 0.0
    %368 = vmatprep.subr.mxu0 0.0
    %369 = vmatpush1.msra.mxu0 0.0
    %370 = vmatprep.subr.mxu0 0.0
    %371 = vmatpush1.msra.mxu0 0.0
    %372 = vmatprep.subr.mxu0 0.0
    %373 = vmatpush1.msra.mxu0 0.0
    %374 = vmatprep.subr.mxu0 0.0
    %375 = vmatpush1.msra.mxu0 0.0
    %376 = vmatprep.subr.mxu0 0.0
    %377 = vmatpush1.msra.mxu0 0.0
    %378 = vmatprep.subr.mxu0 0.0
    %379 = vmatpush1.msra.mxu0 0.0
    %380 = vmatprep.subr.mxu0 0.0
    %381 = vmatpush1.msra.mxu0 0.0
    %382 = vmatprep.subr.mxu0 0.0
    %383 = vmatpush1.msra.mxu0 0.0
    %384 = vmatprep.subr.mxu0 0.0
    %385 = vmatpush1.msra.mxu0 0.0
    %386 = vmatprep.subr.mxu0 0.0
    %387 = vmatpush1.msra.mxu0 0.0
    %388 = vmatprep.subr.mxu0 0.0
    %389 = vmatpush1.msra.mxu0 0.0
    %390 = vmatprep.mubr.f32.mxu0 0.0
    %391 = vmatmul.mubr.f32.gmra.mrb[0].mxu0 %v321
    %v392 = vpop.f32.mrb[0].mxu0
    %v393 = vadd.f32 %v311, %v392
    %v394 = vpop.f32.mrb[0].mxu0
    %395 = vmatprep.mubr.f32.mxu0 0.0
    %396 = vmatmul.mubr.f32.gmra.mrb[0].mxu0 %v324
    %v397 = vpop.f32.mrb[0].mxu0
    %v398 = vadd.f32 %v316, %v397
    %v399 = vpop.f32.mrb[0].mxu0
    %400 = vdwg.mxu0
    %v401 = vld [vmem:[%s6 + $0x2] sm:$0x1]
    %v402 = vlaneseq
    %v403 = vshrl.u32 %v402, 7
    %v404 = vsub.s32 0, %v403
    %v405 = vrot.slane %v401, %v404
    %v406 = vadd.f32 %v393, %v405
    %v407 = vadd.f32 %v398, %v405
    %v408 = vld [vmem:[%s6] sm:$0x1]
    %v409 = vld [vmem:[%s6 + $0x1] sm:$0x1]
    %vm410 = vcmask 261120
    %v411 = vsel %vm410, %v406, 0.0
    %412 = vadd.xlane.f32.xlu0 %v411
    %v413 = vpop.xlane.xlu0 %412
    %v414 = vsel %vm410, %v407, 0.0
    %415 = vadd.xlane.f32.xlu0 %v414
    %v416 = vpop.xlane.xlu0 %415
    %v417 = vrcp.pop 32.0
    %v418 = vmul.f32 %v413, %v417
    %v419 = vmul.f32 %v416, %v417
    %v420 = vsub.f32 %v406, %v418
    %v421 = vsub.f32 %v407, %v419
    %v422 = vmul.f32 %v420, %v420
    %v423 = vmul.f32 %v421, %v421
    %v424 = vsel %vm410, %v422, 0.0
    %425 = vadd.xlane.f32.xlu0 %v424
    %v426 = vpop.xlane.xlu0 %425
    %v427 = vsel %vm410, %v423, 0.0
    %428 = vadd.xlane.f32.xlu0 %v427
    %v429 = vpop.xlane.xlu0 %428
    %v430 = vmul.f32 %v426, %v417
    %v431 = vmul.f32 %v429, %v417
    %v432 = vadd.f32 %v430, 1e-05
    %v433 = vadd.f32 %v431, 1e-05
    %v434 = vrsqrt.pop %v432
    %v435 = vrsqrt.pop %v433
    %v436 = vmul.f32 %v420, %v434
    %v437 = vmul.f32 %v421, %v435
    %v438 = vlaneseq
    %v439 = vshrl.u32 %v438, 7
    %v440 = vsub.s32 0, %v439
    %v441 = vrot.slane %v408, %v440
    %v442 = vmul.f32 %v436, %v441
    %v443 = vmul.f32 %v437, %v441
    %v444 = vlaneseq
    %v445 = vshrl.u32 %v444, 7
    %v446 = vsub.s32 0, %v445
    %v447 = vrot.slane %v409, %v446
    %v448 = vadd.f32 %v442, %v447
    %v449 = vadd.f32 %v443, %v447
    %v450 = vld [vmem:[%s1] sm:$0x1]
    %v451 = vld [vmem:[%s1 + $0x1] sm:$0x1]
    %v452 = vsub.f32 1.0, %v450
    %v453 = vsub.f32 1.0, %v451
    %v454 = vmul.f32 %v452, -1e+09
    %v455 = vmul.f32 %v453, -1e+09
    %v458 = vlaneseq
    %v459 = vshrl.u32 %v458, 7
    %v460 = vsub.s32 0, %v459
    %v461 = vrot.slane %v454, %v460
    %v462 = vlaneseq
    %v463 = vshrl.u32 %v462, 7
    %v464 = vsub.s32 0, %v463
    %v465 = vrot.slane %v455, %v464
    %v468 = vld [vmem:[%s4] sm:$0xf]
    %v469 = vld [vmem:[%s4 + $0x8] sm:$0xf]
    %v470 = vld [vmem:[%s4 + $0x10] sm:$0xf]
    %v471 = vld [vmem:[%s4 + $0x18] sm:$0xf]
    %v472 = vpack.c.bf16 %v449, %v448
    %v473 = vld [vmem:[%s6 + $0x4] sm:$0x1]
    %v474 = vlaneseq
    %v475 = vshrl.u32 %v474, 7
    %v476 = vsub.s32 0, %v475
    %v477 = vrot.slane %v473, %v476
    %v482 = vunpack.c.l.b16 %v468
    %v483 = vunpack.c.l.b16 %v469
    %v484 = vunpack.c.l.b16 %v470
    %v485 = vunpack.c.l.b16 %v471
    %v486 = vpack.c.b16 %v483, %v482
    %v487 = vpack.c.b16 %v485, %v484
    %v491 = vsel %vm410, %v472, 0
    %493 = vmatprep.subr.bf16.mxu0 0
    %494 = vmatpush1.bf16.msra.mxu0 %v486
    %495 = vmatprep.subr.bf16.mxu0 0
    %496 = vmatpush1.bf16.msra.mxu0 %v487
    %497 = vmatprep.subr.bf16.mxu0 0
    %498 = vmatpush1.bf16.msra.mxu0 0
    %499 = vmatprep.subr.bf16.mxu0 0
    %500 = vmatpush1.bf16.msra.mxu0 0
    %501 = vmatprep.subr.bf16.mxu0 0
    %502 = vmatpush1.bf16.msra.mxu0 0
    %503 = vmatprep.subr.bf16.mxu0 0
    %504 = vmatpush1.bf16.msra.mxu0 0
    %505 = vmatprep.subr.bf16.mxu0 0
    %506 = vmatpush1.bf16.msra.mxu0 0
    %507 = vmatprep.subr.bf16.mxu0 0
    %508 = vmatpush1.bf16.msra.mxu0 0
    %509 = vmatprep.subr.bf16.mxu0 0
    %510 = vmatpush1.bf16.msra.mxu0 0
    %511 = vmatprep.subr.bf16.mxu0 0
    %512 = vmatpush1.bf16.msra.mxu0 0
    %513 = vmatprep.subr.bf16.mxu0 0
    %514 = vmatpush1.bf16.msra.mxu0 0
    %515 = vmatprep.subr.bf16.mxu0 0
    %516 = vmatpush1.bf16.msra.mxu0 0
    %517 = vmatprep.subr.bf16.mxu0 0
    %518 = vmatpush1.bf16.msra.mxu0 0
    %519 = vmatprep.subr.bf16.mxu0 0
    %520 = vmatpush1.bf16.msra.mxu0 0
    %521 = vmatprep.subr.bf16.mxu0 0
    %522 = vmatpush1.bf16.msra.mxu0 0
    %523 = vmatprep.subr.bf16.mxu0 0
    %524 = vmatpush1.bf16.msra.mxu0 0
    %525 = vmatprep.mubr.bf16.mxu0 0
    %526 = vmatmul.mubr.bf16.gmra.mrb[0].mxu0 %v491
    %v527 = vpop.f32.mrb[0].mxu0
    %v528 = vadd.f32 %v477, %v527
    %v529 = vpop.f32.mrb[0].mxu0
    %v530 = vpop.f32.mrb[0].mxu0
    %v531 = vadd.f32 %v477, %v530
    %v532 = vpop.f32.mrb[0].mxu0
    %533 = vdwg.mxu0
    %v534 = vpack.c.bf16 %v531, %v528
    %v536 = vunpack.c.l.b16 %v534
    %v537 = vunpack.c.h.b16 %v534
    %v538 = vpack.c.b16 %v536, %v536
    %v539 = vpack.c.b16 %v537, %v537
    %540 = vrot.lane.b32.xlu0 %v538, 96
    %v541 = vpop.permute.xlu0 %540
    %v543 = vsel %vm70, %v538, 0
    %v546 = vsel %vm70, %v541, 0
    %548 = vmatprep.subr.bf16.mxu0 0
    %549 = vmatpush1.bf16.xpose.msra.mxu0 %v546
    %550 = vmatprep.subr.bf16.mxu0 0
    %551 = vmatpush1.bf16.xpose.msra.mxu0 0
    %552 = vmatprep.subr.bf16.mxu0 0
    %553 = vmatpush1.bf16.xpose.msra.mxu0 0
    %554 = vmatprep.subr.bf16.mxu0 0
    %555 = vmatpush1.bf16.xpose.msra.mxu0 0
    %556 = vmatprep.subr.bf16.mxu0 0
    %557 = vmatpush1.bf16.xpose.msra.mxu0 0
    %558 = vmatprep.subr.bf16.mxu0 0
    %559 = vmatpush1.bf16.xpose.msra.mxu0 0
    %560 = vmatprep.subr.bf16.mxu0 0
    %561 = vmatpush1.bf16.xpose.msra.mxu0 0
    %562 = vmatprep.subr.bf16.mxu0 0
    %563 = vmatpush1.bf16.xpose.msra.mxu0 0
    %564 = vmatprep.subr.bf16.mxu0 0
    %565 = vmatpush1.bf16.xpose.msra.mxu0 0
    %566 = vmatprep.subr.bf16.mxu0 0
    %567 = vmatpush1.bf16.xpose.msra.mxu0 0
    %568 = vmatprep.subr.bf16.mxu0 0
    %569 = vmatpush1.bf16.xpose.msra.mxu0 0
    %570 = vmatprep.subr.bf16.mxu0 0
    %571 = vmatpush1.bf16.xpose.msra.mxu0 0
    %572 = vmatprep.subr.bf16.mxu0 0
    %573 = vmatpush1.bf16.xpose.msra.mxu0 0
    %574 = vmatprep.subr.bf16.mxu0 0
    %575 = vmatpush1.bf16.xpose.msra.mxu0 0
    %576 = vmatprep.subr.bf16.mxu0 0
    %577 = vmatpush1.bf16.xpose.msra.mxu0 0
    %578 = vmatprep.subr.bf16.mxu0 0
    %579 = vmatpush1.bf16.xpose.msra.mxu0 0
    %580 = vmatprep.mubr.bf16.mxu0 0
    %581 = vmatmul.mubr.bf16.gmra.mrb[0].mxu0 %v543
    %v582 = vpop.f32.mrb[0].mxu0
    %v583 = vadd.f32 0.0, %v582
    %v584 = vpop.f32.mrb[0].mxu0
    %v585 = vpop.f32.mrb[0].mxu0
    %v586 = vpop.f32.mrb[0].mxu0
    %587 = vdwg.mxu0
    %588 = vrot.lane.b32.xlu0 %v539, 96
    %v589 = vpop.permute.xlu0 %588
    %v591 = vsel %vm70, %v539, 0
    %v594 = vsel %vm70, %v589, 0
    %596 = vmatprep.subr.bf16.mxu0 0
    %597 = vmatpush1.bf16.xpose.msra.mxu0 %v594
    %598 = vmatprep.subr.bf16.mxu0 0
    %599 = vmatpush1.bf16.xpose.msra.mxu0 0
    %600 = vmatprep.subr.bf16.mxu0 0
    %601 = vmatpush1.bf16.xpose.msra.mxu0 0
    %602 = vmatprep.subr.bf16.mxu0 0
    %603 = vmatpush1.bf16.xpose.msra.mxu0 0
    %604 = vmatprep.subr.bf16.mxu0 0
    %605 = vmatpush1.bf16.xpose.msra.mxu0 0
    %606 = vmatprep.subr.bf16.mxu0 0
    %607 = vmatpush1.bf16.xpose.msra.mxu0 0
    %608 = vmatprep.subr.bf16.mxu0 0
    %609 = vmatpush1.bf16.xpose.msra.mxu0 0
    %610 = vmatprep.subr.bf16.mxu0 0
    %611 = vmatpush1.bf16.xpose.msra.mxu0 0
    %612 = vmatprep.subr.bf16.mxu0 0
    %613 = vmatpush1.bf16.xpose.msra.mxu0 0
    %614 = vmatprep.subr.bf16.mxu0 0
    %615 = vmatpush1.bf16.xpose.msra.mxu0 0
    %616 = vmatprep.subr.bf16.mxu0 0
    %617 = vmatpush1.bf16.xpose.msra.mxu0 0
    %618 = vmatprep.subr.bf16.mxu0 0
    %619 = vmatpush1.bf16.xpose.msra.mxu0 0
    %620 = vmatprep.subr.bf16.mxu0 0
    %621 = vmatpush1.bf16.xpose.msra.mxu0 0
    %622 = vmatprep.subr.bf16.mxu0 0
    %623 = vmatpush1.bf16.xpose.msra.mxu0 0
    %624 = vmatprep.subr.bf16.mxu0 0
    %625 = vmatpush1.bf16.xpose.msra.mxu0 0
    %626 = vmatprep.subr.bf16.mxu0 0
    %627 = vmatpush1.bf16.xpose.msra.mxu0 0
    %628 = vmatprep.mubr.bf16.mxu0 0
    %629 = vmatmul.mubr.bf16.gmra.mrb[0].mxu0 %v591
    %v630 = vpop.f32.mrb[0].mxu0
    %v631 = vadd.f32 0.0, %v630
    %v632 = vpop.f32.mrb[0].mxu0
    %v633 = vpop.f32.mrb[0].mxu0
    %v634 = vpop.f32.mrb[0].mxu0
    %635 = vdwg.mxu0
    %v636 = vmul.f32 %v583, 0.35355338
    %v637 = vmul.f32 %v631, 0.35355338
    %v638 = vadd.f32 %v636, %v461
    %v639 = vadd.f32 %v637, %v465
    %v640 = vsel %vm70, %v638, -inf
    %641 = vmax.xlane.f32.xlu0 %v640
    %v642 = vpop.xlane.xlu0 %641
    %v643 = vsel %vm70, %v639, -inf
    %644 = vmax.xlane.f32.xlu0 %v643
    %v645 = vpop.xlane.xlu0 %644
    %v646 = vsub.f32 %v638, %v642
    %v647 = vsub.f32 %v639, %v645
    %v648 = vmul.f32 %v646, 1.442695
    %v649 = vpow.pop %v648
    %v650 = vmul.f32 %v647, 1.442695
    %v651 = vpow.pop %v650
    %v652 = vsel %vm70, %v649, 0.0
    %653 = vadd.xlane.f32.xlu0 %v652
    %v654 = vpop.xlane.xlu0 %653
    %v655 = vsel %vm70, %v651, 0.0
    %656 = vadd.xlane.f32.xlu0 %v655
    %v657 = vpop.xlane.xlu0 %656
    %v658 = vrcp.pop %v654
    %v659 = vrcp.pop %v657
    %v660 = vmul.f32 %v649, %v658
    %v661 = vmul.f32 %v651, %v659
    %v662 = vpack.c.bf16 %v660, %v660
    %v663 = vpack.c.bf16 %v661, %v661
    %664 = vrot.lane.b32.xlu0 %v538, 64
    %v665 = vpop.permute.xlu0 %664
    %v667 = vsel %vm70, %v662, 0
    %vm669 = vcmask 1043456
    %v671 = vsel %vm669, %v665, 0
    %673 = vmatprep.subr.bf16.mxu0 0
    %674 = vmatpush1.bf16.msra.mxu0 %v671
    %675 = vmatprep.subr.bf16.mxu0 0
    %676 = vmatpush1.bf16.msra.mxu0 0
    %677 = vmatprep.subr.bf16.mxu0 0
    %678 = vmatpush1.bf16.msra.mxu0 0
    %679 = vmatprep.subr.bf16.mxu0 0
    %680 = vmatpush1.bf16.msra.mxu0 0
    %681 = vmatprep.subr.bf16.mxu0 0
    %682 = vmatpush1.bf16.msra.mxu0 0
    %683 = vmatprep.subr.bf16.mxu0 0
    %684 = vmatpush1.bf16.msra.mxu0 0
    %685 = vmatprep.subr.bf16.mxu0 0
    %686 = vmatpush1.bf16.msra.mxu0 0
    %687 = vmatprep.subr.bf16.mxu0 0
    %688 = vmatpush1.bf16.msra.mxu0 0
    %689 = vmatprep.subr.bf16.mxu0 0
    %690 = vmatpush1.bf16.msra.mxu0 0
    %691 = vmatprep.subr.bf16.mxu0 0
    %692 = vmatpush1.bf16.msra.mxu0 0
    %693 = vmatprep.subr.bf16.mxu0 0
    %694 = vmatpush1.bf16.msra.mxu0 0
    %695 = vmatprep.subr.bf16.mxu0 0
    %696 = vmatpush1.bf16.msra.mxu0 0
    %697 = vmatprep.subr.bf16.mxu0 0
    %698 = vmatpush1.bf16.msra.mxu0 0
    %699 = vmatprep.subr.bf16.mxu0 0
    %700 = vmatpush1.bf16.msra.mxu0 0
    %701 = vmatprep.subr.bf16.mxu0 0
    %702 = vmatpush1.bf16.msra.mxu0 0
    %703 = vmatprep.subr.bf16.mxu0 0
    %704 = vmatpush1.bf16.msra.mxu0 0
    %705 = vmatprep.mubr.bf16.mxu0 0
    %706 = vmatmul.mubr.bf16.gmra.mrb[0].mxu0 %v667
    %v707 = vpop.f32.mrb[0].mxu0
    %v708 = vadd.f32 0.0, %v707
    %v709 = vpop.f32.mrb[0].mxu0
    %v710 = vpop.f32.mrb[0].mxu0
    %v711 = vpop.f32.mrb[0].mxu0
    %712 = vdwg.mxu0
    %713 = vrot.lane.b32.xlu0 %v539, 64
    %v714 = vpop.permute.xlu0 %713
    %v716 = vsel %vm70, %v663, 0
    %v719 = vsel %vm669, %v714, 0
    %721 = vmatprep.subr.bf16.mxu0 0
    %722 = vmatpush1.bf16.msra.mxu0 %v719
    %723 = vmatprep.subr.bf16.mxu0 0
    %724 = vmatpush1.bf16.msra.mxu0 0
    %725 = vmatprep.subr.bf16.mxu0 0
    %726 = vmatpush1.bf16.msra.mxu0 0
    %727 = vmatprep.subr.bf16.mxu0 0
    %728 = vmatpush1.bf16.msra.mxu0 0
    %729 = vmatprep.subr.bf16.mxu0 0
    %730 = vmatpush1.bf16.msra.mxu0 0
    %731 = vmatprep.subr.bf16.mxu0 0
    %732 = vmatpush1.bf16.msra.mxu0 0
    %733 = vmatprep.subr.bf16.mxu0 0
    %734 = vmatpush1.bf16.msra.mxu0 0
    %735 = vmatprep.subr.bf16.mxu0 0
    %736 = vmatpush1.bf16.msra.mxu0 0
    %737 = vmatprep.subr.bf16.mxu0 0
    %738 = vmatpush1.bf16.msra.mxu0 0
    %739 = vmatprep.subr.bf16.mxu0 0
    %740 = vmatpush1.bf16.msra.mxu0 0
    %741 = vmatprep.subr.bf16.mxu0 0
    %742 = vmatpush1.bf16.msra.mxu0 0
    %743 = vmatprep.subr.bf16.mxu0 0
    %744 = vmatpush1.bf16.msra.mxu0 0
    %745 = vmatprep.subr.bf16.mxu0 0
    %746 = vmatpush1.bf16.msra.mxu0 0
    %747 = vmatprep.subr.bf16.mxu0 0
    %748 = vmatpush1.bf16.msra.mxu0 0
    %749 = vmatprep.subr.bf16.mxu0 0
    %750 = vmatpush1.bf16.msra.mxu0 0
    %751 = vmatprep.subr.bf16.mxu0 0
    %752 = vmatpush1.bf16.msra.mxu0 0
    %753 = vmatprep.mubr.bf16.mxu0 0
    %754 = vmatmul.mubr.bf16.gmra.mrb[0].mxu0 %v716
    %v755 = vpop.f32.mrb[0].mxu0
    %v756 = vadd.f32 0.0, %v755
    %v757 = vpop.f32.mrb[0].mxu0
    %v758 = vpop.f32.mrb[0].mxu0
    %v759 = vpop.f32.mrb[0].mxu0
    %760 = vdwg.mxu0
    %761 = vrot.lane.b32.xlu0 %v538, 120
    %v762 = vpop.permute.xlu0 %761
    %763 = vrot.lane.b32.xlu0 %v538, 88
    %v764 = vpop.permute.xlu0 %763
    %v766 = vsel %vm70, %v762, 0
    %v769 = vsel %vm70, %v764, 0
    %771 = vmatprep.subr.bf16.mxu0 0
    %772 = vmatpush1.bf16.xpose.msra.mxu0 %v769
    %773 = vmatprep.subr.bf16.mxu0 0
    %774 = vmatpush1.bf16.xpose.msra.mxu0 0
    %775 = vmatprep.subr.bf16.mxu0 0
    %776 = vmatpush1.bf16.xpose.msra.mxu0 0
    %777 = vmatprep.subr.bf16.mxu0 0
    %778 = vmatpush1.bf16.xpose.msra.mxu0 0
    %779 = vmatprep.subr.bf16.mxu0 0
    %780 = vmatpush1.bf16.xpose.msra.mxu0 0
    %781 = vmatprep.subr.bf16.mxu0 0
    %782 = vmatpush1.bf16.xpose.msra.mxu0 0
    %783 = vmatprep.subr.bf16.mxu0 0
    %784 = vmatpush1.bf16.xpose.msra.mxu0 0
    %785 = vmatprep.subr.bf16.mxu0 0
    %786 = vmatpush1.bf16.xpose.msra.mxu0 0
    %787 = vmatprep.subr.bf16.mxu0 0
    %788 = vmatpush1.bf16.xpose.msra.mxu0 0
    %789 = vmatprep.subr.bf16.mxu0 0
    %790 = vmatpush1.bf16.xpose.msra.mxu0 0
    %791 = vmatprep.subr.bf16.mxu0 0
    %792 = vmatpush1.bf16.xpose.msra.mxu0 0
    %793 = vmatprep.subr.bf16.mxu0 0
    %794 = vmatpush1.bf16.xpose.msra.mxu0 0
    %795 = vmatprep.subr.bf16.mxu0 0
    %796 = vmatpush1.bf16.xpose.msra.mxu0 0
    %797 = vmatprep.subr.bf16.mxu0 0
    %798 = vmatpush1.bf16.xpose.msra.mxu0 0
    %799 = vmatprep.subr.bf16.mxu0 0
    %800 = vmatpush1.bf16.xpose.msra.mxu0 0
    %801 = vmatprep.subr.bf16.mxu0 0
    %802 = vmatpush1.bf16.xpose.msra.mxu0 0
    %803 = vmatprep.mubr.bf16.mxu0 0
    %804 = vmatmul.mubr.bf16.gmra.mrb[0].mxu0 %v766
    %v805 = vpop.f32.mrb[0].mxu0
    %v806 = vadd.f32 0.0, %v805
    %v807 = vpop.f32.mrb[0].mxu0
    %v808 = vpop.f32.mrb[0].mxu0
    %v809 = vpop.f32.mrb[0].mxu0
    %810 = vdwg.mxu0
    %811 = vrot.lane.b32.xlu0 %v539, 120
    %v812 = vpop.permute.xlu0 %811
    %813 = vrot.lane.b32.xlu0 %v539, 88
    %v814 = vpop.permute.xlu0 %813
    %v816 = vsel %vm70, %v812, 0
    %v819 = vsel %vm70, %v814, 0
    %821 = vmatprep.subr.bf16.mxu0 0
    %822 = vmatpush1.bf16.xpose.msra.mxu0 %v819
    %823 = vmatprep.subr.bf16.mxu0 0
    %824 = vmatpush1.bf16.xpose.msra.mxu0 0
    %825 = vmatprep.subr.bf16.mxu0 0
    %826 = vmatpush1.bf16.xpose.msra.mxu0 0
    %827 = vmatprep.subr.bf16.mxu0 0
    %828 = vmatpush1.bf16.xpose.msra.mxu0 0
    %829 = vmatprep.subr.bf16.mxu0 0
    %830 = vmatpush1.bf16.xpose.msra.mxu0 0
    %831 = vmatprep.subr.bf16.mxu0 0
    %832 = vmatpush1.bf16.xpose.msra.mxu0 0
    %833 = vmatprep.subr.bf16.mxu0 0
    %834 = vmatpush1.bf16.xpose.msra.mxu0 0
    %835 = vmatprep.subr.bf16.mxu0 0
    %836 = vmatpush1.bf16.xpose.msra.mxu0 0
    %837 = vmatprep.subr.bf16.mxu0 0
    %838 = vmatpush1.bf16.xpose.msra.mxu0 0
    %839 = vmatprep.subr.bf16.mxu0 0
    %840 = vmatpush1.bf16.xpose.msra.mxu0 0
    %841 = vmatprep.subr.bf16.mxu0 0
    %842 = vmatpush1.bf16.xpose.msra.mxu0 0
    %843 = vmatprep.subr.bf16.mxu0 0
    %844 = vmatpush1.bf16.xpose.msra.mxu0 0
    %845 = vmatprep.subr.bf16.mxu0 0
    %846 = vmatpush1.bf16.xpose.msra.mxu0 0
    %847 = vmatprep.subr.bf16.mxu0 0
    %848 = vmatpush1.bf16.xpose.msra.mxu0 0
    %849 = vmatprep.subr.bf16.mxu0 0
    %850 = vmatpush1.bf16.xpose.msra.mxu0 0
    %851 = vmatprep.subr.bf16.mxu0 0
    %852 = vmatpush1.bf16.xpose.msra.mxu0 0
    %853 = vmatprep.mubr.bf16.mxu0 0
    %854 = vmatmul.mubr.bf16.gmra.mrb[0].mxu0 %v816
    %v855 = vpop.f32.mrb[0].mxu0
    %v856 = vadd.f32 0.0, %v855
    %v857 = vpop.f32.mrb[0].mxu0
    %v858 = vpop.f32.mrb[0].mxu0
    %v859 = vpop.f32.mrb[0].mxu0
    %860 = vdwg.mxu0
    %v861 = vmul.f32 %v806, 0.35355338
    %v862 = vmul.f32 %v856, 0.35355338
    %v863 = vadd.f32 %v861, %v461
    %v864 = vadd.f32 %v862, %v465
    %v865 = vsel %vm70, %v863, -inf
    %866 = vmax.xlane.f32.xlu0 %v865
    %v867 = vpop.xlane.xlu0 %866
    %v868 = vsel %vm70, %v864, -inf
    %869 = vmax.xlane.f32.xlu0 %v868
    %v870 = vpop.xlane.xlu0 %869
    %v871 = vsub.f32 %v863, %v867
    %v872 = vsub.f32 %v864, %v870
    %v873 = vmul.f32 %v871, 1.442695
    %v874 = vpow.pop %v873
    %v875 = vmul.f32 %v872, 1.442695
    %v876 = vpow.pop %v875
    %v877 = vsel %vm70, %v874, 0.0
    %878 = vadd.xlane.f32.xlu0 %v877
    %v879 = vpop.xlane.xlu0 %878
    %v880 = vsel %vm70, %v876, 0.0
    %881 = vadd.xlane.f32.xlu0 %v880
    %v882 = vpop.xlane.xlu0 %881
    %v883 = vrcp.pop %v879
    %v884 = vrcp.pop %v882
    %v885 = vmul.f32 %v874, %v883
    %v886 = vmul.f32 %v876, %v884
    %v887 = vpack.c.bf16 %v885, %v885
    %v888 = vpack.c.bf16 %v886, %v886
    %889 = vrot.lane.b32.xlu0 %v538, 56
    %v890 = vpop.permute.xlu0 %889
    %v892 = vsel %vm70, %v887, 0
    %v895 = vsel %vm669, %v890, 0
    %897 = vmatprep.subr.bf16.mxu0 0
    %898 = vmatpush1.bf16.msra.mxu0 %v895
    %899 = vmatprep.subr.bf16.mxu0 0
    %900 = vmatpush1.bf16.msra.mxu0 0
    %901 = vmatprep.subr.bf16.mxu0 0
    %902 = vmatpush1.bf16.msra.mxu0 0
    %903 = vmatprep.subr.bf16.mxu0 0
    %904 = vmatpush1.bf16.msra.mxu0 0
    %905 = vmatprep.subr.bf16.mxu0 0
    %906 = vmatpush1.bf16.msra.mxu0 0
    %907 = vmatprep.subr.bf16.mxu0 0
    %908 = vmatpush1.bf16.msra.mxu0 0
    %909 = vmatprep.subr.bf16.mxu0 0
    %910 = vmatpush1.bf16.msra.mxu0 0
    %911 = vmatprep.subr.bf16.mxu0 0
    %912 = vmatpush1.bf16.msra.mxu0 0
    %913 = vmatprep.subr.bf16.mxu0 0
    %914 = vmatpush1.bf16.msra.mxu0 0
    %915 = vmatprep.subr.bf16.mxu0 0
    %916 = vmatpush1.bf16.msra.mxu0 0
    %917 = vmatprep.subr.bf16.mxu0 0
    %918 = vmatpush1.bf16.msra.mxu0 0
    %919 = vmatprep.subr.bf16.mxu0 0
    %920 = vmatpush1.bf16.msra.mxu0 0
    %921 = vmatprep.subr.bf16.mxu0 0
    %922 = vmatpush1.bf16.msra.mxu0 0
    %923 = vmatprep.subr.bf16.mxu0 0
    %924 = vmatpush1.bf16.msra.mxu0 0
    %925 = vmatprep.subr.bf16.mxu0 0
    %926 = vmatpush1.bf16.msra.mxu0 0
    %927 = vmatprep.subr.bf16.mxu0 0
    %928 = vmatpush1.bf16.msra.mxu0 0
    %929 = vmatprep.mubr.bf16.mxu0 0
    %930 = vmatmul.mubr.bf16.gmra.mrb[0].mxu0 %v892
    %v931 = vpop.f32.mrb[0].mxu0
    %v932 = vadd.f32 0.0, %v931
    %v933 = vpop.f32.mrb[0].mxu0
    %v934 = vpop.f32.mrb[0].mxu0
    %v935 = vpop.f32.mrb[0].mxu0
    %936 = vdwg.mxu0
    %937 = vrot.lane.b32.xlu0 %v539, 56
    %v938 = vpop.permute.xlu0 %937
    %v940 = vsel %vm70, %v888, 0
    %v943 = vsel %vm669, %v938, 0
    %945 = vmatprep.subr.bf16.mxu0 0
    %946 = vmatpush1.bf16.msra.mxu0 %v943
    %947 = vmatprep.subr.bf16.mxu0 0
    %948 = vmatpush1.bf16.msra.mxu0 0
    %949 = vmatprep.subr.bf16.mxu0 0
    %950 = vmatpush1.bf16.msra.mxu0 0
    %951 = vmatprep.subr.bf16.mxu0 0
    %952 = vmatpush1.bf16.msra.mxu0 0
    %953 = vmatprep.subr.bf16.mxu0 0
    %954 = vmatpush1.bf16.msra.mxu0 0
    %955 = vmatprep.subr.bf16.mxu0 0
    %956 = vmatpush1.bf16.msra.mxu0 0
    %957 = vmatprep.subr.bf16.mxu0 0
    %958 = vmatpush1.bf16.msra.mxu0 0
    %959 = vmatprep.subr.bf16.mxu0 0
    %960 = vmatpush1.bf16.msra.mxu0 0
    %961 = vmatprep.subr.bf16.mxu0 0
    %962 = vmatpush1.bf16.msra.mxu0 0
    %963 = vmatprep.subr.bf16.mxu0 0
    %964 = vmatpush1.bf16.msra.mxu0 0
    %965 = vmatprep.subr.bf16.mxu0 0
    %966 = vmatpush1.bf16.msra.mxu0 0
    %967 = vmatprep.subr.bf16.mxu0 0
    %968 = vmatpush1.bf16.msra.mxu0 0
    %969 = vmatprep.subr.bf16.mxu0 0
    %970 = vmatpush1.bf16.msra.mxu0 0
    %971 = vmatprep.subr.bf16.mxu0 0
    %972 = vmatpush1.bf16.msra.mxu0 0
    %973 = vmatprep.subr.bf16.mxu0 0
    %974 = vmatpush1.bf16.msra.mxu0 0
    %975 = vmatprep.subr.bf16.mxu0 0
    %976 = vmatpush1.bf16.msra.mxu0 0
    %977 = vmatprep.mubr.bf16.mxu0 0
    %978 = vmatmul.mubr.bf16.gmra.mrb[0].mxu0 %v940
    %v979 = vpop.f32.mrb[0].mxu0
    %v980 = vadd.f32 0.0, %v979
    %v981 = vpop.f32.mrb[0].mxu0
    %v982 = vpop.f32.mrb[0].mxu0
    %v983 = vpop.f32.mrb[0].mxu0
    %984 = vdwg.mxu0
    %985 = vrot.lane.b32.xlu0 %v538, 112
    %v986 = vpop.permute.xlu0 %985
    %987 = vrot.lane.b32.xlu0 %v538, 80
    %v988 = vpop.permute.xlu0 %987
    %v990 = vsel %vm70, %v986, 0
    %v993 = vsel %vm70, %v988, 0
    %995 = vmatprep.subr.bf16.mxu0 0
    %996 = vmatpush1.bf16.xpose.msra.mxu0 %v993
    %997 = vmatprep.subr.bf16.mxu0 0
    %998 = vmatpush1.bf16.xpose.msra.mxu0 0
    %999 = vmatprep.subr.bf16.mxu0 0
    %1000 = vmatpush1.bf16.xpose.msra.mxu0 0
    %1001 = vmatprep.subr.bf16.mxu0 0
    %1002 = vmatpush1.bf16.xpose.msra.mxu0 0
    %1003 = vmatprep.subr.bf16.mxu0 0
    %1004 = vmatpush1.bf16.xpose.msra.mxu0 0
    %1005 = vmatprep.subr.bf16.mxu0 0
    %1006 = vmatpush1.bf16.xpose.msra.mxu0 0
    %1007 = vmatprep.subr.bf16.mxu0 0
    %1008 = vmatpush1.bf16.xpose.msra.mxu0 0
    %1009 = vmatprep.subr.bf16.mxu0 0
    %1010 = vmatpush1.bf16.xpose.msra.mxu0 0
    %1011 = vmatprep.subr.bf16.mxu0 0
    %1012 = vmatpush1.bf16.xpose.msra.mxu0 0
    %1013 = vmatprep.subr.bf16.mxu0 0
    %1014 = vmatpush1.bf16.xpose.msra.mxu0 0
    %1015 = vmatprep.subr.bf16.mxu0 0
    %1016 = vmatpush1.bf16.xpose.msra.mxu0 0
    %1017 = vmatprep.subr.bf16.mxu0 0
    %1018 = vmatpush1.bf16.xpose.msra.mxu0 0
    %1019 = vmatprep.subr.bf16.mxu0 0
    %1020 = vmatpush1.bf16.xpose.msra.mxu0 0
    %1021 = vmatprep.subr.bf16.mxu0 0
    %1022 = vmatpush1.bf16.xpose.msra.mxu0 0
    %1023 = vmatprep.subr.bf16.mxu0 0
    %1024 = vmatpush1.bf16.xpose.msra.mxu0 0
    %1025 = vmatprep.subr.bf16.mxu0 0
    %1026 = vmatpush1.bf16.xpose.msra.mxu0 0
    %1027 = vmatprep.mubr.bf16.mxu0 0
    %1028 = vmatmul.mubr.bf16.gmra.mrb[0].mxu0 %v990
    %v1029 = vpop.f32.mrb[0].mxu0
    %v1030 = vadd.f32 0.0, %v1029
    %v1031 = vpop.f32.mrb[0].mxu0
    %v1032 = vpop.f32.mrb[0].mxu0
    %v1033 = vpop.f32.mrb[0].mxu0
    %1034 = vdwg.mxu0
    %1035 = vrot.lane.b32.xlu0 %v539, 112
    %v1036 = vpop.permute.xlu0 %1035
    %1037 = vrot.lane.b32.xlu0 %v539, 80
    %v1038 = vpop.permute.xlu0 %1037
    %v1040 = vsel %vm70, %v1036, 0
    %v1043 = vsel %vm70, %v1038, 0
    %1045 = vmatprep.subr.bf16.mxu0 0
    %1046 = vmatpush1.bf16.xpose.msra.mxu0 %v1043
    %1047 = vmatprep.subr.bf16.mxu0 0
    %1048 = vmatpush1.bf16.xpose.msra.mxu0 0
    %1049 = vmatprep.subr.bf16.mxu0 0
    %1050 = vmatpush1.bf16.xpose.msra.mxu0 0
    %1051 = vmatprep.subr.bf16.mxu0 0
    %1052 = vmatpush1.bf16.xpose.msra.mxu0 0
    %1053 = vmatprep.subr.bf16.mxu0 0
    %1054 = vmatpush1.bf16.xpose.msra.mxu0 0
    %1055 = vmatprep.subr.bf16.mxu0 0
    %1056 = vmatpush1.bf16.xpose.msra.mxu0 0
    %1057 = vmatprep.subr.bf16.mxu0 0
    %1058 = vmatpush1.bf16.xpose.msra.mxu0 0
    %1059 = vmatprep.subr.bf16.mxu0 0
    %1060 = vmatpush1.bf16.xpose.msra.mxu0 0
    %1061 = vmatprep.subr.bf16.mxu0 0
    %1062 = vmatpush1.bf16.xpose.msra.mxu0 0
    %1063 = vmatprep.subr.bf16.mxu0 0
    %1064 = vmatpush1.bf16.xpose.msra.mxu0 0
    %1065 = vmatprep.subr.bf16.mxu0 0
    %1066 = vmatpush1.bf16.xpose.msra.mxu0 0
    %1067 = vmatprep.subr.bf16.mxu0 0
    %1068 = vmatpush1.bf16.xpose.msra.mxu0 0
    %1069 = vmatprep.subr.bf16.mxu0 0
    %1070 = vmatpush1.bf16.xpose.msra.mxu0 0
    %1071 = vmatprep.subr.bf16.mxu0 0
    %1072 = vmatpush1.bf16.xpose.msra.mxu0 0
    %1073 = vmatprep.subr.bf16.mxu0 0
    %1074 = vmatpush1.bf16.xpose.msra.mxu0 0
    %1075 = vmatprep.subr.bf16.mxu0 0
    %1076 = vmatpush1.bf16.xpose.msra.mxu0 0
    %1077 = vmatprep.mubr.bf16.mxu0 0
    %1078 = vmatmul.mubr.bf16.gmra.mrb[0].mxu0 %v1040
    %v1079 = vpop.f32.mrb[0].mxu0
    %v1080 = vadd.f32 0.0, %v1079
    %v1081 = vpop.f32.mrb[0].mxu0
    %v1082 = vpop.f32.mrb[0].mxu0
    %v1083 = vpop.f32.mrb[0].mxu0
    %1084 = vdwg.mxu0
    %v1085 = vmul.f32 %v1030, 0.35355338
    %v1086 = vmul.f32 %v1080, 0.35355338
    %v1087 = vadd.f32 %v1085, %v461
    %v1088 = vadd.f32 %v1086, %v465
    %v1089 = vsel %vm70, %v1087, -inf
    %1090 = vmax.xlane.f32.xlu0 %v1089
    %v1091 = vpop.xlane.xlu0 %1090
    %v1092 = vsel %vm70, %v1088, -inf
    %1093 = vmax.xlane.f32.xlu0 %v1092
    %v1094 = vpop.xlane.xlu0 %1093
    %v1095 = vsub.f32 %v1087, %v1091
    %v1096 = vsub.f32 %v1088, %v1094
    %v1097 = vmul.f32 %v1095, 1.442695
    %v1098 = vpow.pop %v1097
    %v1099 = vmul.f32 %v1096, 1.442695
    %v1100 = vpow.pop %v1099
    %v1101 = vsel %vm70, %v1098, 0.0
    %1102 = vadd.xlane.f32.xlu0 %v1101
    %v1103 = vpop.xlane.xlu0 %1102
    %v1104 = vsel %vm70, %v1100, 0.0
    %1105 = vadd.xlane.f32.xlu0 %v1104
    %v1106 = vpop.xlane.xlu0 %1105
    %v1107 = vrcp.pop %v1103
    %v1108 = vrcp.pop %v1106
    %v1109 = vmul.f32 %v1098, %v1107
    %v1110 = vmul.f32 %v1100, %v1108
    %v1111 = vpack.c.bf16 %v1109, %v1109
    %v1112 = vpack.c.bf16 %v1110, %v1110
    %1113 = vrot.lane.b32.xlu0 %v538, 48
    %v1114 = vpop.permute.xlu0 %1113
    %v1116 = vsel %vm70, %v1111, 0
    %v1119 = vsel %vm669, %v1114, 0
    %1121 = vmatprep.subr.bf16.mxu0 0
    %1122 = vmatpush1.bf16.msra.mxu0 %v1119
    %1123 = vmatprep.subr.bf16.mxu0 0
    %1124 = vmatpush1.bf16.msra.mxu0 0
    %1125 = vmatprep.subr.bf16.mxu0 0
    %1126 = vmatpush1.bf16.msra.mxu0 0
    %1127 = vmatprep.subr.bf16.mxu0 0
    %1128 = vmatpush1.bf16.msra.mxu0 0
    %1129 = vmatprep.subr.bf16.mxu0 0
    %1130 = vmatpush1.bf16.msra.mxu0 0
    %1131 = vmatprep.subr.bf16.mxu0 0
    %1132 = vmatpush1.bf16.msra.mxu0 0
    %1133 = vmatprep.subr.bf16.mxu0 0
    %1134 = vmatpush1.bf16.msra.mxu0 0
    %1135 = vmatprep.subr.bf16.mxu0 0
    %1136 = vmatpush1.bf16.msra.mxu0 0
    %1137 = vmatprep.subr.bf16.mxu0 0
    %1138 = vmatpush1.bf16.msra.mxu0 0
    %1139 = vmatprep.subr.bf16.mxu0 0
    %1140 = vmatpush1.bf16.msra.mxu0 0
    %1141 = vmatprep.subr.bf16.mxu0 0
    %1142 = vmatpush1.bf16.msra.mxu0 0
    %1143 = vmatprep.subr.bf16.mxu0 0
    %1144 = vmatpush1.bf16.msra.mxu0 0
    %1145 = vmatprep.subr.bf16.mxu0 0
    %1146 = vmatpush1.bf16.msra.mxu0 0
    %1147 = vmatprep.subr.bf16.mxu0 0
    %1148 = vmatpush1.bf16.msra.mxu0 0
    %1149 = vmatprep.subr.bf16.mxu0 0
    %1150 = vmatpush1.bf16.msra.mxu0 0
    %1151 = vmatprep.subr.bf16.mxu0 0
    %1152 = vmatpush1.bf16.msra.mxu0 0
    %1153 = vmatprep.mubr.bf16.mxu0 0
    %1154 = vmatmul.mubr.bf16.gmra.mrb[0].mxu0 %v1116
    %v1155 = vpop.f32.mrb[0].mxu0
    %v1156 = vadd.f32 0.0, %v1155
    %v1157 = vpop.f32.mrb[0].mxu0
    %v1158 = vpop.f32.mrb[0].mxu0
    %v1159 = vpop.f32.mrb[0].mxu0
    %1160 = vdwg.mxu0
    %1161 = vrot.lane.b32.xlu0 %v539, 48
    %v1162 = vpop.permute.xlu0 %1161
    %v1164 = vsel %vm70, %v1112, 0
    %v1167 = vsel %vm669, %v1162, 0
    %1169 = vmatprep.subr.bf16.mxu0 0
    %1170 = vmatpush1.bf16.msra.mxu0 %v1167
    %1171 = vmatprep.subr.bf16.mxu0 0
    %1172 = vmatpush1.bf16.msra.mxu0 0
    %1173 = vmatprep.subr.bf16.mxu0 0
    %1174 = vmatpush1.bf16.msra.mxu0 0
    %1175 = vmatprep.subr.bf16.mxu0 0
    %1176 = vmatpush1.bf16.msra.mxu0 0
    %1177 = vmatprep.subr.bf16.mxu0 0
    %1178 = vmatpush1.bf16.msra.mxu0 0
    %1179 = vmatprep.subr.bf16.mxu0 0
    %1180 = vmatpush1.bf16.msra.mxu0 0
    %1181 = vmatprep.subr.bf16.mxu0 0
    %1182 = vmatpush1.bf16.msra.mxu0 0
    %1183 = vmatprep.subr.bf16.mxu0 0
    %1184 = vmatpush1.bf16.msra.mxu0 0
    %1185 = vmatprep.subr.bf16.mxu0 0
    %1186 = vmatpush1.bf16.msra.mxu0 0
    %1187 = vmatprep.subr.bf16.mxu0 0
    %1188 = vmatpush1.bf16.msra.mxu0 0
    %1189 = vmatprep.subr.bf16.mxu0 0
    %1190 = vmatpush1.bf16.msra.mxu0 0
    %1191 = vmatprep.subr.bf16.mxu0 0
    %1192 = vmatpush1.bf16.msra.mxu0 0
    %1193 = vmatprep.subr.bf16.mxu0 0
    %1194 = vmatpush1.bf16.msra.mxu0 0
    %1195 = vmatprep.subr.bf16.mxu0 0
    %1196 = vmatpush1.bf16.msra.mxu0 0
    %1197 = vmatprep.subr.bf16.mxu0 0
    %1198 = vmatpush1.bf16.msra.mxu0 0
    %1199 = vmatprep.subr.bf16.mxu0 0
    %1200 = vmatpush1.bf16.msra.mxu0 0
    %1201 = vmatprep.mubr.bf16.mxu0 0
    %1202 = vmatmul.mubr.bf16.gmra.mrb[0].mxu0 %v1164
    %v1203 = vpop.f32.mrb[0].mxu0
    %v1204 = vadd.f32 0.0, %v1203
    %v1205 = vpop.f32.mrb[0].mxu0
    %v1206 = vpop.f32.mrb[0].mxu0
    %v1207 = vpop.f32.mrb[0].mxu0
    %1208 = vdwg.mxu0
    %1209 = vrot.lane.b32.xlu0 %v538, 104
    %v1210 = vpop.permute.xlu0 %1209
    %1211 = vrot.lane.b32.xlu0 %v538, 72
    %v1212 = vpop.permute.xlu0 %1211
    %v1214 = vsel %vm70, %v1210, 0
    %v1217 = vsel %vm70, %v1212, 0
    %1219 = vmatprep.subr.bf16.mxu0 0
    %1220 = vmatpush1.bf16.xpose.msra.mxu0 %v1217
    %1221 = vmatprep.subr.bf16.mxu0 0
    %1222 = vmatpush1.bf16.xpose.msra.mxu0 0
    %1223 = vmatprep.subr.bf16.mxu0 0
    %1224 = vmatpush1.bf16.xpose.msra.mxu0 0
    %1225 = vmatprep.subr.bf16.mxu0 0
    %1226 = vmatpush1.bf16.xpose.msra.mxu0 0
    %1227 = vmatprep.subr.bf16.mxu0 0
    %1228 = vmatpush1.bf16.xpose.msra.mxu0 0
    %1229 = vmatprep.subr.bf16.mxu0 0
    %1230 = vmatpush1.bf16.xpose.msra.mxu0 0
    %1231 = vmatprep.subr.bf16.mxu0 0
    %1232 = vmatpush1.bf16.xpose.msra.mxu0 0
    %1233 = vmatprep.subr.bf16.mxu0 0
    %1234 = vmatpush1.bf16.xpose.msra.mxu0 0
    %1235 = vmatprep.subr.bf16.mxu0 0
    %1236 = vmatpush1.bf16.xpose.msra.mxu0 0
    %1237 = vmatprep.subr.bf16.mxu0 0
    %1238 = vmatpush1.bf16.xpose.msra.mxu0 0
    %1239 = vmatprep.subr.bf16.mxu0 0
    %1240 = vmatpush1.bf16.xpose.msra.mxu0 0
    %1241 = vmatprep.subr.bf16.mxu0 0
    %1242 = vmatpush1.bf16.xpose.msra.mxu0 0
    %1243 = vmatprep.subr.bf16.mxu0 0
    %1244 = vmatpush1.bf16.xpose.msra.mxu0 0
    %1245 = vmatprep.subr.bf16.mxu0 0
    %1246 = vmatpush1.bf16.xpose.msra.mxu0 0
    %1247 = vmatprep.subr.bf16.mxu0 0
    %1248 = vmatpush1.bf16.xpose.msra.mxu0 0
    %1249 = vmatprep.subr.bf16.mxu0 0
    %1250 = vmatpush1.bf16.xpose.msra.mxu0 0
    %1251 = vmatprep.mubr.bf16.mxu0 0
    %1252 = vmatmul.mubr.bf16.gmra.mrb[0].mxu0 %v1214
    %v1253 = vpop.f32.mrb[0].mxu0
    %v1254 = vadd.f32 0.0, %v1253
    %v1255 = vpop.f32.mrb[0].mxu0
    %v1256 = vpop.f32.mrb[0].mxu0
    %v1257 = vpop.f32.mrb[0].mxu0
    %1258 = vdwg.mxu0
    %1259 = vrot.lane.b32.xlu0 %v539, 104
    %v1260 = vpop.permute.xlu0 %1259
    %1261 = vrot.lane.b32.xlu0 %v539, 72
    %v1262 = vpop.permute.xlu0 %1261
    %v1264 = vsel %vm70, %v1260, 0
    %v1267 = vsel %vm70, %v1262, 0
    %1269 = vmatprep.subr.bf16.mxu0 0
    %1270 = vmatpush1.bf16.xpose.msra.mxu0 %v1267
    %1271 = vmatprep.subr.bf16.mxu0 0
    %1272 = vmatpush1.bf16.xpose.msra.mxu0 0
    %1273 = vmatprep.subr.bf16.mxu0 0
    %1274 = vmatpush1.bf16.xpose.msra.mxu0 0
    %1275 = vmatprep.subr.bf16.mxu0 0
    %1276 = vmatpush1.bf16.xpose.msra.mxu0 0
    %1277 = vmatprep.subr.bf16.mxu0 0
    %1278 = vmatpush1.bf16.xpose.msra.mxu0 0
    %1279 = vmatprep.subr.bf16.mxu0 0
    %1280 = vmatpush1.bf16.xpose.msra.mxu0 0
    %1281 = vmatprep.subr.bf16.mxu0 0
    %1282 = vmatpush1.bf16.xpose.msra.mxu0 0
    %1283 = vmatprep.subr.bf16.mxu0 0
    %1284 = vmatpush1.bf16.xpose.msra.mxu0 0
    %1285 = vmatprep.subr.bf16.mxu0 0
    %1286 = vmatpush1.bf16.xpose.msra.mxu0 0
    %1287 = vmatprep.subr.bf16.mxu0 0
    %1288 = vmatpush1.bf16.xpose.msra.mxu0 0
    %1289 = vmatprep.subr.bf16.mxu0 0
    %1290 = vmatpush1.bf16.xpose.msra.mxu0 0
    %1291 = vmatprep.subr.bf16.mxu0 0
    %1292 = vmatpush1.bf16.xpose.msra.mxu0 0
    %1293 = vmatprep.subr.bf16.mxu0 0
    %1294 = vmatpush1.bf16.xpose.msra.mxu0 0
    %1295 = vmatprep.subr.bf16.mxu0 0
    %1296 = vmatpush1.bf16.xpose.msra.mxu0 0
    %1297 = vmatprep.subr.bf16.mxu0 0
    %1298 = vmatpush1.bf16.xpose.msra.mxu0 0
    %1299 = vmatprep.subr.bf16.mxu0 0
    %1300 = vmatpush1.bf16.xpose.msra.mxu0 0
    %1301 = vmatprep.mubr.bf16.mxu0 0
    %1302 = vmatmul.mubr.bf16.gmra.mrb[0].mxu0 %v1264
    %v1303 = vpop.f32.mrb[0].mxu0
    %v1304 = vadd.f32 0.0, %v1303
    %v1305 = vpop.f32.mrb[0].mxu0
    %v1306 = vpop.f32.mrb[0].mxu0
    %v1307 = vpop.f32.mrb[0].mxu0
    %1308 = vdwg.mxu0
    %v1309 = vmul.f32 %v1254, 0.35355338
    %v1310 = vmul.f32 %v1304, 0.35355338
    %v1311 = vadd.f32 %v1309, %v461
    %v1312 = vadd.f32 %v1310, %v465
    %v1313 = vsel %vm70, %v1311, -inf
    %1314 = vmax.xlane.f32.xlu0 %v1313
    %v1315 = vpop.xlane.xlu0 %1314
    %v1316 = vsel %vm70, %v1312, -inf
    %1317 = vmax.xlane.f32.xlu0 %v1316
    %v1318 = vpop.xlane.xlu0 %1317
    %v1319 = vsub.f32 %v1311, %v1315
    %v1320 = vsub.f32 %v1312, %v1318
    %v1321 = vmul.f32 %v1319, 1.442695
    %v1322 = vpow.pop %v1321
    %v1323 = vmul.f32 %v1320, 1.442695
    %v1324 = vpow.pop %v1323
    %v1325 = vsel %vm70, %v1322, 0.0
    %1326 = vadd.xlane.f32.xlu0 %v1325
    %v1327 = vpop.xlane.xlu0 %1326
    %v1328 = vsel %vm70, %v1324, 0.0
    %1329 = vadd.xlane.f32.xlu0 %v1328
    %v1330 = vpop.xlane.xlu0 %1329
    %v1331 = vrcp.pop %v1327
    %v1332 = vrcp.pop %v1330
    %v1333 = vmul.f32 %v1322, %v1331
    %v1334 = vmul.f32 %v1324, %v1332
    %v1335 = vpack.c.bf16 %v1333, %v1333
    %v1336 = vpack.c.bf16 %v1334, %v1334
    %1337 = vrot.lane.b32.xlu0 %v538, 40
    %v1338 = vpop.permute.xlu0 %1337
    %v1340 = vsel %vm70, %v1335, 0
    %v1343 = vsel %vm669, %v1338, 0
    %1345 = vmatprep.subr.bf16.mxu0 0
    %1346 = vmatpush1.bf16.msra.mxu0 %v1343
    %1347 = vmatprep.subr.bf16.mxu0 0
    %1348 = vmatpush1.bf16.msra.mxu0 0
    %1349 = vmatprep.subr.bf16.mxu0 0
    %1350 = vmatpush1.bf16.msra.mxu0 0
    %1351 = vmatprep.subr.bf16.mxu0 0
    %1352 = vmatpush1.bf16.msra.mxu0 0
    %1353 = vmatprep.subr.bf16.mxu0 0
    %1354 = vmatpush1.bf16.msra.mxu0 0
    %1355 = vmatprep.subr.bf16.mxu0 0
    %1356 = vmatpush1.bf16.msra.mxu0 0
    %1357 = vmatprep.subr.bf16.mxu0 0
    %1358 = vmatpush1.bf16.msra.mxu0 0
    %1359 = vmatprep.subr.bf16.mxu0 0
    %1360 = vmatpush1.bf16.msra.mxu0 0
    %1361 = vmatprep.subr.bf16.mxu0 0
    %1362 = vmatpush1.bf16.msra.mxu0 0
    %1363 = vmatprep.subr.bf16.mxu0 0
    %1364 = vmatpush1.bf16.msra.mxu0 0
    %1365 = vmatprep.subr.bf16.mxu0 0
    %1366 = vmatpush1.bf16.msra.mxu0 0
    %1367 = vmatprep.subr.bf16.mxu0 0
    %1368 = vmatpush1.bf16.msra.mxu0 0
    %1369 = vmatprep.subr.bf16.mxu0 0
    %1370 = vmatpush1.bf16.msra.mxu0 0
    %1371 = vmatprep.subr.bf16.mxu0 0
    %1372 = vmatpush1.bf16.msra.mxu0 0
    %1373 = vmatprep.subr.bf16.mxu0 0
    %1374 = vmatpush1.bf16.msra.mxu0 0
    %1375 = vmatprep.subr.bf16.mxu0 0
    %1376 = vmatpush1.bf16.msra.mxu0 0
    %1377 = vmatprep.mubr.bf16.mxu0 0
    %1378 = vmatmul.mubr.bf16.gmra.mrb[0].mxu0 %v1340
    %v1379 = vpop.f32.mrb[0].mxu0
    %v1380 = vadd.f32 0.0, %v1379
    %v1381 = vpop.f32.mrb[0].mxu0
    %v1382 = vpop.f32.mrb[0].mxu0
    %v1383 = vpop.f32.mrb[0].mxu0
    %1384 = vdwg.mxu0
    %1385 = vrot.lane.b32.xlu0 %v539, 40
    %v1386 = vpop.permute.xlu0 %1385
    %v1388 = vsel %vm70, %v1336, 0
    %v1391 = vsel %vm669, %v1386, 0
    %1393 = vmatprep.subr.bf16.mxu0 0
    %1394 = vmatpush1.bf16.msra.mxu0 %v1391
    %1395 = vmatprep.subr.bf16.mxu0 0
    %1396 = vmatpush1.bf16.msra.mxu0 0
    %1397 = vmatprep.subr.bf16.mxu0 0
    %1398 = vmatpush1.bf16.msra.mxu0 0
    %1399 = vmatprep.subr.bf16.mxu0 0
    %1400 = vmatpush1.bf16.msra.mxu0 0
    %1401 = vmatprep.subr.bf16.mxu0 0
    %1402 = vmatpush1.bf16.msra.mxu0 0
    %1403 = vmatprep.subr.bf16.mxu0 0
    %1404 = vmatpush1.bf16.msra.mxu0 0
    %1405 = vmatprep.subr.bf16.mxu0 0
    %1406 = vmatpush1.bf16.msra.mxu0 0
    %1407 = vmatprep.subr.bf16.mxu0 0
    %1408 = vmatpush1.bf16.msra.mxu0 0
    %1409 = vmatprep.subr.bf16.mxu0 0
    %1410 = vmatpush1.bf16.msra.mxu0 0
    %1411 = vmatprep.subr.bf16.mxu0 0
    %1412 = vmatpush1.bf16.msra.mxu0 0
    %1413 = vmatprep.subr.bf16.mxu0 0
    %1414 = vmatpush1.bf16.msra.mxu0 0
    %1415 = vmatprep.subr.bf16.mxu0 0
    %1416 = vmatpush1.bf16.msra.mxu0 0
    %1417 = vmatprep.subr.bf16.mxu0 0
    %1418 = vmatpush1.bf16.msra.mxu0 0
    %1419 = vmatprep.subr.bf16.mxu0 0
    %1420 = vmatpush1.bf16.msra.mxu0 0
    %1421 = vmatprep.subr.bf16.mxu0 0
    %1422 = vmatpush1.bf16.msra.mxu0 0
    %1423 = vmatprep.subr.bf16.mxu0 0
    %1424 = vmatpush1.bf16.msra.mxu0 0
    %1425 = vmatprep.mubr.bf16.mxu0 0
    %1426 = vmatmul.mubr.bf16.gmra.mrb[0].mxu0 %v1388
    %v1427 = vpop.f32.mrb[0].mxu0
    %v1428 = vadd.f32 0.0, %v1427
    %v1429 = vpop.f32.mrb[0].mxu0
    %v1430 = vpop.f32.mrb[0].mxu0
    %v1431 = vpop.f32.mrb[0].mxu0
    %1432 = vdwg.mxu0
    %1435 = vrot.lane.b32.xlu0 %v932, 8
    %v1436 = vpop.permute.xlu0 %1435
    %1437 = vrot.lane.b32.xlu0 %v980, 8
    %v1438 = vpop.permute.xlu0 %1437
    %1443 = vrot.lane.b32.xlu0 %v1156, 16
    %v1444 = vpop.permute.xlu0 %1443
    %1445 = vrot.lane.b32.xlu0 %v1204, 16
    %v1446 = vpop.permute.xlu0 %1445
    %1451 = vrot.lane.b32.xlu0 %v1380, 24
    %v1452 = vpop.permute.xlu0 %1451
    %1453 = vrot.lane.b32.xlu0 %v1428, 24
    %v1454 = vpop.permute.xlu0 %1453
    %v1457 = vsel %vm70, %v708, %v1436
    %v1458 = vsel %vm70, %v756, %v1438
    %vm1459 = vcmask 130048
    %v1460 = vsel %vm1459, %v1457, %v1444
    %v1461 = vsel %vm1459, %v1458, %v1446
    %vm1462 = vcmask 195584
    %v1463 = vsel %vm1462, %v1460, %v1452
    %v1464 = vsel %vm1462, %v1461, %v1454
    %v1465 = vld [vmem:[%s4] sm:$0xf]
    %v1466 = vld [vmem:[%s4 + $0x8] sm:$0xf]
    %v1467 = vld [vmem:[%s4 + $0x10] sm:$0xf]
    %v1468 = vld [vmem:[%s4 + $0x18] sm:$0xf]
    %v1469 = vpack.c.bf16 %v1464, %v1463
    %v1470 = vld [vmem:[%s6 + $0x5] sm:$0x1]
    %v1471 = vlaneseq
    %v1472 = vshrl.u32 %v1471, 7
    %v1473 = vsub.s32 0, %v1472
    %v1474 = vrot.slane %v1470, %v1473
    %v1479 = vunpack.c.l.b16 %v1465
    %v1480 = vunpack.c.l.b16 %v1466
    %v1481 = vunpack.c.l.b16 %v1467
    %v1482 = vunpack.c.l.b16 %v1468
    %v1483 = vpack.c.b16 %v1480, %v1479
    %v1484 = vpack.c.b16 %v1482, %v1481
    %1485 = vrot.lane.b32.xlu0 %v1483, 32
    %v1486 = vpop.permute.xlu0 %1485
    %1487 = vrot.lane.b32.xlu0 %v1484, 32
    %v1488 = vpop.permute.xlu0 %1487
    %v1492 = vsel %vm410, %v1469, 0
    %1494 = vmatprep.subr.bf16.mxu0 0
    %1495 = vmatpush1.bf16.msra.mxu0 %v1486
    %1496 = vmatprep.subr.bf16.mxu0 0
    %1497 = vmatpush1.bf16.msra.mxu0 %v1488
    %1498 = vmatprep.subr.bf16.mxu0 0
    %1499 = vmatpush1.bf16.msra.mxu0 0
    %1500 = vmatprep.subr.bf16.mxu0 0
    %1501 = vmatpush1.bf16.msra.mxu0 0
    %1502 = vmatprep.subr.bf16.mxu0 0
    %1503 = vmatpush1.bf16.msra.mxu0 0
    %1504 = vmatprep.subr.bf16.mxu0 0
    %1505 = vmatpush1.bf16.msra.mxu0 0
    %1506 = vmatprep.subr.bf16.mxu0 0
    %1507 = vmatpush1.bf16.msra.mxu0 0
    %1508 = vmatprep.subr.bf16.mxu0 0
    %1509 = vmatpush1.bf16.msra.mxu0 0
    %1510 = vmatprep.subr.bf16.mxu0 0
    %1511 = vmatpush1.bf16.msra.mxu0 0
    %1512 = vmatprep.subr.bf16.mxu0 0
    %1513 = vmatpush1.bf16.msra.mxu0 0
    %1514 = vmatprep.subr.bf16.mxu0 0
    %1515 = vmatpush1.bf16.msra.mxu0 0
    %1516 = vmatprep.subr.bf16.mxu0 0
    %1517 = vmatpush1.bf16.msra.mxu0 0
    %1518 = vmatprep.subr.bf16.mxu0 0
    %1519 = vmatpush1.bf16.msra.mxu0 0
    %1520 = vmatprep.subr.bf16.mxu0 0
    %1521 = vmatpush1.bf16.msra.mxu0 0
    %1522 = vmatprep.subr.bf16.mxu0 0
    %1523 = vmatpush1.bf16.msra.mxu0 0
    %1524 = vmatprep.subr.bf16.mxu0 0
    %1525 = vmatpush1.bf16.msra.mxu0 0
    %1526 = vmatprep.mubr.bf16.mxu0 0
    %1527 = vmatmul.mubr.bf16.gmra.mrb[0].mxu0 %v1492
    %v1528 = vpop.f32.mrb[0].mxu0
    %v1529 = vadd.f32 %v1474, %v1528
    %v1530 = vpop.f32.mrb[0].mxu0
    %v1531 = vpop.f32.mrb[0].mxu0
    %v1532 = vadd.f32 %v1474, %v1531
    %v1533 = vpop.f32.mrb[0].mxu0
    %1534 = vdwg.mxu0
    %v1535 = vadd.f32 %v448, %v1529
    %v1536 = vadd.f32 %v449, %v1532
    %v1537 = vld [vmem:[%s6 + $0x6] sm:$0x1]
    %v1538 = vld [vmem:[%s6 + $0x7] sm:$0x1]
    %v1539 = vsel %vm410, %v1535, 0.0
    %1540 = vadd.xlane.f32.xlu0 %v1539
    %v1541 = vpop.xlane.xlu0 %1540
    %v1542 = vsel %vm410, %v1536, 0.0
    %1543 = vadd.xlane.f32.xlu0 %v1542
    %v1544 = vpop.xlane.xlu0 %1543
    %v1545 = vmul.f32 %v1541, %v417
    %v1546 = vmul.f32 %v1544, %v417
    %v1547 = vsub.f32 %v1535, %v1545
    %v1548 = vsub.f32 %v1536, %v1546
    %v1549 = vmul.f32 %v1547, %v1547
    %v1550 = vmul.f32 %v1548, %v1548
    %v1551 = vsel %vm410, %v1549, 0.0
    %1552 = vadd.xlane.f32.xlu0 %v1551
    %v1553 = vpop.xlane.xlu0 %1552
    %v1554 = vsel %vm410, %v1550, 0.0
    %1555 = vadd.xlane.f32.xlu0 %v1554
    %v1556 = vpop.xlane.xlu0 %1555
    %v1557 = vmul.f32 %v1553, %v417
    %v1558 = vmul.f32 %v1556, %v417
    %v1559 = vadd.f32 %v1557, 1e-05
    %v1560 = vadd.f32 %v1558, 1e-05
    %v1561 = vrsqrt.pop %v1559
    %v1562 = vrsqrt.pop %v1560
    %v1563 = vmul.f32 %v1547, %v1561
    %v1564 = vmul.f32 %v1548, %v1562
    %v1565 = vlaneseq
    %v1566 = vshrl.u32 %v1565, 7
    %v1567 = vsub.s32 0, %v1566
    %v1568 = vrot.slane %v1537, %v1567
    %v1569 = vmul.f32 %v1563, %v1568
    %v1570 = vmul.f32 %v1564, %v1568
    %v1571 = vlaneseq
    %v1572 = vshrl.u32 %v1571, 7
    %v1573 = vsub.s32 0, %v1572
    %v1574 = vrot.slane %v1538, %v1573
    %v1575 = vadd.f32 %v1569, %v1574
    %v1576 = vadd.f32 %v1570, %v1574
    %v1577 = vld [vmem:[%s4 + $0x4] sm:$0xf]
    %v1578 = vld [vmem:[%s4 + $0xc] sm:$0xf]
    %v1579 = vld [vmem:[%s4 + $0x14] sm:$0xf]
    %v1580 = vld [vmem:[%s4 + $0x1c] sm:$0xf]
    %v1581 = vpack.c.bf16 %v1576, %v1575
    %v1582 = vld [vmem:[%s6 + $0x8] sm:$0x1]
    %v1583 = vlaneseq
    %v1584 = vshrl.u32 %v1583, 7
    %v1585 = vsub.s32 0, %v1584
    %v1586 = vrot.slane %v1582, %v1585
    %v1591 = vunpack.c.l.b16 %v1577
    %v1592 = vunpack.c.l.b16 %v1578
    %v1593 = vunpack.c.l.b16 %v1579
    %v1594 = vunpack.c.l.b16 %v1580
    %v1595 = vpack.c.b16 %v1592, %v1591
    %v1596 = vpack.c.b16 %v1594, %v1593
    %v1600 = vsel %vm410, %v1581, 0
    %1602 = vmatprep.subr.bf16.mxu0 0
    %1603 = vmatpush1.bf16.msra.mxu0 %v1595
    %1604 = vmatprep.subr.bf16.mxu0 0
    %1605 = vmatpush1.bf16.msra.mxu0 %v1596
    %1606 = vmatprep.subr.bf16.mxu0 0
    %1607 = vmatpush1.bf16.msra.mxu0 0
    %1608 = vmatprep.subr.bf16.mxu0 0
    %1609 = vmatpush1.bf16.msra.mxu0 0
    %1610 = vmatprep.subr.bf16.mxu0 0
    %1611 = vmatpush1.bf16.msra.mxu0 0
    %1612 = vmatprep.subr.bf16.mxu0 0
    %1613 = vmatpush1.bf16.msra.mxu0 0
    %1614 = vmatprep.subr.bf16.mxu0 0
    %1615 = vmatpush1.bf16.msra.mxu0 0
    %1616 = vmatprep.subr.bf16.mxu0 0
    %1617 = vmatpush1.bf16.msra.mxu0 0
    %1618 = vmatprep.subr.bf16.mxu0 0
    %1619 = vmatpush1.bf16.msra.mxu0 0
    %1620 = vmatprep.subr.bf16.mxu0 0
    %1621 = vmatpush1.bf16.msra.mxu0 0
    %1622 = vmatprep.subr.bf16.mxu0 0
    %1623 = vmatpush1.bf16.msra.mxu0 0
    %1624 = vmatprep.subr.bf16.mxu0 0
    %1625 = vmatpush1.bf16.msra.mxu0 0
    %1626 = vmatprep.subr.bf16.mxu0 0
    %1627 = vmatpush1.bf16.msra.mxu0 0
    %1628 = vmatprep.subr.bf16.mxu0 0
    %1629 = vmatpush1.bf16.msra.mxu0 0
    %1630 = vmatprep.subr.bf16.mxu0 0
    %1631 = vmatpush1.bf16.msra.mxu0 0
    %1632 = vmatprep.subr.bf16.mxu0 0
    %1633 = vmatpush1.bf16.msra.mxu0 0
    %1634 = vmatprep.mubr.bf16.mxu0 0
    %1635 = vmatmul.mubr.bf16.gmra.mrb[0].mxu0 %v1600
    %v1636 = vpop.f32.mrb[0].mxu0
    %v1637 = vadd.f32 %v1586, %v1636
    %v1638 = vpop.f32.mrb[0].mxu0
    %v1639 = vpop.f32.mrb[0].mxu0
    %v1640 = vadd.f32 %v1586, %v1639
    %v1641 = vpop.f32.mrb[0].mxu0
    %1642 = vdwg.mxu0
    %v1643 = vmul.f32 %v1637, 0.5
    %v1644 = vmul.f32 %v1640, 0.5
    %v1645 = vmul.f32 %v1637, 0.044715
    %v1646 = vmul.f32 %v1640, 0.044715
    %v1647 = vmul.f32 %v1645, %v1637
    %v1648 = vmul.f32 %v1646, %v1640
    %v1649 = vmul.f32 %v1647, %v1637
    %v1650 = vmul.f32 %v1648, %v1640
    %v1651 = vadd.f32 %v1637, %v1649
    %v1652 = vadd.f32 %v1640, %v1650
    %v1653 = vmul.f32 %v1651, 0.7978846
    %v1654 = vmul.f32 %v1652, 0.7978846
    %v1655 = vtanh.pop %v1653
    %v1656 = vtanh.pop %v1654
    %v1657 = vadd.f32 %v1655, 1.0
    %v1658 = vadd.f32 %v1656, 1.0
    %v1659 = vmul.f32 %v1643, %v1657
    %v1660 = vmul.f32 %v1644, %v1658
    %v1661 = vld [vmem:[%s5] sm:$0xf]
    %v1662 = vld [vmem:[%s5 + $0x4] sm:$0xf]
    %v1663 = vld [vmem:[%s5 + $0x8] sm:$0xf]
    %v1664 = vld [vmem:[%s5 + $0xc] sm:$0xf]
    %v1665 = vld [vmem:[%s5 + $0x10] sm:$0xf]
    %v1666 = vld [vmem:[%s5 + $0x14] sm:$0xf]
    %v1667 = vld [vmem:[%s5 + $0x18] sm:$0xf]
    %v1668 = vld [vmem:[%s5 + $0x1c] sm:$0xf]
    %v1669 = vpack.c.bf16 %v1660, %v1659
    %v1670 = vld [vmem:[%s6 + $0x9] sm:$0x1]
    %v1671 = vlaneseq
    %v1672 = vshrl.u32 %v1671, 7
    %v1673 = vsub.s32 0, %v1672
    %v1674 = vrot.slane %v1670, %v1673
    %v1683 = vunpack.c.l.b16 %v1661
    %v1684 = vunpack.c.l.b16 %v1662
    %v1685 = vunpack.c.l.b16 %v1663
    %v1686 = vunpack.c.l.b16 %v1664
    %v1687 = vunpack.c.l.b16 %v1665
    %v1688 = vunpack.c.l.b16 %v1666
    %v1689 = vunpack.c.l.b16 %v1667
    %v1690 = vunpack.c.l.b16 %v1668
    %v1691 = vpack.c.b16 %v1684, %v1683
    %v1692 = vpack.c.b16 %v1686, %v1685
    %v1693 = vpack.c.b16 %v1688, %v1687
    %v1694 = vpack.c.b16 %v1690, %v1689
    %vm1699 = vcmask 523264
    %v1701 = vsel %vm1699, %v1669, 0
    %1703 = vmatprep.subr.bf16.mxu0 0
    %1704 = vmatpush1.bf16.msra.mxu0 %v1691
    %1705 = vmatprep.subr.bf16.mxu0 0
    %1706 = vmatpush1.bf16.msra.mxu0 %v1692
    %1707 = vmatprep.subr.bf16.mxu0 0
    %1708 = vmatpush1.bf16.msra.mxu0 %v1693
    %1709 = vmatprep.subr.bf16.mxu0 0
    %1710 = vmatpush1.bf16.msra.mxu0 %v1694
    %1711 = vmatprep.subr.bf16.mxu0 0
    %1712 = vmatpush1.bf16.msra.mxu0 0
    %1713 = vmatprep.subr.bf16.mxu0 0
    %1714 = vmatpush1.bf16.msra.mxu0 0
    %1715 = vmatprep.subr.bf16.mxu0 0
    %1716 = vmatpush1.bf16.msra.mxu0 0
    %1717 = vmatprep.subr.bf16.mxu0 0
    %1718 = vmatpush1.bf16.msra.mxu0 0
    %1719 = vmatprep.subr.bf16.mxu0 0
    %1720 = vmatpush1.bf16.msra.mxu0 0
    %1721 = vmatprep.subr.bf16.mxu0 0
    %1722 = vmatpush1.bf16.msra.mxu0 0
    %1723 = vmatprep.subr.bf16.mxu0 0
    %1724 = vmatpush1.bf16.msra.mxu0 0
    %1725 = vmatprep.subr.bf16.mxu0 0
    %1726 = vmatpush1.bf16.msra.mxu0 0
    %1727 = vmatprep.subr.bf16.mxu0 0
    %1728 = vmatpush1.bf16.msra.mxu0 0
    %1729 = vmatprep.subr.bf16.mxu0 0
    %1730 = vmatpush1.bf16.msra.mxu0 0
    %1731 = vmatprep.subr.bf16.mxu0 0
    %1732 = vmatpush1.bf16.msra.mxu0 0
    %1733 = vmatprep.subr.bf16.mxu0 0
    %1734 = vmatpush1.bf16.msra.mxu0 0
    %1735 = vmatprep.mubr.bf16.mxu0 0
    %1736 = vmatmul.mubr.bf16.gmra.mrb[0].mxu0 %v1701
    %v1737 = vpop.f32.mrb[0].mxu0
    %v1738 = vadd.f32 %v1674, %v1737
    %v1739 = vpop.f32.mrb[0].mxu0
    %v1740 = vpop.f32.mrb[0].mxu0
    %v1741 = vadd.f32 %v1674, %v1740
    %v1742 = vpop.f32.mrb[0].mxu0
    %1743 = vdwg.mxu0
    %v1744 = vadd.f32 %v1575, %v1738
    %v1745 = vadd.f32 %v1576, %v1741
    %v1746 = vld [vmem:[%s6 + $0xa] sm:$0x1]
    %v1747 = vld [vmem:[%s6 + $0xb] sm:$0x1]
    %v1748 = vsel %vm410, %v1744, 0.0
    %1749 = vadd.xlane.f32.xlu0 %v1748
    %v1750 = vpop.xlane.xlu0 %1749
    %v1751 = vsel %vm410, %v1745, 0.0
    %1752 = vadd.xlane.f32.xlu0 %v1751
    %v1753 = vpop.xlane.xlu0 %1752
    %v1754 = vmul.f32 %v1750, %v417
    %v1755 = vmul.f32 %v1753, %v417
    %v1756 = vsub.f32 %v1744, %v1754
    %v1757 = vsub.f32 %v1745, %v1755
    %v1758 = vmul.f32 %v1756, %v1756
    %v1759 = vmul.f32 %v1757, %v1757
    %v1760 = vsel %vm410, %v1758, 0.0
    %1761 = vadd.xlane.f32.xlu0 %v1760
    %v1762 = vpop.xlane.xlu0 %1761
    %v1763 = vsel %vm410, %v1759, 0.0
    %1764 = vadd.xlane.f32.xlu0 %v1763
    %v1765 = vpop.xlane.xlu0 %1764
    %v1766 = vmul.f32 %v1762, %v417
    %v1767 = vmul.f32 %v1765, %v417
    %v1768 = vadd.f32 %v1766, 1e-05
    %v1769 = vadd.f32 %v1767, 1e-05
    %v1770 = vrsqrt.pop %v1768
    %v1771 = vrsqrt.pop %v1769
    %v1772 = vmul.f32 %v1756, %v1770
    %v1773 = vmul.f32 %v1757, %v1771
    %v1774 = vlaneseq
    %v1775 = vshrl.u32 %v1774, 7
    %v1776 = vsub.s32 0, %v1775
    %v1777 = vrot.slane %v1746, %v1776
    %v1778 = vmul.f32 %v1772, %v1777
    %v1779 = vmul.f32 %v1773, %v1777
    %v1780 = vlaneseq
    %v1781 = vshrl.u32 %v1780, 7
    %v1782 = vsub.s32 0, %v1781
    %v1783 = vrot.slane %v1747, %v1782
    %v1784 = vadd.f32 %v1778, %v1783
    %v1785 = vadd.f32 %v1779, %v1783
    %s1786 = scalar_lea.vmem %s4, 32
    %v1787 = vld [vmem:[%s1786] sm:$0xf]
    %v1788 = vld [vmem:[%s1786 + $0x8] sm:$0xf]
    %v1789 = vld [vmem:[%s1786 + $0x10] sm:$0xf]
    %v1790 = vld [vmem:[%s1786 + $0x18] sm:$0xf]
    %v1791 = vpack.c.bf16 %v1785, %v1784
    %v1792 = vld [vmem:[%s6 + $0xc] sm:$0x1]
    %v1793 = vlaneseq
    %v1794 = vshrl.u32 %v1793, 7
    %v1795 = vsub.s32 0, %v1794
    %v1796 = vrot.slane %v1792, %v1795
    %v1801 = vunpack.c.l.b16 %v1787
    %v1802 = vunpack.c.l.b16 %v1788
    %v1803 = vunpack.c.l.b16 %v1789
    %v1804 = vunpack.c.l.b16 %v1790
    %v1805 = vpack.c.b16 %v1802, %v1801
    %v1806 = vpack.c.b16 %v1804, %v1803
    %v1810 = vsel %vm410, %v1791, 0
    %1812 = vmatprep.subr.bf16.mxu0 0
    %1813 = vmatpush1.bf16.msra.mxu0 %v1805
    %1814 = vmatprep.subr.bf16.mxu0 0
    %1815 = vmatpush1.bf16.msra.mxu0 %v1806
    %1816 = vmatprep.subr.bf16.mxu0 0
    %1817 = vmatpush1.bf16.msra.mxu0 0
    %1818 = vmatprep.subr.bf16.mxu0 0
    %1819 = vmatpush1.bf16.msra.mxu0 0
    %1820 = vmatprep.subr.bf16.mxu0 0
    %1821 = vmatpush1.bf16.msra.mxu0 0
    %1822 = vmatprep.subr.bf16.mxu0 0
    %1823 = vmatpush1.bf16.msra.mxu0 0
    %1824 = vmatprep.subr.bf16.mxu0 0
    %1825 = vmatpush1.bf16.msra.mxu0 0
    %1826 = vmatprep.subr.bf16.mxu0 0
    %1827 = vmatpush1.bf16.msra.mxu0 0
    %1828 = vmatprep.subr.bf16.mxu0 0
    %1829 = vmatpush1.bf16.msra.mxu0 0
    %1830 = vmatprep.subr.bf16.mxu0 0
    %1831 = vmatpush1.bf16.msra.mxu0 0
    %1832 = vmatprep.subr.bf16.mxu0 0
    %1833 = vmatpush1.bf16.msra.mxu0 0
    %1834 = vmatprep.subr.bf16.mxu0 0
    %1835 = vmatpush1.bf16.msra.mxu0 0
    %1836 = vmatprep.subr.bf16.mxu0 0
    %1837 = vmatpush1.bf16.msra.mxu0 0
    %1838 = vmatprep.subr.bf16.mxu0 0
    %1839 = vmatpush1.bf16.msra.mxu0 0
    %1840 = vmatprep.subr.bf16.mxu0 0
    %1841 = vmatpush1.bf16.msra.mxu0 0
    %1842 = vmatprep.subr.bf16.mxu0 0
    %1843 = vmatpush1.bf16.msra.mxu0 0
    %1844 = vmatprep.mubr.bf16.mxu0 0
    %1845 = vmatmul.mubr.bf16.gmra.mrb[0].mxu0 %v1810
    %v1846 = vpop.f32.mrb[0].mxu0
    %v1847 = vadd.f32 %v1796, %v1846
    %v1848 = vpop.f32.mrb[0].mxu0
    %v1849 = vpop.f32.mrb[0].mxu0
    %v1850 = vadd.f32 %v1796, %v1849
    %v1851 = vpop.f32.mrb[0].mxu0
    %1852 = vdwg.mxu0
    %v1853 = vpack.c.bf16 %v1850, %v1847
    %v1855 = vunpack.c.l.b16 %v1853
    %v1856 = vunpack.c.h.b16 %v1853
    %v1857 = vpack.c.b16 %v1855, %v1855
    %v1858 = vpack.c.b16 %v1856, %v1856
    %1859 = vrot.lane.b32.xlu0 %v1857, 96
    %v1860 = vpop.permute.xlu0 %1859
    %v1862 = vsel %vm70, %v1857, 0
    %v1865 = vsel %vm70, %v1860, 0
    %1867 = vmatprep.subr.bf16.mxu0 0
    %1868 = vmatpush1.bf16.xpose.msra.mxu0 %v1865
    %1869 = vmatprep.subr.bf16.mxu0 0
    %1870 = vmatpush1.bf16.xpose.msra.mxu0 0
    %1871 = vmatprep.subr.bf16.mxu0 0
    %1872 = vmatpush1.bf16.xpose.msra.mxu0 0
    %1873 = vmatprep.subr.bf16.mxu0 0
    %1874 = vmatpush1.bf16.xpose.msra.mxu0 0
    %1875 = vmatprep.subr.bf16.mxu0 0
    %1876 = vmatpush1.bf16.xpose.msra.mxu0 0
    %1877 = vmatprep.subr.bf16.mxu0 0
    %1878 = vmatpush1.bf16.xpose.msra.mxu0 0
    %1879 = vmatprep.subr.bf16.mxu0 0
    %1880 = vmatpush1.bf16.xpose.msra.mxu0 0
    %1881 = vmatprep.subr.bf16.mxu0 0
    %1882 = vmatpush1.bf16.xpose.msra.mxu0 0
    %1883 = vmatprep.subr.bf16.mxu0 0
    %1884 = vmatpush1.bf16.xpose.msra.mxu0 0
    %1885 = vmatprep.subr.bf16.mxu0 0
    %1886 = vmatpush1.bf16.xpose.msra.mxu0 0
    %1887 = vmatprep.subr.bf16.mxu0 0
    %1888 = vmatpush1.bf16.xpose.msra.mxu0 0
    %1889 = vmatprep.subr.bf16.mxu0 0
    %1890 = vmatpush1.bf16.xpose.msra.mxu0 0
    %1891 = vmatprep.subr.bf16.mxu0 0
    %1892 = vmatpush1.bf16.xpose.msra.mxu0 0
    %1893 = vmatprep.subr.bf16.mxu0 0
    %1894 = vmatpush1.bf16.xpose.msra.mxu0 0
    %1895 = vmatprep.subr.bf16.mxu0 0
    %1896 = vmatpush1.bf16.xpose.msra.mxu0 0
    %1897 = vmatprep.subr.bf16.mxu0 0
    %1898 = vmatpush1.bf16.xpose.msra.mxu0 0
    %1899 = vmatprep.mubr.bf16.mxu0 0
    %1900 = vmatmul.mubr.bf16.gmra.mrb[0].mxu0 %v1862
    %v1901 = vpop.f32.mrb[0].mxu0
    %v1902 = vadd.f32 0.0, %v1901
    %v1903 = vpop.f32.mrb[0].mxu0
    %v1904 = vpop.f32.mrb[0].mxu0
    %v1905 = vpop.f32.mrb[0].mxu0
    %1906 = vdwg.mxu0
    %1907 = vrot.lane.b32.xlu0 %v1858, 96
    %v1908 = vpop.permute.xlu0 %1907
    %v1910 = vsel %vm70, %v1858, 0
    %v1913 = vsel %vm70, %v1908, 0
    %1915 = vmatprep.subr.bf16.mxu0 0
    %1916 = vmatpush1.bf16.xpose.msra.mxu0 %v1913
    %1917 = vmatprep.subr.bf16.mxu0 0
    %1918 = vmatpush1.bf16.xpose.msra.mxu0 0
    %1919 = vmatprep.subr.bf16.mxu0 0
    %1920 = vmatpush1.bf16.xpose.msra.mxu0 0
    %1921 = vmatprep.subr.bf16.mxu0 0
    %1922 = vmatpush1.bf16.xpose.msra.mxu0 0
    %1923 = vmatprep.subr.bf16.mxu0 0
    %1924 = vmatpush1.bf16.xpose.msra.mxu0 0
    %1925 = vmatprep.subr.bf16.mxu0 0
    %1926 = vmatpush1.bf16.xpose.msra.mxu0 0
    %1927 = vmatprep.subr.bf16.mxu0 0
    %1928 = vmatpush1.bf16.xpose.msra.mxu0 0
    %1929 = vmatprep.subr.bf16.mxu0 0
    %1930 = vmatpush1.bf16.xpose.msra.mxu0 0
    %1931 = vmatprep.subr.bf16.mxu0 0
    %1932 = vmatpush1.bf16.xpose.msra.mxu0 0
    %1933 = vmatprep.subr.bf16.mxu0 0
    %1934 = vmatpush1.bf16.xpose.msra.mxu0 0
    %1935 = vmatprep.subr.bf16.mxu0 0
    %1936 = vmatpush1.bf16.xpose.msra.mxu0 0
    %1937 = vmatprep.subr.bf16.mxu0 0
    %1938 = vmatpush1.bf16.xpose.msra.mxu0 0
    %1939 = vmatprep.subr.bf16.mxu0 0
    %1940 = vmatpush1.bf16.xpose.msra.mxu0 0
    %1941 = vmatprep.subr.bf16.mxu0 0
    %1942 = vmatpush1.bf16.xpose.msra.mxu0 0
    %1943 = vmatprep.subr.bf16.mxu0 0
    %1944 = vmatpush1.bf16.xpose.msra.mxu0 0
    %1945 = vmatprep.subr.bf16.mxu0 0
    %1946 = vmatpush1.bf16.xpose.msra.mxu0 0
    %1947 = vmatprep.mubr.bf16.mxu0 0
    %1948 = vmatmul.mubr.bf16.gmra.mrb[0].mxu0 %v1910
    %v1949 = vpop.f32.mrb[0].mxu0
    %v1950 = vadd.f32 0.0, %v1949
    %v1951 = vpop.f32.mrb[0].mxu0
    %v1952 = vpop.f32.mrb[0].mxu0
    %v1953 = vpop.f32.mrb[0].mxu0
    %1954 = vdwg.mxu0
    %v1955 = vmul.f32 %v1902, 0.35355338
    %v1956 = vmul.f32 %v1950, 0.35355338
    %v1957 = vadd.f32 %v1955, %v461
    %v1958 = vadd.f32 %v1956, %v465
    %v1959 = vsel %vm70, %v1957, -inf
    %1960 = vmax.xlane.f32.xlu0 %v1959
    %v1961 = vpop.xlane.xlu0 %1960
    %v1962 = vsel %vm70, %v1958, -inf
    %1963 = vmax.xlane.f32.xlu0 %v1962
    %v1964 = vpop.xlane.xlu0 %1963
    %v1965 = vsub.f32 %v1957, %v1961
    %v1966 = vsub.f32 %v1958, %v1964
    %v1967 = vmul.f32 %v1965, 1.442695
    %v1968 = vpow.pop %v1967
    %v1969 = vmul.f32 %v1966, 1.442695
    %v1970 = vpow.pop %v1969
    %v1971 = vsel %vm70, %v1968, 0.0
    %1972 = vadd.xlane.f32.xlu0 %v1971
    %v1973 = vpop.xlane.xlu0 %1972
    %v1974 = vsel %vm70, %v1970, 0.0
    %1975 = vadd.xlane.f32.xlu0 %v1974
    %v1976 = vpop.xlane.xlu0 %1975
    %v1977 = vrcp.pop %v1973
    %v1978 = vrcp.pop %v1976
    %v1979 = vmul.f32 %v1968, %v1977
    %v1980 = vmul.f32 %v1970, %v1978
    %v1981 = vpack.c.bf16 %v1979, %v1979
    %v1982 = vpack.c.bf16 %v1980, %v1980
    %1983 = vrot.lane.b32.xlu0 %v1857, 64
    %v1984 = vpop.permute.xlu0 %1983
    %v1986 = vsel %vm70, %v1981, 0
    %v1989 = vsel %vm669, %v1984, 0
    %1991 = vmatprep.subr.bf16.mxu0 0
    %1992 = vmatpush1.bf16.msra.mxu0 %v1989
    %1993 = vmatprep.subr.bf16.mxu0 0
    %1994 = vmatpush1.bf16.msra.mxu0 0
    %1995 = vmatprep.subr.bf16.mxu0 0
    %1996 = vmatpush1.bf16.msra.mxu0 0
    %1997 = vmatprep.subr.bf16.mxu0 0
    %1998 = vmatpush1.bf16.msra.mxu0 0
    %1999 = vmatprep.subr.bf16.mxu0 0
    %2000 = vmatpush1.bf16.msra.mxu0 0
    %2001 = vmatprep.subr.bf16.mxu0 0
    %2002 = vmatpush1.bf16.msra.mxu0 0
    %2003 = vmatprep.subr.bf16.mxu0 0
    %2004 = vmatpush1.bf16.msra.mxu0 0
    %2005 = vmatprep.subr.bf16.mxu0 0
    %2006 = vmatpush1.bf16.msra.mxu0 0
    %2007 = vmatprep.subr.bf16.mxu0 0
    %2008 = vmatpush1.bf16.msra.mxu0 0
    %2009 = vmatprep.subr.bf16.mxu0 0
    %2010 = vmatpush1.bf16.msra.mxu0 0
    %2011 = vmatprep.subr.bf16.mxu0 0
    %2012 = vmatpush1.bf16.msra.mxu0 0
    %2013 = vmatprep.subr.bf16.mxu0 0
    %2014 = vmatpush1.bf16.msra.mxu0 0
    %2015 = vmatprep.subr.bf16.mxu0 0
    %2016 = vmatpush1.bf16.msra.mxu0 0
    %2017 = vmatprep.subr.bf16.mxu0 0
    %2018 = vmatpush1.bf16.msra.mxu0 0
    %2019 = vmatprep.subr.bf16.mxu0 0
    %2020 = vmatpush1.bf16.msra.mxu0 0
    %2021 = vmatprep.subr.bf16.mxu0 0
    %2022 = vmatpush1.bf16.msra.mxu0 0
    %2023 = vmatprep.mubr.bf16.mxu0 0
    %2024 = vmatmul.mubr.bf16.gmra.mrb[0].mxu0 %v1986
    %v2025 = vpop.f32.mrb[0].mxu0
    %v2026 = vadd.f32 0.0, %v2025
    %v2027 = vpop.f32.mrb[0].mxu0
    %v2028 = vpop.f32.mrb[0].mxu0
    %v2029 = vpop.f32.mrb[0].mxu0
    %2030 = vdwg.mxu0
    %2031 = vrot.lane.b32.xlu0 %v1858, 64
    %v2032 = vpop.permute.xlu0 %2031
    %v2034 = vsel %vm70, %v1982, 0
    %v2037 = vsel %vm669, %v2032, 0
    %2039 = vmatprep.subr.bf16.mxu0 0
    %2040 = vmatpush1.bf16.msra.mxu0 %v2037
    %2041 = vmatprep.subr.bf16.mxu0 0
    %2042 = vmatpush1.bf16.msra.mxu0 0
    %2043 = vmatprep.subr.bf16.mxu0 0
    %2044 = vmatpush1.bf16.msra.mxu0 0
    %2045 = vmatprep.subr.bf16.mxu0 0
    %2046 = vmatpush1.bf16.msra.mxu0 0
    %2047 = vmatprep.subr.bf16.mxu0 0
    %2048 = vmatpush1.bf16.msra.mxu0 0
    %2049 = vmatprep.subr.bf16.mxu0 0
    %2050 = vmatpush1.bf16.msra.mxu0 0
    %2051 = vmatprep.subr.bf16.mxu0 0
    %2052 = vmatpush1.bf16.msra.mxu0 0
    %2053 = vmatprep.subr.bf16.mxu0 0
    %2054 = vmatpush1.bf16.msra.mxu0 0
    %2055 = vmatprep.subr.bf16.mxu0 0
    %2056 = vmatpush1.bf16.msra.mxu0 0
    %2057 = vmatprep.subr.bf16.mxu0 0
    %2058 = vmatpush1.bf16.msra.mxu0 0
    %2059 = vmatprep.subr.bf16.mxu0 0
    %2060 = vmatpush1.bf16.msra.mxu0 0
    %2061 = vmatprep.subr.bf16.mxu0 0
    %2062 = vmatpush1.bf16.msra.mxu0 0
    %2063 = vmatprep.subr.bf16.mxu0 0
    %2064 = vmatpush1.bf16.msra.mxu0 0
    %2065 = vmatprep.subr.bf16.mxu0 0
    %2066 = vmatpush1.bf16.msra.mxu0 0
    %2067 = vmatprep.subr.bf16.mxu0 0
    %2068 = vmatpush1.bf16.msra.mxu0 0
    %2069 = vmatprep.subr.bf16.mxu0 0
    %2070 = vmatpush1.bf16.msra.mxu0 0
    %2071 = vmatprep.mubr.bf16.mxu0 0
    %2072 = vmatmul.mubr.bf16.gmra.mrb[0].mxu0 %v2034
    %v2073 = vpop.f32.mrb[0].mxu0
    %v2074 = vadd.f32 0.0, %v2073
    %v2075 = vpop.f32.mrb[0].mxu0
    %v2076 = vpop.f32.mrb[0].mxu0
    %v2077 = vpop.f32.mrb[0].mxu0
    %2078 = vdwg.mxu0
    %2079 = vrot.lane.b32.xlu0 %v1857, 120
    %v2080 = vpop.permute.xlu0 %2079
    %2081 = vrot.lane.b32.xlu0 %v1857, 88
    %v2082 = vpop.permute.xlu0 %2081
    %v2084 = vsel %vm70, %v2080, 0
    %v2087 = vsel %vm70, %v2082, 0
    %2089 = vmatprep.subr.bf16.mxu0 0
    %2090 = vmatpush1.bf16.xpose.msra.mxu0 %v2087
    %2091 = vmatprep.subr.bf16.mxu0 0
    %2092 = vmatpush1.bf16.xpose.msra.mxu0 0
    %2093 = vmatprep.subr.bf16.mxu0 0
    %2094 = vmatpush1.bf16.xpose.msra.mxu0 0
    %2095 = vmatprep.subr.bf16.mxu0 0
    %2096 = vmatpush1.bf16.xpose.msra.mxu0 0
    %2097 = vmatprep.subr.bf16.mxu0 0
    %2098 = vmatpush1.bf16.xpose.msra.mxu0 0
    %2099 = vmatprep.subr.bf16.mxu0 0
    %2100 = vmatpush1.bf16.xpose.msra.mxu0 0
    %2101 = vmatprep.subr.bf16.mxu0 0
    %2102 = vmatpush1.bf16.xpose.msra.mxu0 0
    %2103 = vmatprep.subr.bf16.mxu0 0
    %2104 = vmatpush1.bf16.xpose.msra.mxu0 0
    %2105 = vmatprep.subr.bf16.mxu0 0
    %2106 = vmatpush1.bf16.xpose.msra.mxu0 0
    %2107 = vmatprep.subr.bf16.mxu0 0
    %2108 = vmatpush1.bf16.xpose.msra.mxu0 0
    %2109 = vmatprep.subr.bf16.mxu0 0
    %2110 = vmatpush1.bf16.xpose.msra.mxu0 0
    %2111 = vmatprep.subr.bf16.mxu0 0
    %2112 = vmatpush1.bf16.xpose.msra.mxu0 0
    %2113 = vmatprep.subr.bf16.mxu0 0
    %2114 = vmatpush1.bf16.xpose.msra.mxu0 0
    %2115 = vmatprep.subr.bf16.mxu0 0
    %2116 = vmatpush1.bf16.xpose.msra.mxu0 0
    %2117 = vmatprep.subr.bf16.mxu0 0
    %2118 = vmatpush1.bf16.xpose.msra.mxu0 0
    %2119 = vmatprep.subr.bf16.mxu0 0
    %2120 = vmatpush1.bf16.xpose.msra.mxu0 0
    %2121 = vmatprep.mubr.bf16.mxu0 0
    %2122 = vmatmul.mubr.bf16.gmra.mrb[0].mxu0 %v2084
    %v2123 = vpop.f32.mrb[0].mxu0
    %v2124 = vadd.f32 0.0, %v2123
    %v2125 = vpop.f32.mrb[0].mxu0
    %v2126 = vpop.f32.mrb[0].mxu0
    %v2127 = vpop.f32.mrb[0].mxu0
    %2128 = vdwg.mxu0
    %2129 = vrot.lane.b32.xlu0 %v1858, 120
    %v2130 = vpop.permute.xlu0 %2129
    %2131 = vrot.lane.b32.xlu0 %v1858, 88
    %v2132 = vpop.permute.xlu0 %2131
    %v2134 = vsel %vm70, %v2130, 0
    %v2137 = vsel %vm70, %v2132, 0
    %2139 = vmatprep.subr.bf16.mxu0 0
    %2140 = vmatpush1.bf16.xpose.msra.mxu0 %v2137
    %2141 = vmatprep.subr.bf16.mxu0 0
    %2142 = vmatpush1.bf16.xpose.msra.mxu0 0
    %2143 = vmatprep.subr.bf16.mxu0 0
    %2144 = vmatpush1.bf16.xpose.msra.mxu0 0
    %2145 = vmatprep.subr.bf16.mxu0 0
    %2146 = vmatpush1.bf16.xpose.msra.mxu0 0
    %2147 = vmatprep.subr.bf16.mxu0 0
    %2148 = vmatpush1.bf16.xpose.msra.mxu0 0
    %2149 = vmatprep.subr.bf16.mxu0 0
    %2150 = vmatpush1.bf16.xpose.msra.mxu0 0
    %2151 = vmatprep.subr.bf16.mxu0 0
    %2152 = vmatpush1.bf16.xpose.msra.mxu0 0
    %2153 = vmatprep.subr.bf16.mxu0 0
    %2154 = vmatpush1.bf16.xpose.msra.mxu0 0
    %2155 = vmatprep.subr.bf16.mxu0 0
    %2156 = vmatpush1.bf16.xpose.msra.mxu0 0
    %2157 = vmatprep.subr.bf16.mxu0 0
    %2158 = vmatpush1.bf16.xpose.msra.mxu0 0
    %2159 = vmatprep.subr.bf16.mxu0 0
    %2160 = vmatpush1.bf16.xpose.msra.mxu0 0
    %2161 = vmatprep.subr.bf16.mxu0 0
    %2162 = vmatpush1.bf16.xpose.msra.mxu0 0
    %2163 = vmatprep.subr.bf16.mxu0 0
    %2164 = vmatpush1.bf16.xpose.msra.mxu0 0
    %2165 = vmatprep.subr.bf16.mxu0 0
    %2166 = vmatpush1.bf16.xpose.msra.mxu0 0
    %2167 = vmatprep.subr.bf16.mxu0 0
    %2168 = vmatpush1.bf16.xpose.msra.mxu0 0
    %2169 = vmatprep.subr.bf16.mxu0 0
    %2170 = vmatpush1.bf16.xpose.msra.mxu0 0
    %2171 = vmatprep.mubr.bf16.mxu0 0
    %2172 = vmatmul.mubr.bf16.gmra.mrb[0].mxu0 %v2134
    %v2173 = vpop.f32.mrb[0].mxu0
    %v2174 = vadd.f32 0.0, %v2173
    %v2175 = vpop.f32.mrb[0].mxu0
    %v2176 = vpop.f32.mrb[0].mxu0
    %v2177 = vpop.f32.mrb[0].mxu0
    %2178 = vdwg.mxu0
    %v2179 = vmul.f32 %v2124, 0.35355338
    %v2180 = vmul.f32 %v2174, 0.35355338
    %v2181 = vadd.f32 %v2179, %v461
    %v2182 = vadd.f32 %v2180, %v465
    %v2183 = vsel %vm70, %v2181, -inf
    %2184 = vmax.xlane.f32.xlu0 %v2183
    %v2185 = vpop.xlane.xlu0 %2184
    %v2186 = vsel %vm70, %v2182, -inf
    %2187 = vmax.xlane.f32.xlu0 %v2186
    %v2188 = vpop.xlane.xlu0 %2187
    %v2189 = vsub.f32 %v2181, %v2185
    %v2190 = vsub.f32 %v2182, %v2188
    %v2191 = vmul.f32 %v2189, 1.442695
    %v2192 = vpow.pop %v2191
    %v2193 = vmul.f32 %v2190, 1.442695
    %v2194 = vpow.pop %v2193
    %v2195 = vsel %vm70, %v2192, 0.0
    %2196 = vadd.xlane.f32.xlu0 %v2195
    %v2197 = vpop.xlane.xlu0 %2196
    %v2198 = vsel %vm70, %v2194, 0.0
    %2199 = vadd.xlane.f32.xlu0 %v2198
    %v2200 = vpop.xlane.xlu0 %2199
    %v2201 = vrcp.pop %v2197
    %v2202 = vrcp.pop %v2200
    %v2203 = vmul.f32 %v2192, %v2201
    %v2204 = vmul.f32 %v2194, %v2202
    %v2205 = vpack.c.bf16 %v2203, %v2203
    %v2206 = vpack.c.bf16 %v2204, %v2204
    %2207 = vrot.lane.b32.xlu0 %v1857, 56
    %v2208 = vpop.permute.xlu0 %2207
    %v2210 = vsel %vm70, %v2205, 0
    %v2213 = vsel %vm669, %v2208, 0
    %2215 = vmatprep.subr.bf16.mxu0 0
    %2216 = vmatpush1.bf16.msra.mxu0 %v2213
    %2217 = vmatprep.subr.bf16.mxu0 0
    %2218 = vmatpush1.bf16.msra.mxu0 0
    %2219 = vmatprep.subr.bf16.mxu0 0
    %2220 = vmatpush1.bf16.msra.mxu0 0
    %2221 = vmatprep.subr.bf16.mxu0 0
    %2222 = vmatpush1.bf16.msra.mxu0 0
    %2223 = vmatprep.subr.bf16.mxu0 0
    %2224 = vmatpush1.bf16.msra.mxu0 0
    %2225 = vmatprep.subr.bf16.mxu0 0
    %2226 = vmatpush1.bf16.msra.mxu0 0
    %2227 = vmatprep.subr.bf16.mxu0 0
    %2228 = vmatpush1.bf16.msra.mxu0 0
    %2229 = vmatprep.subr.bf16.mxu0 0
    %2230 = vmatpush1.bf16.msra.mxu0 0
    %2231 = vmatprep.subr.bf16.mxu0 0
    %2232 = vmatpush1.bf16.msra.mxu0 0
    %2233 = vmatprep.subr.bf16.mxu0 0
    %2234 = vmatpush1.bf16.msra.mxu0 0
    %2235 = vmatprep.subr.bf16.mxu0 0
    %2236 = vmatpush1.bf16.msra.mxu0 0
    %2237 = vmatprep.subr.bf16.mxu0 0
    %2238 = vmatpush1.bf16.msra.mxu0 0
    %2239 = vmatprep.subr.bf16.mxu0 0
    %2240 = vmatpush1.bf16.msra.mxu0 0
    %2241 = vmatprep.subr.bf16.mxu0 0
    %2242 = vmatpush1.bf16.msra.mxu0 0
    %2243 = vmatprep.subr.bf16.mxu0 0
    %2244 = vmatpush1.bf16.msra.mxu0 0
    %2245 = vmatprep.subr.bf16.mxu0 0
    %2246 = vmatpush1.bf16.msra.mxu0 0
    %2247 = vmatprep.mubr.bf16.mxu0 0
    %2248 = vmatmul.mubr.bf16.gmra.mrb[0].mxu0 %v2210
    %v2249 = vpop.f32.mrb[0].mxu0
    %v2250 = vadd.f32 0.0, %v2249
    %v2251 = vpop.f32.mrb[0].mxu0
    %v2252 = vpop.f32.mrb[0].mxu0
    %v2253 = vpop.f32.mrb[0].mxu0
    %2254 = vdwg.mxu0
    %2255 = vrot.lane.b32.xlu0 %v1858, 56
    %v2256 = vpop.permute.xlu0 %2255
    %v2258 = vsel %vm70, %v2206, 0
    %v2261 = vsel %vm669, %v2256, 0
    %2263 = vmatprep.subr.bf16.mxu0 0
    %2264 = vmatpush1.bf16.msra.mxu0 %v2261
    %2265 = vmatprep.subr.bf16.mxu0 0
    %2266 = vmatpush1.bf16.msra.mxu0 0
    %2267 = vmatprep.subr.bf16.mxu0 0
    %2268 = vmatpush1.bf16.msra.mxu0 0
    %2269 = vmatprep.subr.bf16.mxu0 0
    %2270 = vmatpush1.bf16.msra.mxu0 0
    %2271 = vmatprep.subr.bf16.mxu0 0
    %2272 = vmatpush1.bf16.msra.mxu0 0
    %2273 = vmatprep.subr.bf16.mxu0 0
    %2274 = vmatpush1.bf16.msra.mxu0 0
    %2275 = vmatprep.subr.bf16.mxu0 0
    %2276 = vmatpush1.bf16.msra.mxu0 0
    %2277 = vmatprep.subr.bf16.mxu0 0
    %2278 = vmatpush1.bf16.msra.mxu0 0
    %2279 = vmatprep.subr.bf16.mxu0 0
    %2280 = vmatpush1.bf16.msra.mxu0 0
    %2281 = vmatprep.subr.bf16.mxu0 0
    %2282 = vmatpush1.bf16.msra.mxu0 0
    %2283 = vmatprep.subr.bf16.mxu0 0
    %2284 = vmatpush1.bf16.msra.mxu0 0
    %2285 = vmatprep.subr.bf16.mxu0 0
    %2286 = vmatpush1.bf16.msra.mxu0 0
    %2287 = vmatprep.subr.bf16.mxu0 0
    %2288 = vmatpush1.bf16.msra.mxu0 0
    %2289 = vmatprep.subr.bf16.mxu0 0
    %2290 = vmatpush1.bf16.msra.mxu0 0
    %2291 = vmatprep.subr.bf16.mxu0 0
    %2292 = vmatpush1.bf16.msra.mxu0 0
    %2293 = vmatprep.subr.bf16.mxu0 0
    %2294 = vmatpush1.bf16.msra.mxu0 0
    %2295 = vmatprep.mubr.bf16.mxu0 0
    %2296 = vmatmul.mubr.bf16.gmra.mrb[0].mxu0 %v2258
    %v2297 = vpop.f32.mrb[0].mxu0
    %v2298 = vadd.f32 0.0, %v2297
    %v2299 = vpop.f32.mrb[0].mxu0
    %v2300 = vpop.f32.mrb[0].mxu0
    %v2301 = vpop.f32.mrb[0].mxu0
    %2302 = vdwg.mxu0
    %2303 = vrot.lane.b32.xlu0 %v1857, 112
    %v2304 = vpop.permute.xlu0 %2303
    %2305 = vrot.lane.b32.xlu0 %v1857, 80
    %v2306 = vpop.permute.xlu0 %2305
    %v2308 = vsel %vm70, %v2304, 0
    %v2311 = vsel %vm70, %v2306, 0
    %2313 = vmatprep.subr.bf16.mxu0 0
    %2314 = vmatpush1.bf16.xpose.msra.mxu0 %v2311
    %2315 = vmatprep.subr.bf16.mxu0 0
    %2316 = vmatpush1.bf16.xpose.msra.mxu0 0
    %2317 = vmatprep.subr.bf16.mxu0 0
    %2318 = vmatpush1.bf16.xpose.msra.mxu0 0
    %2319 = vmatprep.subr.bf16.mxu0 0
    %2320 = vmatpush1.bf16.xpose.msra.mxu0 0
    %2321 = vmatprep.subr.bf16.mxu0 0
    %2322 = vmatpush1.bf16.xpose.msra.mxu0 0
    %2323 = vmatprep.subr.bf16.mxu0 0
    %2324 = vmatpush1.bf16.xpose.msra.mxu0 0
    %2325 = vmatprep.subr.bf16.mxu0 0
    %2326 = vmatpush1.bf16.xpose.msra.mxu0 0
    %2327 = vmatprep.subr.bf16.mxu0 0
    %2328 = vmatpush1.bf16.xpose.msra.mxu0 0
    %2329 = vmatprep.subr.bf16.mxu0 0
    %2330 = vmatpush1.bf16.xpose.msra.mxu0 0
    %2331 = vmatprep.subr.bf16.mxu0 0
    %2332 = vmatpush1.bf16.xpose.msra.mxu0 0
    %2333 = vmatprep.subr.bf16.mxu0 0
    %2334 = vmatpush1.bf16.xpose.msra.mxu0 0
    %2335 = vmatprep.subr.bf16.mxu0 0
    %2336 = vmatpush1.bf16.xpose.msra.mxu0 0
    %2337 = vmatprep.subr.bf16.mxu0 0
    %2338 = vmatpush1.bf16.xpose.msra.mxu0 0
    %2339 = vmatprep.subr.bf16.mxu0 0
    %2340 = vmatpush1.bf16.xpose.msra.mxu0 0
    %2341 = vmatprep.subr.bf16.mxu0 0
    %2342 = vmatpush1.bf16.xpose.msra.mxu0 0
    %2343 = vmatprep.subr.bf16.mxu0 0
    %2344 = vmatpush1.bf16.xpose.msra.mxu0 0
    %2345 = vmatprep.mubr.bf16.mxu0 0
    %2346 = vmatmul.mubr.bf16.gmra.mrb[0].mxu0 %v2308
    %v2347 = vpop.f32.mrb[0].mxu0
    %v2348 = vadd.f32 0.0, %v2347
    %v2349 = vpop.f32.mrb[0].mxu0
    %v2350 = vpop.f32.mrb[0].mxu0
    %v2351 = vpop.f32.mrb[0].mxu0
    %2352 = vdwg.mxu0
    %2353 = vrot.lane.b32.xlu0 %v1858, 112
    %v2354 = vpop.permute.xlu0 %2353
    %2355 = vrot.lane.b32.xlu0 %v1858, 80
    %v2356 = vpop.permute.xlu0 %2355
    %v2358 = vsel %vm70, %v2354, 0
    %v2361 = vsel %vm70, %v2356, 0
    %2363 = vmatprep.subr.bf16.mxu0 0
    %2364 = vmatpush1.bf16.xpose.msra.mxu0 %v2361
    %2365 = vmatprep.subr.bf16.mxu0 0
    %2366 = vmatpush1.bf16.xpose.msra.mxu0 0
    %2367 = vmatprep.subr.bf16.mxu0 0
    %2368 = vmatpush1.bf16.xpose.msra.mxu0 0
    %2369 = vmatprep.subr.bf16.mxu0 0
    %2370 = vmatpush1.bf16.xpose.msra.mxu0 0
    %2371 = vmatprep.subr.bf16.mxu0 0
    %2372 = vmatpush1.bf16.xpose.msra.mxu0 0
    %2373 = vmatprep.subr.bf16.mxu0 0
    %2374 = vmatpush1.bf16.xpose.msra.mxu0 0
    %2375 = vmatprep.subr.bf16.mxu0 0
    %2376 = vmatpush1.bf16.xpose.msra.mxu0 0
    %2377 = vmatprep.subr.bf16.mxu0 0
    %2378 = vmatpush1.bf16.xpose.msra.mxu0 0
    %2379 = vmatprep.subr.bf16.mxu0 0
    %2380 = vmatpush1.bf16.xpose.msra.mxu0 0
    %2381 = vmatprep.subr.bf16.mxu0 0
    %2382 = vmatpush1.bf16.xpose.msra.mxu0 0
    %2383 = vmatprep.subr.bf16.mxu0 0
    %2384 = vmatpush1.bf16.xpose.msra.mxu0 0
    %2385 = vmatprep.subr.bf16.mxu0 0
    %2386 = vmatpush1.bf16.xpose.msra.mxu0 0
    %2387 = vmatprep.subr.bf16.mxu0 0
    %2388 = vmatpush1.bf16.xpose.msra.mxu0 0
    %2389 = vmatprep.subr.bf16.mxu0 0
    %2390 = vmatpush1.bf16.xpose.msra.mxu0 0
    %2391 = vmatprep.subr.bf16.mxu0 0
    %2392 = vmatpush1.bf16.xpose.msra.mxu0 0
    %2393 = vmatprep.subr.bf16.mxu0 0
    %2394 = vmatpush1.bf16.xpose.msra.mxu0 0
    %2395 = vmatprep.mubr.bf16.mxu0 0
    %2396 = vmatmul.mubr.bf16.gmra.mrb[0].mxu0 %v2358
    %v2397 = vpop.f32.mrb[0].mxu0
    %v2398 = vadd.f32 0.0, %v2397
    %v2399 = vpop.f32.mrb[0].mxu0
    %v2400 = vpop.f32.mrb[0].mxu0
    %v2401 = vpop.f32.mrb[0].mxu0
    %2402 = vdwg.mxu0
    %v2403 = vmul.f32 %v2348, 0.35355338
    %v2404 = vmul.f32 %v2398, 0.35355338
    %v2405 = vadd.f32 %v2403, %v461
    %v2406 = vadd.f32 %v2404, %v465
    %v2407 = vsel %vm70, %v2405, -inf
    %2408 = vmax.xlane.f32.xlu0 %v2407
    %v2409 = vpop.xlane.xlu0 %2408
    %v2410 = vsel %vm70, %v2406, -inf
    %2411 = vmax.xlane.f32.xlu0 %v2410
    %v2412 = vpop.xlane.xlu0 %2411
    %v2413 = vsub.f32 %v2405, %v2409
    %v2414 = vsub.f32 %v2406, %v2412
    %v2415 = vmul.f32 %v2413, 1.442695
    %v2416 = vpow.pop %v2415
    %v2417 = vmul.f32 %v2414, 1.442695
    %v2418 = vpow.pop %v2417
    %v2419 = vsel %vm70, %v2416, 0.0
    %2420 = vadd.xlane.f32.xlu0 %v2419
    %v2421 = vpop.xlane.xlu0 %2420
    %v2422 = vsel %vm70, %v2418, 0.0
    %2423 = vadd.xlane.f32.xlu0 %v2422
    %v2424 = vpop.xlane.xlu0 %2423
    %v2425 = vrcp.pop %v2421
    %v2426 = vrcp.pop %v2424
    %v2427 = vmul.f32 %v2416, %v2425
    %v2428 = vmul.f32 %v2418, %v2426
    %v2429 = vpack.c.bf16 %v2427, %v2427
    %v2430 = vpack.c.bf16 %v2428, %v2428
    %2431 = vrot.lane.b32.xlu0 %v1857, 48
    %v2432 = vpop.permute.xlu0 %2431
    %v2434 = vsel %vm70, %v2429, 0
    %v2437 = vsel %vm669, %v2432, 0
    %2439 = vmatprep.subr.bf16.mxu0 0
    %2440 = vmatpush1.bf16.msra.mxu0 %v2437
    %2441 = vmatprep.subr.bf16.mxu0 0
    %2442 = vmatpush1.bf16.msra.mxu0 0
    %2443 = vmatprep.subr.bf16.mxu0 0
    %2444 = vmatpush1.bf16.msra.mxu0 0
    %2445 = vmatprep.subr.bf16.mxu0 0
    %2446 = vmatpush1.bf16.msra.mxu0 0
    %2447 = vmatprep.subr.bf16.mxu0 0
    %2448 = vmatpush1.bf16.msra.mxu0 0
    %2449 = vmatprep.subr.bf16.mxu0 0
    %2450 = vmatpush1.bf16.msra.mxu0 0
    %2451 = vmatprep.subr.bf16.mxu0 0
    %2452 = vmatpush1.bf16.msra.mxu0 0
    %2453 = vmatprep.subr.bf16.mxu0 0
    %2454 = vmatpush1.bf16.msra.mxu0 0
    %2455 = vmatprep.subr.bf16.mxu0 0
    %2456 = vmatpush1.bf16.msra.mxu0 0
    %2457 = vmatprep.subr.bf16.mxu0 0
    %2458 = vmatpush1.bf16.msra.mxu0 0
    %2459 = vmatprep.subr.bf16.mxu0 0
    %2460 = vmatpush1.bf16.msra.mxu0 0
    %2461 = vmatprep.subr.bf16.mxu0 0
    %2462 = vmatpush1.bf16.msra.mxu0 0
    %2463 = vmatprep.subr.bf16.mxu0 0
    %2464 = vmatpush1.bf16.msra.mxu0 0
    %2465 = vmatprep.subr.bf16.mxu0 0
    %2466 = vmatpush1.bf16.msra.mxu0 0
    %2467 = vmatprep.subr.bf16.mxu0 0
    %2468 = vmatpush1.bf16.msra.mxu0 0
    %2469 = vmatprep.subr.bf16.mxu0 0
    %2470 = vmatpush1.bf16.msra.mxu0 0
    %2471 = vmatprep.mubr.bf16.mxu0 0
    %2472 = vmatmul.mubr.bf16.gmra.mrb[0].mxu0 %v2434
    %v2473 = vpop.f32.mrb[0].mxu0
    %v2474 = vadd.f32 0.0, %v2473
    %v2475 = vpop.f32.mrb[0].mxu0
    %v2476 = vpop.f32.mrb[0].mxu0
    %v2477 = vpop.f32.mrb[0].mxu0
    %2478 = vdwg.mxu0
    %2479 = vrot.lane.b32.xlu0 %v1858, 48
    %v2480 = vpop.permute.xlu0 %2479
    %v2482 = vsel %vm70, %v2430, 0
    %v2485 = vsel %vm669, %v2480, 0
    %2487 = vmatprep.subr.bf16.mxu0 0
    %2488 = vmatpush1.bf16.msra.mxu0 %v2485
    %2489 = vmatprep.subr.bf16.mxu0 0
    %2490 = vmatpush1.bf16.msra.mxu0 0
    %2491 = vmatprep.subr.bf16.mxu0 0
    %2492 = vmatpush1.bf16.msra.mxu0 0
    %2493 = vmatprep.subr.bf16.mxu0 0
    %2494 = vmatpush1.bf16.msra.mxu0 0
    %2495 = vmatprep.subr.bf16.mxu0 0
    %2496 = vmatpush1.bf16.msra.mxu0 0
    %2497 = vmatprep.subr.bf16.mxu0 0
    %2498 = vmatpush1.bf16.msra.mxu0 0
    %2499 = vmatprep.subr.bf16.mxu0 0
    %2500 = vmatpush1.bf16.msra.mxu0 0
    %2501 = vmatprep.subr.bf16.mxu0 0
    %2502 = vmatpush1.bf16.msra.mxu0 0
    %2503 = vmatprep.subr.bf16.mxu0 0
    %2504 = vmatpush1.bf16.msra.mxu0 0
    %2505 = vmatprep.subr.bf16.mxu0 0
    %2506 = vmatpush1.bf16.msra.mxu0 0
    %2507 = vmatprep.subr.bf16.mxu0 0
    %2508 = vmatpush1.bf16.msra.mxu0 0
    %2509 = vmatprep.subr.bf16.mxu0 0
    %2510 = vmatpush1.bf16.msra.mxu0 0
    %2511 = vmatprep.subr.bf16.mxu0 0
    %2512 = vmatpush1.bf16.msra.mxu0 0
    %2513 = vmatprep.subr.bf16.mxu0 0
    %2514 = vmatpush1.bf16.msra.mxu0 0
    %2515 = vmatprep.subr.bf16.mxu0 0
    %2516 = vmatpush1.bf16.msra.mxu0 0
    %2517 = vmatprep.subr.bf16.mxu0 0
    %2518 = vmatpush1.bf16.msra.mxu0 0
    %2519 = vmatprep.mubr.bf16.mxu0 0
    %2520 = vmatmul.mubr.bf16.gmra.mrb[0].mxu0 %v2482
    %v2521 = vpop.f32.mrb[0].mxu0
    %v2522 = vadd.f32 0.0, %v2521
    %v2523 = vpop.f32.mrb[0].mxu0
    %v2524 = vpop.f32.mrb[0].mxu0
    %v2525 = vpop.f32.mrb[0].mxu0
    %2526 = vdwg.mxu0
    %2527 = vrot.lane.b32.xlu0 %v1857, 104
    %v2528 = vpop.permute.xlu0 %2527
    %2529 = vrot.lane.b32.xlu0 %v1857, 72
    %v2530 = vpop.permute.xlu0 %2529
    %v2532 = vsel %vm70, %v2528, 0
    %v2535 = vsel %vm70, %v2530, 0
    %2537 = vmatprep.subr.bf16.mxu0 0
    %2538 = vmatpush1.bf16.xpose.msra.mxu0 %v2535
    %2539 = vmatprep.subr.bf16.mxu0 0
    %2540 = vmatpush1.bf16.xpose.msra.mxu0 0
    %2541 = vmatprep.subr.bf16.mxu0 0
    %2542 = vmatpush1.bf16.xpose.msra.mxu0 0
    %2543 = vmatprep.subr.bf16.mxu0 0
    %2544 = vmatpush1.bf16.xpose.msra.mxu0 0
    %2545 = vmatprep.subr.bf16.mxu0 0
    %2546 = vmatpush1.bf16.xpose.msra.mxu0 0
    %2547 = vmatprep.subr.bf16.mxu0 0
    %2548 = vmatpush1.bf16.xpose.msra.mxu0 0
    %2549 = vmatprep.subr.bf16.mxu0 0
    %2550 = vmatpush1.bf16.xpose.msra.mxu0 0
    %2551 = vmatprep.subr.bf16.mxu0 0
    %2552 = vmatpush1.bf16.xpose.msra.mxu0 0
    %2553 = vmatprep.subr.bf16.mxu0 0
    %2554 = vmatpush1.bf16.xpose.msra.mxu0 0
    %2555 = vmatprep.subr.bf16.mxu0 0
    %2556 = vmatpush1.bf16.xpose.msra.mxu0 0
    %2557 = vmatprep.subr.bf16.mxu0 0
    %2558 = vmatpush1.bf16.xpose.msra.mxu0 0
    %2559 = vmatprep.subr.bf16.mxu0 0
    %2560 = vmatpush1.bf16.xpose.msra.mxu0 0
    %2561 = vmatprep.subr.bf16.mxu0 0
    %2562 = vmatpush1.bf16.xpose.msra.mxu0 0
    %2563 = vmatprep.subr.bf16.mxu0 0
    %2564 = vmatpush1.bf16.xpose.msra.mxu0 0
    %2565 = vmatprep.subr.bf16.mxu0 0
    %2566 = vmatpush1.bf16.xpose.msra.mxu0 0
    %2567 = vmatprep.subr.bf16.mxu0 0
    %2568 = vmatpush1.bf16.xpose.msra.mxu0 0
    %2569 = vmatprep.mubr.bf16.mxu0 0
    %2570 = vmatmul.mubr.bf16.gmra.mrb[0].mxu0 %v2532
    %v2571 = vpop.f32.mrb[0].mxu0
    %v2572 = vadd.f32 0.0, %v2571
    %v2573 = vpop.f32.mrb[0].mxu0
    %v2574 = vpop.f32.mrb[0].mxu0
    %v2575 = vpop.f32.mrb[0].mxu0
    %2576 = vdwg.mxu0
    %2577 = vrot.lane.b32.xlu0 %v1858, 104
    %v2578 = vpop.permute.xlu0 %2577
    %2579 = vrot.lane.b32.xlu0 %v1858, 72
    %v2580 = vpop.permute.xlu0 %2579
    %v2582 = vsel %vm70, %v2578, 0
    %v2585 = vsel %vm70, %v2580, 0
    %2587 = vmatprep.subr.bf16.mxu0 0
    %2588 = vmatpush1.bf16.xpose.msra.mxu0 %v2585
    %2589 = vmatprep.subr.bf16.mxu0 0
    %2590 = vmatpush1.bf16.xpose.msra.mxu0 0
    %2591 = vmatprep.subr.bf16.mxu0 0
    %2592 = vmatpush1.bf16.xpose.msra.mxu0 0
    %2593 = vmatprep.subr.bf16.mxu0 0
    %2594 = vmatpush1.bf16.xpose.msra.mxu0 0
    %2595 = vmatprep.subr.bf16.mxu0 0
    %2596 = vmatpush1.bf16.xpose.msra.mxu0 0
    %2597 = vmatprep.subr.bf16.mxu0 0
    %2598 = vmatpush1.bf16.xpose.msra.mxu0 0
    %2599 = vmatprep.subr.bf16.mxu0 0
    %2600 = vmatpush1.bf16.xpose.msra.mxu0 0
    %2601 = vmatprep.subr.bf16.mxu0 0
    %2602 = vmatpush1.bf16.xpose.msra.mxu0 0
    %2603 = vmatprep.subr.bf16.mxu0 0
    %2604 = vmatpush1.bf16.xpose.msra.mxu0 0
    %2605 = vmatprep.subr.bf16.mxu0 0
    %2606 = vmatpush1.bf16.xpose.msra.mxu0 0
    %2607 = vmatprep.subr.bf16.mxu0 0
    %2608 = vmatpush1.bf16.xpose.msra.mxu0 0
    %2609 = vmatprep.subr.bf16.mxu0 0
    %2610 = vmatpush1.bf16.xpose.msra.mxu0 0
    %2611 = vmatprep.subr.bf16.mxu0 0
    %2612 = vmatpush1.bf16.xpose.msra.mxu0 0
    %2613 = vmatprep.subr.bf16.mxu0 0
    %2614 = vmatpush1.bf16.xpose.msra.mxu0 0
    %2615 = vmatprep.subr.bf16.mxu0 0
    %2616 = vmatpush1.bf16.xpose.msra.mxu0 0
    %2617 = vmatprep.subr.bf16.mxu0 0
    %2618 = vmatpush1.bf16.xpose.msra.mxu0 0
    %2619 = vmatprep.mubr.bf16.mxu0 0
    %2620 = vmatmul.mubr.bf16.gmra.mrb[0].mxu0 %v2582
    %v2621 = vpop.f32.mrb[0].mxu0
    %v2622 = vadd.f32 0.0, %v2621
    %v2623 = vpop.f32.mrb[0].mxu0
    %v2624 = vpop.f32.mrb[0].mxu0
    %v2625 = vpop.f32.mrb[0].mxu0
    %2626 = vdwg.mxu0
    %v2627 = vmul.f32 %v2572, 0.35355338
    %v2628 = vmul.f32 %v2622, 0.35355338
    %v2629 = vadd.f32 %v2627, %v461
    %v2630 = vadd.f32 %v2628, %v465
    %v2631 = vsel %vm70, %v2629, -inf
    %2632 = vmax.xlane.f32.xlu0 %v2631
    %v2633 = vpop.xlane.xlu0 %2632
    %v2634 = vsel %vm70, %v2630, -inf
    %2635 = vmax.xlane.f32.xlu0 %v2634
    %v2636 = vpop.xlane.xlu0 %2635
    %v2637 = vsub.f32 %v2629, %v2633
    %v2638 = vsub.f32 %v2630, %v2636
    %v2639 = vmul.f32 %v2637, 1.442695
    %v2640 = vpow.pop %v2639
    %v2641 = vmul.f32 %v2638, 1.442695
    %v2642 = vpow.pop %v2641
    %v2643 = vsel %vm70, %v2640, 0.0
    %2644 = vadd.xlane.f32.xlu0 %v2643
    %v2645 = vpop.xlane.xlu0 %2644
    %v2646 = vsel %vm70, %v2642, 0.0
    %2647 = vadd.xlane.f32.xlu0 %v2646
    %v2648 = vpop.xlane.xlu0 %2647
    %v2649 = vrcp.pop %v2645
    %v2650 = vrcp.pop %v2648
    %v2651 = vmul.f32 %v2640, %v2649
    %v2652 = vmul.f32 %v2642, %v2650
    %v2653 = vpack.c.bf16 %v2651, %v2651
    %v2654 = vpack.c.bf16 %v2652, %v2652
    %2655 = vrot.lane.b32.xlu0 %v1857, 40
    %v2656 = vpop.permute.xlu0 %2655
    %v2658 = vsel %vm70, %v2653, 0
    %v2661 = vsel %vm669, %v2656, 0
    %2663 = vmatprep.subr.bf16.mxu0 0
    %2664 = vmatpush1.bf16.msra.mxu0 %v2661
    %2665 = vmatprep.subr.bf16.mxu0 0
    %2666 = vmatpush1.bf16.msra.mxu0 0
    %2667 = vmatprep.subr.bf16.mxu0 0
    %2668 = vmatpush1.bf16.msra.mxu0 0
    %2669 = vmatprep.subr.bf16.mxu0 0
    %2670 = vmatpush1.bf16.msra.mxu0 0
    %2671 = vmatprep.subr.bf16.mxu0 0
    %2672 = vmatpush1.bf16.msra.mxu0 0
    %2673 = vmatprep.subr.bf16.mxu0 0
    %2674 = vmatpush1.bf16.msra.mxu0 0
    %2675 = vmatprep.subr.bf16.mxu0 0
    %2676 = vmatpush1.bf16.msra.mxu0 0
    %2677 = vmatprep.subr.bf16.mxu0 0
    %2678 = vmatpush1.bf16.msra.mxu0 0
    %2679 = vmatprep.subr.bf16.mxu0 0
    %2680 = vmatpush1.bf16.msra.mxu0 0
    %2681 = vmatprep.subr.bf16.mxu0 0
    %2682 = vmatpush1.bf16.msra.mxu0 0
    %2683 = vmatprep.subr.bf16.mxu0 0
    %2684 = vmatpush1.bf16.msra.mxu0 0
    %2685 = vmatprep.subr.bf16.mxu0 0
    %2686 = vmatpush1.bf16.msra.mxu0 0
    %2687 = vmatprep.subr.bf16.mxu0 0
    %2688 = vmatpush1.bf16.msra.mxu0 0
    %2689 = vmatprep.subr.bf16.mxu0 0
    %2690 = vmatpush1.bf16.msra.mxu0 0
    %2691 = vmatprep.subr.bf16.mxu0 0
    %2692 = vmatpush1.bf16.msra.mxu0 0
    %2693 = vmatprep.subr.bf16.mxu0 0
    %2694 = vmatpush1.bf16.msra.mxu0 0
    %2695 = vmatprep.mubr.bf16.mxu0 0
    %2696 = vmatmul.mubr.bf16.gmra.mrb[0].mxu0 %v2658
    %v2697 = vpop.f32.mrb[0].mxu0
    %v2698 = vadd.f32 0.0, %v2697
    %v2699 = vpop.f32.mrb[0].mxu0
    %v2700 = vpop.f32.mrb[0].mxu0
    %v2701 = vpop.f32.mrb[0].mxu0
    %2702 = vdwg.mxu0
    %2703 = vrot.lane.b32.xlu0 %v1858, 40
    %v2704 = vpop.permute.xlu0 %2703
    %v2706 = vsel %vm70, %v2654, 0
    %v2709 = vsel %vm669, %v2704, 0
    %2711 = vmatprep.subr.bf16.mxu0 0
    %2712 = vmatpush1.bf16.msra.mxu0 %v2709
    %2713 = vmatprep.subr.bf16.mxu0 0
    %2714 = vmatpush1.bf16.msra.mxu0 0
    %2715 = vmatprep.subr.bf16.mxu0 0
    %2716 = vmatpush1.bf16.msra.mxu0 0
    %2717 = vmatprep.subr.bf16.mxu0 0
    %2718 = vmatpush1.bf16.msra.mxu0 0
    %2719 = vmatprep.subr.bf16.mxu0 0
    %2720 = vmatpush1.bf16.msra.mxu0 0
    %2721 = vmatprep.subr.bf16.mxu0 0
    %2722 = vmatpush1.bf16.msra.mxu0 0
    %2723 = vmatprep.subr.bf16.mxu0 0
    %2724 = vmatpush1.bf16.msra.mxu0 0
    %2725 = vmatprep.subr.bf16.mxu0 0
    %2726 = vmatpush1.bf16.msra.mxu0 0
    %2727 = vmatprep.subr.bf16.mxu0 0
    %2728 = vmatpush1.bf16.msra.mxu0 0
    %2729 = vmatprep.subr.bf16.mxu0 0
    %2730 = vmatpush1.bf16.msra.mxu0 0
    %2731 = vmatprep.subr.bf16.mxu0 0
    %2732 = vmatpush1.bf16.msra.mxu0 0
    %2733 = vmatprep.subr.bf16.mxu0 0
    %2734 = vmatpush1.bf16.msra.mxu0 0
    %2735 = vmatprep.subr.bf16.mxu0 0
    %2736 = vmatpush1.bf16.msra.mxu0 0
    %2737 = vmatprep.subr.bf16.mxu0 0
    %2738 = vmatpush1.bf16.msra.mxu0 0
    %2739 = vmatprep.subr.bf16.mxu0 0
    %2740 = vmatpush1.bf16.msra.mxu0 0
    %2741 = vmatprep.subr.bf16.mxu0 0
    %2742 = vmatpush1.bf16.msra.mxu0 0
    %2743 = vmatprep.mubr.bf16.mxu0 0
    %2744 = vmatmul.mubr.bf16.gmra.mrb[0].mxu0 %v2706
    %v2745 = vpop.f32.mrb[0].mxu0
    %v2746 = vadd.f32 0.0, %v2745
    %v2747 = vpop.f32.mrb[0].mxu0
    %v2748 = vpop.f32.mrb[0].mxu0
    %v2749 = vpop.f32.mrb[0].mxu0
    %2750 = vdwg.mxu0
    %2753 = vrot.lane.b32.xlu0 %v2250, 8
    %v2754 = vpop.permute.xlu0 %2753
    %2755 = vrot.lane.b32.xlu0 %v2298, 8
    %v2756 = vpop.permute.xlu0 %2755
    %2761 = vrot.lane.b32.xlu0 %v2474, 16
    %v2762 = vpop.permute.xlu0 %2761
    %2763 = vrot.lane.b32.xlu0 %v2522, 16
    %v2764 = vpop.permute.xlu0 %2763
    %2769 = vrot.lane.b32.xlu0 %v2698, 24
    %v2770 = vpop.permute.xlu0 %2769
    %2771 = vrot.lane.b32.xlu0 %v2746, 24
    %v2772 = vpop.permute.xlu0 %2771
    %v2775 = vsel %vm70, %v2026, %v2754
    %v2776 = vsel %vm70, %v2074, %v2756
    %v2777 = vsel %vm1459, %v2775, %v2762
    %v2778 = vsel %vm1459, %v2776, %v2764
    %v2779 = vsel %vm1462, %v2777, %v2770
    %v2780 = vsel %vm1462, %v2778, %v2772
    %v2781 = vld [vmem:[%s1786] sm:$0xf]
    %v2782 = vld [vmem:[%s1786 + $0x8] sm:$0xf]
    %v2783 = vld [vmem:[%s1786 + $0x10] sm:$0xf]
    %v2784 = vld [vmem:[%s1786 + $0x18] sm:$0xf]
    %v2785 = vpack.c.bf16 %v2780, %v2779
    %v2786 = vld [vmem:[%s6 + $0xd] sm:$0x1]
    %v2787 = vlaneseq
    %v2788 = vshrl.u32 %v2787, 7
    %v2789 = vsub.s32 0, %v2788
    %v2790 = vrot.slane %v2786, %v2789
    %v2795 = vunpack.c.l.b16 %v2781
    %v2796 = vunpack.c.l.b16 %v2782
    %v2797 = vunpack.c.l.b16 %v2783
    %v2798 = vunpack.c.l.b16 %v2784
    %v2799 = vpack.c.b16 %v2796, %v2795
    %v2800 = vpack.c.b16 %v2798, %v2797
    %2801 = vrot.lane.b32.xlu0 %v2799, 32
    %v2802 = vpop.permute.xlu0 %2801
    %2803 = vrot.lane.b32.xlu0 %v2800, 32
    %v2804 = vpop.permute.xlu0 %2803
    %v2808 = vsel %vm410, %v2785, 0
    %2810 = vmatprep.subr.bf16.mxu0 0
    %2811 = vmatpush1.bf16.msra.mxu0 %v2802
    %2812 = vmatprep.subr.bf16.mxu0 0
    %2813 = vmatpush1.bf16.msra.mxu0 %v2804
    %2814 = vmatprep.subr.bf16.mxu0 0
    %2815 = vmatpush1.bf16.msra.mxu0 0
    %2816 = vmatprep.subr.bf16.mxu0 0
    %2817 = vmatpush1.bf16.msra.mxu0 0
    %2818 = vmatprep.subr.bf16.mxu0 0
    %2819 = vmatpush1.bf16.msra.mxu0 0
    %2820 = vmatprep.subr.bf16.mxu0 0
    %2821 = vmatpush1.bf16.msra.mxu0 0
    %2822 = vmatprep.subr.bf16.mxu0 0
    %2823 = vmatpush1.bf16.msra.mxu0 0
    %2824 = vmatprep.subr.bf16.mxu0 0
    %2825 = vmatpush1.bf16.msra.mxu0 0
    %2826 = vmatprep.subr.bf16.mxu0 0
    %2827 = vmatpush1.bf16.msra.mxu0 0
    %2828 = vmatprep.subr.bf16.mxu0 0
    %2829 = vmatpush1.bf16.msra.mxu0 0
    %2830 = vmatprep.subr.bf16.mxu0 0
    %2831 = vmatpush1.bf16.msra.mxu0 0
    %2832 = vmatprep.subr.bf16.mxu0 0
    %2833 = vmatpush1.bf16.msra.mxu0 0
    %2834 = vmatprep.subr.bf16.mxu0 0
    %2835 = vmatpush1.bf16.msra.mxu0 0
    %2836 = vmatprep.subr.bf16.mxu0 0
    %2837 = vmatpush1.bf16.msra.mxu0 0
    %2838 = vmatprep.subr.bf16.mxu0 0
    %2839 = vmatpush1.bf16.msra.mxu0 0
    %2840 = vmatprep.subr.bf16.mxu0 0
    %2841 = vmatpush1.bf16.msra.mxu0 0
    %2842 = vmatprep.mubr.bf16.mxu0 0
    %2843 = vmatmul.mubr.bf16.gmra.mrb[0].mxu0 %v2808
    %v2844 = vpop.f32.mrb[0].mxu0
    %v2845 = vadd.f32 %v2790, %v2844
    %v2846 = vpop.f32.mrb[0].mxu0
    %v2847 = vpop.f32.mrb[0].mxu0
    %v2848 = vadd.f32 %v2790, %v2847
    %v2849 = vpop.f32.mrb[0].mxu0
    %2850 = vdwg.mxu0
    %v2851 = vadd.f32 %v1784, %v2845
    %v2852 = vadd.f32 %v1785, %v2848
    %v2853 = vld [vmem:[%s6 + $0xe] sm:$0x1]
    %v2854 = vld [vmem:[%s6 + $0xf] sm:$0x1]
    %v2855 = vsel %vm410, %v2851, 0.0
    %2856 = vadd.xlane.f32.xlu0 %v2855
    %v2857 = vpop.xlane.xlu0 %2856
    %v2858 = vsel %vm410, %v2852, 0.0
    %2859 = vadd.xlane.f32.xlu0 %v2858
    %v2860 = vpop.xlane.xlu0 %2859
    %v2861 = vmul.f32 %v2857, %v417
    %v2862 = vmul.f32 %v2860, %v417
    %v2863 = vsub.f32 %v2851, %v2861
    %v2864 = vsub.f32 %v2852, %v2862
    %v2865 = vmul.f32 %v2863, %v2863
    %v2866 = vmul.f32 %v2864, %v2864
    %v2867 = vsel %vm410, %v2865, 0.0
    %2868 = vadd.xlane.f32.xlu0 %v2867
    %v2869 = vpop.xlane.xlu0 %2868
    %v2870 = vsel %vm410, %v2866, 0.0
    %2871 = vadd.xlane.f32.xlu0 %v2870
    %v2872 = vpop.xlane.xlu0 %2871
    %v2873 = vmul.f32 %v2869, %v417
    %v2874 = vmul.f32 %v2872, %v417
    %v2875 = vadd.f32 %v2873, 1e-05
    %v2876 = vadd.f32 %v2874, 1e-05
    %v2877 = vrsqrt.pop %v2875
    %v2878 = vrsqrt.pop %v2876
    %v2879 = vmul.f32 %v2863, %v2877
    %v2880 = vmul.f32 %v2864, %v2878
    %v2881 = vlaneseq
    %v2882 = vshrl.u32 %v2881, 7
    %v2883 = vsub.s32 0, %v2882
    %v2884 = vrot.slane %v2853, %v2883
    %v2885 = vmul.f32 %v2879, %v2884
    %v2886 = vmul.f32 %v2880, %v2884
    %v2887 = vlaneseq
    %v2888 = vshrl.u32 %v2887, 7
    %v2889 = vsub.s32 0, %v2888
    %v2890 = vrot.slane %v2854, %v2889
    %v2891 = vadd.f32 %v2885, %v2890
    %v2892 = vadd.f32 %v2886, %v2890
    %v2893 = vld [vmem:[%s1786 + $0x4] sm:$0xf]
    %v2894 = vld [vmem:[%s1786 + $0xc] sm:$0xf]
    %v2895 = vld [vmem:[%s1786 + $0x14] sm:$0xf]
    %v2896 = vld [vmem:[%s1786 + $0x1c] sm:$0xf]
    %v2897 = vpack.c.bf16 %v2892, %v2891
    %v2898 = vld [vmem:[%s6 + $0x10] sm:$0x1]
    %v2899 = vlaneseq
    %v2900 = vshrl.u32 %v2899, 7
    %v2901 = vsub.s32 0, %v2900
    %v2902 = vrot.slane %v2898, %v2901
    %v2907 = vunpack.c.l.b16 %v2893
    %v2908 = vunpack.c.l.b16 %v2894
    %v2909 = vunpack.c.l.b16 %v2895
    %v2910 = vunpack.c.l.b16 %v2896
    %v2911 = vpack.c.b16 %v2908, %v2907
    %v2912 = vpack.c.b16 %v2910, %v2909
    %v2916 = vsel %vm410, %v2897, 0
    %2918 = vmatprep.subr.bf16.mxu0 0
    %2919 = vmatpush1.bf16.msra.mxu0 %v2911
    %2920 = vmatprep.subr.bf16.mxu0 0
    %2921 = vmatpush1.bf16.msra.mxu0 %v2912
    %2922 = vmatprep.subr.bf16.mxu0 0
    %2923 = vmatpush1.bf16.msra.mxu0 0
    %2924 = vmatprep.subr.bf16.mxu0 0
    %2925 = vmatpush1.bf16.msra.mxu0 0
    %2926 = vmatprep.subr.bf16.mxu0 0
    %2927 = vmatpush1.bf16.msra.mxu0 0
    %2928 = vmatprep.subr.bf16.mxu0 0
    %2929 = vmatpush1.bf16.msra.mxu0 0
    %2930 = vmatprep.subr.bf16.mxu0 0
    %2931 = vmatpush1.bf16.msra.mxu0 0
    %2932 = vmatprep.subr.bf16.mxu0 0
    %2933 = vmatpush1.bf16.msra.mxu0 0
    %2934 = vmatprep.subr.bf16.mxu0 0
    %2935 = vmatpush1.bf16.msra.mxu0 0
    %2936 = vmatprep.subr.bf16.mxu0 0
    %2937 = vmatpush1.bf16.msra.mxu0 0
    %2938 = vmatprep.subr.bf16.mxu0 0
    %2939 = vmatpush1.bf16.msra.mxu0 0
    %2940 = vmatprep.subr.bf16.mxu0 0
    %2941 = vmatpush1.bf16.msra.mxu0 0
    %2942 = vmatprep.subr.bf16.mxu0 0
    %2943 = vmatpush1.bf16.msra.mxu0 0
    %2944 = vmatprep.subr.bf16.mxu0 0
    %2945 = vmatpush1.bf16.msra.mxu0 0
    %2946 = vmatprep.subr.bf16.mxu0 0
    %2947 = vmatpush1.bf16.msra.mxu0 0
    %2948 = vmatprep.subr.bf16.mxu0 0
    %2949 = vmatpush1.bf16.msra.mxu0 0
    %2950 = vmatprep.mubr.bf16.mxu0 0
    %2951 = vmatmul.mubr.bf16.gmra.mrb[0].mxu0 %v2916
    %v2952 = vpop.f32.mrb[0].mxu0
    %v2953 = vadd.f32 %v2902, %v2952
    %v2954 = vpop.f32.mrb[0].mxu0
    %v2955 = vpop.f32.mrb[0].mxu0
    %v2956 = vadd.f32 %v2902, %v2955
    %v2957 = vpop.f32.mrb[0].mxu0
    %2958 = vdwg.mxu0
    %v2959 = vmul.f32 %v2953, 0.5
    %v2960 = vmul.f32 %v2956, 0.5
    %v2961 = vmul.f32 %v2953, 0.044715
    %v2962 = vmul.f32 %v2956, 0.044715
    %v2963 = vmul.f32 %v2961, %v2953
    %v2964 = vmul.f32 %v2962, %v2956
    %v2965 = vmul.f32 %v2963, %v2953
    %v2966 = vmul.f32 %v2964, %v2956
    %v2967 = vadd.f32 %v2953, %v2965
    %v2968 = vadd.f32 %v2956, %v2966
    %v2969 = vmul.f32 %v2967, 0.7978846
    %v2970 = vmul.f32 %v2968, 0.7978846
    %v2971 = vtanh.pop %v2969
    %v2972 = vtanh.pop %v2970
    %v2973 = vadd.f32 %v2971, 1.0
    %v2974 = vadd.f32 %v2972, 1.0
    %v2975 = vmul.f32 %v2959, %v2973
    %v2976 = vmul.f32 %v2960, %v2974
    %s2977 = scalar_lea.vmem %s5, 32
    %v2978 = vld [vmem:[%s2977] sm:$0xf]
    %v2979 = vld [vmem:[%s2977 + $0x4] sm:$0xf]
    %v2980 = vld [vmem:[%s2977 + $0x8] sm:$0xf]
    %v2981 = vld [vmem:[%s2977 + $0xc] sm:$0xf]
    %v2982 = vld [vmem:[%s2977 + $0x10] sm:$0xf]
    %v2983 = vld [vmem:[%s2977 + $0x14] sm:$0xf]
    %v2984 = vld [vmem:[%s2977 + $0x18] sm:$0xf]
    %v2985 = vld [vmem:[%s2977 + $0x1c] sm:$0xf]
    %v2986 = vpack.c.bf16 %v2976, %v2975
    %v2987 = vld [vmem:[%s6 + $0x11] sm:$0x1]
    %v2988 = vlaneseq
    %v2989 = vshrl.u32 %v2988, 7
    %v2990 = vsub.s32 0, %v2989
    %v2991 = vrot.slane %v2987, %v2990
    %v3000 = vunpack.c.l.b16 %v2978
    %v3001 = vunpack.c.l.b16 %v2979
    %v3002 = vunpack.c.l.b16 %v2980
    %v3003 = vunpack.c.l.b16 %v2981
    %v3004 = vunpack.c.l.b16 %v2982
    %v3005 = vunpack.c.l.b16 %v2983
    %v3006 = vunpack.c.l.b16 %v2984
    %v3007 = vunpack.c.l.b16 %v2985
    %v3008 = vpack.c.b16 %v3001, %v3000
    %v3009 = vpack.c.b16 %v3003, %v3002
    %v3010 = vpack.c.b16 %v3005, %v3004
    %v3011 = vpack.c.b16 %v3007, %v3006
    %v3017 = vsel %vm1699, %v2986, 0
    %3019 = vmatprep.subr.bf16.mxu0 0
    %3020 = vmatpush1.bf16.msra.mxu0 %v3008
    %3021 = vmatprep.subr.bf16.mxu0 0
    %3022 = vmatpush1.bf16.msra.mxu0 %v3009
    %3023 = vmatprep.subr.bf16.mxu0 0
    %3024 = vmatpush1.bf16.msra.mxu0 %v3010
    %3025 = vmatprep.subr.bf16.mxu0 0
    %3026 = vmatpush1.bf16.msra.mxu0 %v3011
    %3027 = vmatprep.subr.bf16.mxu0 0
    %3028 = vmatpush1.bf16.msra.mxu0 0
    %3029 = vmatprep.subr.bf16.mxu0 0
    %3030 = vmatpush1.bf16.msra.mxu0 0
    %3031 = vmatprep.subr.bf16.mxu0 0
    %3032 = vmatpush1.bf16.msra.mxu0 0
    %3033 = vmatprep.subr.bf16.mxu0 0
    %3034 = vmatpush1.bf16.msra.mxu0 0
    %3035 = vmatprep.subr.bf16.mxu0 0
    %3036 = vmatpush1.bf16.msra.mxu0 0
    %3037 = vmatprep.subr.bf16.mxu0 0
    %3038 = vmatpush1.bf16.msra.mxu0 0
    %3039 = vmatprep.subr.bf16.mxu0 0
    %3040 = vmatpush1.bf16.msra.mxu0 0
    %3041 = vmatprep.subr.bf16.mxu0 0
    %3042 = vmatpush1.bf16.msra.mxu0 0
    %3043 = vmatprep.subr.bf16.mxu0 0
    %3044 = vmatpush1.bf16.msra.mxu0 0
    %3045 = vmatprep.subr.bf16.mxu0 0
    %3046 = vmatpush1.bf16.msra.mxu0 0
    %3047 = vmatprep.subr.bf16.mxu0 0
    %3048 = vmatpush1.bf16.msra.mxu0 0
    %3049 = vmatprep.subr.bf16.mxu0 0
    %3050 = vmatpush1.bf16.msra.mxu0 0
    %3051 = vmatprep.mubr.bf16.mxu0 0
    %3052 = vmatmul.mubr.bf16.gmra.mrb[0].mxu0 %v3017
    %v3053 = vpop.f32.mrb[0].mxu0
    %v3054 = vadd.f32 %v2991, %v3053
    %v3055 = vpop.f32.mrb[0].mxu0
    %v3056 = vpop.f32.mrb[0].mxu0
    %v3057 = vadd.f32 %v2991, %v3056
    %v3058 = vpop.f32.mrb[0].mxu0
    %3059 = vdwg.mxu0
    %v3060 = vadd.f32 %v2891, %v3054
    %v3061 = vadd.f32 %v2892, %v3057
    %v3062 = vld [vmem:[%s6 + $0x12] sm:$0x1]
    %v3063 = vld [vmem:[%s6 + $0x13] sm:$0x1]
    %v3064 = vsel %vm410, %v3060, 0.0
    %3065 = vadd.xlane.f32.xlu0 %v3064
    %v3066 = vpop.xlane.xlu0 %3065
    %v3067 = vsel %vm410, %v3061, 0.0
    %3068 = vadd.xlane.f32.xlu0 %v3067
    %v3069 = vpop.xlane.xlu0 %3068
    %v3070 = vmul.f32 %v3066, %v417
    %v3071 = vmul.f32 %v3069, %v417
    %v3072 = vsub.f32 %v3060, %v3070
    %v3073 = vsub.f32 %v3061, %v3071
    %v3074 = vmul.f32 %v3072, %v3072
    %v3075 = vmul.f32 %v3073, %v3073
    %v3076 = vsel %vm410, %v3074, 0.0
    %3077 = vadd.xlane.f32.xlu0 %v3076
    %v3078 = vpop.xlane.xlu0 %3077
    %v3079 = vsel %vm410, %v3075, 0.0
    %3080 = vadd.xlane.f32.xlu0 %v3079
    %v3081 = vpop.xlane.xlu0 %3080
    %v3082 = vmul.f32 %v3078, %v417
    %v3083 = vmul.f32 %v3081, %v417
    %v3084 = vadd.f32 %v3082, 1e-05
    %v3085 = vadd.f32 %v3083, 1e-05
    %v3086 = vrsqrt.pop %v3084
    %v3087 = vrsqrt.pop %v3085
    %v3088 = vmul.f32 %v3072, %v3086
    %v3089 = vmul.f32 %v3073, %v3087
    %v3090 = vlaneseq
    %v3091 = vshrl.u32 %v3090, 7
    %v3092 = vsub.s32 0, %v3091
    %v3093 = vrot.slane %v3062, %v3092
    %v3094 = vmul.f32 %v3088, %v3093
    %v3095 = vmul.f32 %v3089, %v3093
    %v3096 = vlaneseq
    %v3097 = vshrl.u32 %v3096, 7
    %v3098 = vsub.s32 0, %v3097
    %v3099 = vrot.slane %v3063, %v3098
    %v3100 = vadd.f32 %v3094, %v3099
    %v3101 = vadd.f32 %v3095, %v3099
    %v3103 = vrot.slane %v3101, 7
    %vm3105 = vcmask 1040384
    %v3106 = vsel %vm3105, %v3100, %v3103
    %s3107 = scalar_lea.vmem %s5, 64
    %v3108 = vld [vmem:[%s3107] sm:$0xf]
    %v3109 = vld [vmem:[%s3107 + $0x4] sm:$0xf]
    %v3110 = vld [vmem:[%s3107 + $0x8] sm:$0xf]
    %v3111 = vld [vmem:[%s3107 + $0xc] sm:$0xf]
    %v3112 = vpack.c.bf16 %v3106, %v3106
    %v3113 = vld [vmem:[%s6 + $0x3] sm:$0x1]
    %v3114 = vlaneseq
    %v3115 = vshrl.u32 %v3114, 7
    %v3116 = vsub.s32 0, %v3115
    %v3117 = vrot.slane %v3113, %v3116
    %v3122 = vunpack.c.l.b16 %v3108
    %v3123 = vunpack.c.l.b16 %v3109
    %v3124 = vunpack.c.l.b16 %v3110
    %v3125 = vunpack.c.l.b16 %v3111
    %v3126 = vpack.c.b16 %v3123, %v3122
    %v3127 = vpack.c.b16 %v3125, %v3124
    %v3131 = vsel %vm410, %v3112, 0
    %3133 = vmatprep.subr.bf16.mxu0 0
    %3134 = vmatpush1.bf16.msra.mxu0 %v3126
    %3135 = vmatprep.subr.bf16.mxu0 0
    %3136 = vmatpush1.bf16.msra.mxu0 %v3127
    %3137 = vmatprep.subr.bf16.mxu0 0
    %3138 = vmatpush1.bf16.msra.mxu0 0
    %3139 = vmatprep.subr.bf16.mxu0 0
    %3140 = vmatpush1.bf16.msra.mxu0 0
    %3141 = vmatprep.subr.bf16.mxu0 0
    %3142 = vmatpush1.bf16.msra.mxu0 0
    %3143 = vmatprep.subr.bf16.mxu0 0
    %3144 = vmatpush1.bf16.msra.mxu0 0
    %3145 = vmatprep.subr.bf16.mxu0 0
    %3146 = vmatpush1.bf16.msra.mxu0 0
    %3147 = vmatprep.subr.bf16.mxu0 0
    %3148 = vmatpush1.bf16.msra.mxu0 0
    %3149 = vmatprep.subr.bf16.mxu0 0
    %3150 = vmatpush1.bf16.msra.mxu0 0
    %3151 = vmatprep.subr.bf16.mxu0 0
    %3152 = vmatpush1.bf16.msra.mxu0 0
    %3153 = vmatprep.subr.bf16.mxu0 0
    %3154 = vmatpush1.bf16.msra.mxu0 0
    %3155 = vmatprep.subr.bf16.mxu0 0
    %3156 = vmatpush1.bf16.msra.mxu0 0
    %3157 = vmatprep.subr.bf16.mxu0 0
    %3158 = vmatpush1.bf16.msra.mxu0 0
    %3159 = vmatprep.subr.bf16.mxu0 0
    %3160 = vmatpush1.bf16.msra.mxu0 0
    %3161 = vmatprep.subr.bf16.mxu0 0
    %3162 = vmatpush1.bf16.msra.mxu0 0
    %3163 = vmatprep.subr.bf16.mxu0 0
    %3164 = vmatpush1.bf16.msra.mxu0 0
    %3165 = vmatprep.mubr.bf16.mxu0 0
    %3166 = vmatmul.mubr.bf16.gmra.mrb[0].mxu0 %v3131
    %v3167 = vpop.f32.mrb[0].mxu0
    %v3168 = vadd.f32 %v3117, %v3167
    %v3169 = vpop.f32.mrb[0].mxu0
    %v3170 = vpop.f32.mrb[0].mxu0
    %v3171 = vpop.f32.mrb[0].mxu0
    %3172 = vdwg.mxu0
    %v3173 = vtanh.pop %v3168
    %vm3174 = vcmask 254976
    %3175 = vst.msk [vmem:[#allocation2] sm:$0x3] %vm3174, %v3173
    // Predicated region
    $region30: #{xlm_roberta_pooler_output.1} parent=1 // pred_check
      _
    $region31: #{xlm_roberta_pooler_output.1} parent=1 // pred_check_branch
      %3177 = sbr.rel (0) target = $region33
    $region32: #{xlm_roberta_pooler_output.1} parent=1 // pred_region
      %s3179 = ssub.s32 32, 32
      %3180 = vsyncadd [#allocation3], %s3179
      %s3182 = sshll.u32 [#allocation2], 4
      %s3183 = int_to_ptr.vmem [resolvable:$true] %s3182
      %3185 = dma.vmem_to_hbm [thread:$0]  %s3183, 32, %s7, [#allocation3]
    $region33: #{xlm_roberta_pooler_output.1} parent=1 // pred_fallthru
      _
    // Predicated region
    $region34: #{xlm_roberta_pooler_output.1} parent=1 // pred_check
      _
    $region35: #{xlm_roberta_pooler_output.1} parent=1 // pred_check_branch
      %3187 = sbr.rel (0) target = $region37
    $region36: #{xlm_roberta_pooler_output.1} parent=1 // pred_region
      %3188 = dma.done [#allocation3], 32
    $region37: #{xlm_roberta_pooler_output.1} parent=1 // pred_fallthru
      _
    %3189 = vsyncpa [#allocation3], 1

</llo_original>
